<compile_context>
chip_gen: v7x
topology: tpu7x:2x2x1
jax: 0.10.0
libtpu: 0.0.40
codegen_flags: <defaults>
</compile_context>

<pallas_src>
import functools
import math

import jax
import jax.numpy as jnp
from jax.experimental import pallas as pl
from jax.experimental.pallas import tpu as pltpu

BN_EPS = 1e-5


def _double_conv_kernel(x_ref, w1_ref, t1_ref, w2_ref, t2_ref, o_ref,
                        h_ref, col1_ref, col2_ref, *, W, Cin, Cmid, bh):
    """One (batch, row-block) step of the fused (conv3x3+BN+ReLU) x2.

    x_ref   : (bh+4, W+2, Cin)       input rows [r*bh-2, r*bh+bh+2), zero-padded
    w1_ref  : (9*Cin, Cmid)          conv1 weights with BN1 scale folded in
    t1_ref  : (1, Cmid)              BN1 shift
    w2_ref  : (9*Cmid, Cmid)         conv2 weights with BN2 scale folded in
    t2_ref  : (1, Cmid)              BN2 shift
    o_ref   : (bh, W, Cmid)          output rows [r*bh, r*bh+bh)
    h_ref   : (bh+2, W+2, Cmid)      VMEM scratch: conv1 activation, W-padded
    col1_ref: ((bh+2)*W, 9*Cin)      VMEM scratch: im2col for conv1
    col2_ref: (bh*W, 9*Cmid)         VMEM scratch: im2col for conv2
    """
    r = pl.program_id(1)
    n_r = pl.num_programs(1)
    bh1 = bh + 2                      # rows of intermediate activation (halo)

    # ---- conv1: im2col staging (window shifts folded into these stores) ----
    for dy in range(3):
        for dx in range(3):
            t = dy * 3 + dx
            col1_ref[:, t * Cin:(t + 1) * Cin] = (
                x_ref[dy:dy + bh1, dx:dx + W, :].reshape(bh1 * W, Cin))

    # Single MXU matmul, K = 9*Cin, f32 accumulation; BN shift + ReLU.
    acc1 = jnp.dot(col1_ref[...], w1_ref[...],
                   preferred_element_type=jnp.float32)
    h1 = jnp.maximum(acc1 + t1_ref[...], 0.0).astype(h_ref.dtype)

    # Stage h1 into the W-zero-padded VMEM scratch (stays on-chip, no HBM
    # round trip between the two convolutions).
    h_ref[:, 1:1 + W, :] = h1.reshape(bh1, W, Cmid)
    # Only the border strips need (re)zeroing: the interior is fully
    # overwritten every step.  Done every step (cheap) so it stays correct
    # when the grid is sharded across TensorCores.
    h_ref[:, 0:1, :] = jnp.zeros((bh1, 1, Cmid), h_ref.dtype)
    h_ref[:, W + 1:W + 2, :] = jnp.zeros((bh1, 1, Cmid), h_ref.dtype)

    # Halo rows of h1 that fall outside the image must be zero (conv2 uses
    # zero padding of the *first* conv's output, not conv-of-padded-input).
    @pl.when(r == 0)
    def _():
        h_ref[0:1, :, :] = jnp.zeros((1, W + 2, Cmid), h_ref.dtype)

    @pl.when(r == n_r - 1)
    def _():
        h_ref[bh1 - 1:bh1, :, :] = jnp.zeros((1, W + 2, Cmid), h_ref.dtype)

    # ---- conv2: im2col staging + single matmul + BN shift + ReLU -----------
    for dy in range(3):
        for dx in range(3):
            t = dy * 3 + dx
            col2_ref[:, t * Cmid:(t + 1) * Cmid] = (
                h_ref[dy:dy + bh, dx:dx + W, :].reshape(bh * W, Cmid))

    acc2 = jnp.dot(col2_ref[...], w2_ref[...],
                   preferred_element_type=jnp.float32)
    out = jnp.maximum(acc2 + t2_ref[...], 0.0)
    o_ref[...] = out.reshape(bh, W, Cmid).astype(o_ref.dtype)


def _pick_block_h(H, W, cin, cmid, itemsize, budget_bytes=8 << 20):
    """Largest divisor of H whose (roughly double-buffered) step footprint
    fits the budget -- keeps the kernel inside VMEM on v7x (64 MiB) too."""
    for bh in range(H, 0, -1):
        if H % bh:
            continue
        est = itemsize * ((bh + 4) * (W + 2) * cin        # input row block
                          + (bh + 2) * (W + 2) * cmid     # h scratch
                          + (bh + 2) * W * 9 * cin        # im2col conv1
                          + bh * W * 9 * cmid)            # im2col conv2
        est += 4 * bh * W * cmid                          # f32 output block
        if 2 * est <= budget_bytes:
            return bh
    return 1


def double_conv_nhwc(x_nhwc, params, *, block_h=None,
                     compute_dtype=jnp.float32):
    """NHWC-native fused DoubleConv. x: (B, H, W, Cin) -> (B, H, W, Cout)."""
    (w1, g1, b1, m1, v1, w2, g2, b2, m2, v2) = params
    B, H, W, Cin = x_nhwc.shape
    Cmid = w1.shape[0]
    assert w1.shape == (Cmid, Cin, 3, 3) and w2.shape == (Cmid, Cmid, 3, 3)

    if block_h is None:
        block_h = _pick_block_h(H, W, Cin, Cmid,
                                jnp.dtype(compute_dtype).itemsize)
    bh = int(block_h)
    assert H % bh == 0, (H, bh)
    nH = H // bh

    # ---- wrapper glue (layout + scalar math only) ---------------------------
    # Fold inference-mode BN scale into the conv weights; shift stays separate.
    s1 = g1 / jnp.sqrt(v1 + BN_EPS)
    t1 = (b1 - m1 * s1).reshape(1, Cmid).astype(jnp.float32)
    s2 = g2 / jnp.sqrt(v2 + BN_EPS)
    t2 = (b2 - m2 * s2).reshape(1, Cmid).astype(jnp.float32)
    # OIHW -> (kh*kw*I, O), tap-major rows matching the im2col column order.
    w1_k = (jnp.transpose(w1, (2, 3, 1, 0)).reshape(9 * Cin, Cmid)
            * s1[None, :]).astype(compute_dtype)
    w2_k = (jnp.transpose(w2, (2, 3, 1, 0)).reshape(9 * Cmid, Cmid)
            * s2[None, :]).astype(compute_dtype)

    # Zero pad: 1 col each side (conv W padding); 2 rows each side (conv H
    # padding + 1 halo row for the fused second conv).  Then cut H into
    # overlapping row blocks of bh+4 rows so BlockSpec auto-pipelining can
    # stream them (halo duplication is 4/bh of the input -- a few %).
    x_pad = jnp.pad(x_nhwc.astype(compute_dtype),
                    ((0, 0), (2, 2), (1, 1), (0, 0)))
    row_idx = jnp.arange(nH)[:, None] * bh + jnp.arange(bh + 4)[None, :]
    x_blk = x_pad[:, row_idx]                       # (B, nH, bh+4, W+2, Cin)

    kernel = functools.partial(_double_conv_kernel, W=W, Cin=Cin,
                               Cmid=Cmid, bh=bh)

    itemsize = jnp.dtype(compute_dtype).itemsize
    flops = 2 * B * H * W * 9 * (Cin * Cmid + Cmid * Cmid)
    bytes_accessed = int(x_blk.size * itemsize
                         + (w1_k.size + w2_k.size) * itemsize
                         + (t1.size + t2.size) * 4
                         + B * H * W * Cmid * 4)

    out_nhwc = pl.pallas_call(
        kernel,
        out_shape=jax.ShapeDtypeStruct((B, H, W, Cmid), jnp.float32),
        grid_spec=pltpu.PrefetchScalarGridSpec(
            num_scalar_prefetch=0,
            grid=(B, nH),
            in_specs=[
                pl.BlockSpec((None, None, bh + 4, W + 2, Cin),
                             lambda b, r: (b, r, 0, 0, 0)),   # input row block
                pl.BlockSpec((9 * Cin, Cmid), lambda b, r: (0, 0)),   # W1*s1
                pl.BlockSpec((1, Cmid), lambda b, r: (0, 0)),         # t1
                pl.BlockSpec((9 * Cmid, Cmid), lambda b, r: (0, 0)),  # W2*s2
                pl.BlockSpec((1, Cmid), lambda b, r: (0, 0)),         # t2
            ],
            out_specs=pl.BlockSpec((None, bh, W, Cmid),
                                   lambda b, r: (b, r, 0, 0)),
            scratch_shapes=[
                pltpu.VMEM((bh + 2, W + 2, Cmid), compute_dtype),     # h1
                pltpu.VMEM(((bh + 2) * W, 9 * Cin), compute_dtype),   # im2col1
                pltpu.VMEM((bh * W, 9 * Cmid), compute_dtype),        # im2col2
            ],
        ),
        compiler_params=pltpu.CompilerParams(
            dimension_semantics=("parallel", "parallel"),
            vmem_limit_bytes=64 * 1024 * 1024),
        cost_estimate=pl.CostEstimate(flops=flops, transcendentals=0,
                                      bytes_accessed=bytes_accessed),
    )(x_blk, w1_k, t1, w2_k, t2)
    return out_nhwc


def double_conv_forward(x_nchw, params, **kwargs):
    """Drop-in NCHW interface matching the PyTorch module.  When chaining
    DoubleConv blocks in a full UNet, call `double_conv_nhwc` directly and
    keep activations NHWC end-to-end to avoid these two HBM transposes."""
    x_nhwc = jnp.transpose(x_nchw, (0, 2, 3, 1))
    y = double_conv_nhwc(x_nhwc, params, **kwargs)
    return jnp.transpose(y, (0, 3, 1, 2))


def init_params(key, in_ch, out_ch):
    """Deterministic init mimicking nn.Conv2d / nn.BatchNorm2d statistics."""
    ks = jax.random.split(key, 10)

    def conv_w(k, cin, cout):
        bound = 1.0 / math.sqrt(cin * 9)
        return jax.random.uniform(k, (cout, cin, 3, 3), jnp.float32,
                                  -bound, bound)

    def bn(kg, kb, km, kv, c):
        g = jax.random.uniform(kg, (c,), jnp.float32, 0.5, 1.5)
        b = 0.1 * jax.random.normal(kb, (c,), jnp.float32)
        m = 0.1 * jax.random.normal(km, (c,), jnp.float32)
        v = jax.random.uniform(kv, (c,), jnp.float32, 0.5, 1.5)
        return g, b, m, v

    w1 = conv_w(ks[0], in_ch, out_ch)
    w2 = conv_w(ks[1], out_ch, out_ch)
    g1, b1, m1, v1 = bn(ks[2], ks[3], ks[4], ks[5], out_ch)
    g2, b2, m2, v2 = bn(ks[6], ks[7], ks[8], ks[9], out_ch)
    return (w1, g1, b1, m1, v1, w2, g2, b2, m2, v2)


def reference_forward(x, params):
    """Pure-JAX reference (lax conv + eval-mode BN + ReLU), NCHW."""
    (w1, g1, b1, m1, v1, w2, g2, b2, m2, v2) = params

    def conv_bn_relu(h, w, g, b, m, v):
        y = jax.lax.conv_general_dilated(
            h, w, window_strides=(1, 1), padding=((1, 1), (1, 1)),
            dimension_numbers=("NCHW", "OIHW", "NCHW"),
            precision=jax.lax.Precision.HIGHEST)
        s = g / jnp.sqrt(v + BN_EPS)
        t = b - m * s
        y = y * s[None, :, None, None] + t[None, :, None, None]
        return jnp.maximum(y, 0.0)

    h = conv_bn_relu(x, w1, g1, b1, m1, v1)
    return conv_bn_relu(h, w2, g2, b2, m2, v2)


if __name__ == "__main__":
    key = jax.random.PRNGKey(0)
    kx, kp = jax.random.split(key)

    B, Cin, Cout, H, W = 2, 4, 8, 16, 16
    x = jax.random.normal(kx, (B, Cin, H, W), dtype=jnp.float32)
    params = init_params(kp, Cin, Cout)
    ref = jax.block_until_ready(reference_forward(x, params))

    # f32 operands with the H row-block tiling exercised (2 row blocks).
    out = jax.block_until_ready(double_conv_forward(x, params, block_h=8))
    assert out.shape == (B, Cout, H, W), out.shape
    assert jnp.allclose(out, ref, atol=1e-2, rtol=1e-2), (
        float(jnp.max(jnp.abs(out - ref))))

    # Whole-image row block (nH == 1) -- the small-image fast path.
    out_full = jax.block_until_ready(double_conv_forward(x, params,
                                                         block_h=H))
    assert jnp.allclose(out_full, ref, atol=1e-2, rtol=1e-2), (
        float(jnp.max(jnp.abs(out_full - ref))))

    # bf16 MXU operands with f32 accumulation (v6e/v7x-preferred mode),
    # block size picked automatically.
    out_bf16 = jax.block_until_ready(
        double_conv_forward(x, params, compute_dtype=jnp.bfloat16))
    assert jnp.allclose(out_bf16, ref, atol=3e-2, rtol=3e-2), (
        float(jnp.max(jnp.abs(out_bf16 - ref))))

    print("KERNEL_OK")
</pallas_src>

<mosaic_0001>
module attributes {stable_mosaic.version = 11 : i64} {
  func.func @_double_conv_kernel(%arg0: i32, %arg1: i32, %arg2: memref<1x1x12x18x4xf32, #tpu.memory_space<vmem>>, %arg3: memref<36x8xf32, #tpu.memory_space<vmem>>, %arg4: memref<1x8xf32, #tpu.memory_space<vmem>>, %arg5: memref<72x8xf32, #tpu.memory_space<vmem>>, %arg6: memref<1x8xf32, #tpu.memory_space<vmem>>, %arg7: memref<1x8x16x8xf32, #tpu.memory_space<vmem>>, %arg8: memref<10x18x8xf32, #tpu.memory_space<vmem>>, %arg9: memref<160x36xf32, #tpu.memory_space<vmem>>, %arg10: memref<128x72xf32, #tpu.memory_space<vmem>>) attributes {dimension_semantics = [#tpu.dimension_semantics<parallel>, #tpu.dimension_semantics<parallel>], iteration_bounds = array<i64: 2, 2>, scalar_prefetch = 0 : i64, scratch_operands = 3 : i64, tpu.core_type = #tpu.core_type<tc>, window_params = [{transform_indices = @transform_0, window_bounds = array<i64: 1, 1, 12, 18, 4>}, {pipeline_mode = #tpu.pipeline_mode<synchronous>, transform_indices = @transform_1, window_bounds = array<i64: 36, 8>}, {pipeline_mode = #tpu.pipeline_mode<synchronous>, transform_indices = @transform_2, window_bounds = array<i64: 1, 8>}, {pipeline_mode = #tpu.pipeline_mode<synchronous>, transform_indices = @transform_3, window_bounds = array<i64: 72, 8>}, {pipeline_mode = #tpu.pipeline_mode<synchronous>, transform_indices = @transform_4, window_bounds = array<i64: 1, 8>}, {transform_indices = @transform_5, window_bounds = array<i64: 1, 8, 16, 8>}]} {
    %c0 = arith.constant 0 : index
    %c0_0 = arith.constant 0 : index
    %c0_1 = arith.constant 0 : index
    %c0_2 = arith.constant 0 : index
    %c0_3 = arith.constant 0 : index
    %0 = vector.load %arg2[%c0, %c0_0, %c0_1, %c0_2, %c0_3] : memref<1x1x12x18x4xf32, #tpu.memory_space<vmem>>, vector<1x1x10x16x4xf32>
    %1 = vector.shape_cast %0 : vector<1x1x10x16x4xf32> to vector<10x16x4xf32>
    %2 = vector.shape_cast %1 : vector<10x16x4xf32> to vector<160x4xf32>
    %c0_4 = arith.constant 0 : index
    %c0_5 = arith.constant 0 : index
    %3 = vector.load %arg9[%c0_4, %c0_5] : memref<160x36xf32, #tpu.memory_space<vmem>>, vector<160x4xf32>
    tpu.vector_store %arg9[%c0_4, %c0_5], %2 {strides = array<i32>} : memref<160x36xf32, #tpu.memory_space<vmem>>, vector<160x4xf32>,
    %c0_6 = arith.constant 0 : index
    %c0_7 = arith.constant 0 : index
    %c0_8 = arith.constant 0 : index
    %c1 = arith.constant 1 : index
    %c0_9 = arith.constant 0 : index
    %4 = vector.load %arg2[%c0_6, %c0_7, %c0_8, %c1, %c0_9] : memref<1x1x12x18x4xf32, #tpu.memory_space<vmem>>, vector<1x1x10x16x4xf32>
    %5 = vector.shape_cast %4 : vector<1x1x10x16x4xf32> to vector<10x16x4xf32>
    %6 = vector.shape_cast %5 : vector<10x16x4xf32> to vector<160x4xf32>
    %c0_10 = arith.constant 0 : index
    %c4 = arith.constant 4 : index
    %7 = vector.load %arg9[%c0_10, %c4] : memref<160x36xf32, #tpu.memory_space<vmem>>, vector<160x4xf32>
    tpu.vector_store %arg9[%c0_10, %c4], %6 {strides = array<i32>} : memref<160x36xf32, #tpu.memory_space<vmem>>, vector<160x4xf32>,
    %c0_11 = arith.constant 0 : index
    %c0_12 = arith.constant 0 : index
    %c0_13 = arith.constant 0 : index
    %c2 = arith.constant 2 : index
    %c0_14 = arith.constant 0 : index
    %8 = vector.load %arg2[%c0_11, %c0_12, %c0_13, %c2, %c0_14] : memref<1x1x12x18x4xf32, #tpu.memory_space<vmem>>, vector<1x1x10x16x4xf32>
    %9 = vector.shape_cast %8 : vector<1x1x10x16x4xf32> to vector<10x16x4xf32>
    %10 = vector.shape_cast %9 : vector<10x16x4xf32> to vector<160x4xf32>
    %c0_15 = arith.constant 0 : index
    %c8 = arith.constant 8 : index
    %11 = vector.load %arg9[%c0_15, %c8] : memref<160x36xf32, #tpu.memory_space<vmem>>, vector<160x4xf32>
    tpu.vector_store %arg9[%c0_15, %c8], %10 {strides = array<i32>} : memref<160x36xf32, #tpu.memory_space<vmem>>, vector<160x4xf32>,
    %c0_16 = arith.constant 0 : index
    %c0_17 = arith.constant 0 : index
    %c1_18 = arith.constant 1 : index
    %c0_19 = arith.constant 0 : index
    %c0_20 = arith.constant 0 : index
    %12 = vector.load %arg2[%c0_16, %c0_17, %c1_18, %c0_19, %c0_20] : memref<1x1x12x18x4xf32, #tpu.memory_space<vmem>>, vector<1x1x10x16x4xf32>
    %13 = vector.shape_cast %12 : vector<1x1x10x16x4xf32> to vector<10x16x4xf32>
    %14 = vector.shape_cast %13 : vector<10x16x4xf32> to vector<160x4xf32>
    %c0_21 = arith.constant 0 : index
    %c12 = arith.constant 12 : index
    %15 = vector.load %arg9[%c0_21, %c12] : memref<160x36xf32, #tpu.memory_space<vmem>>, vector<160x4xf32>
    tpu.vector_store %arg9[%c0_21, %c12], %14 {strides = array<i32>} : memref<160x36xf32, #tpu.memory_space<vmem>>, vector<160x4xf32>,
    %c0_22 = arith.constant 0 : index
    %c0_23 = arith.constant 0 : index
    %c1_24 = arith.constant 1 : index
    %c1_25 = arith.constant 1 : index
    %c0_26 = arith.constant 0 : index
    %16 = vector.load %arg2[%c0_22, %c0_23, %c1_24, %c1_25, %c0_26] : memref<1x1x12x18x4xf32, #tpu.memory_space<vmem>>, vector<1x1x10x16x4xf32>
    %17 = vector.shape_cast %16 : vector<1x1x10x16x4xf32> to vector<10x16x4xf32>
    %18 = vector.shape_cast %17 : vector<10x16x4xf32> to vector<160x4xf32>
    %c0_27 = arith.constant 0 : index
    %c16 = arith.constant 16 : index
    %19 = vector.load %arg9[%c0_27, %c16] : memref<160x36xf32, #tpu.memory_space<vmem>>, vector<160x4xf32>
    tpu.vector_store %arg9[%c0_27, %c16], %18 {strides = array<i32>} : memref<160x36xf32, #tpu.memory_space<vmem>>, vector<160x4xf32>,
    %c0_28 = arith.constant 0 : index
    %c0_29 = arith.constant 0 : index
    %c1_30 = arith.constant 1 : index
    %c2_31 = arith.constant 2 : index
    %c0_32 = arith.constant 0 : index
    %20 = vector.load %arg2[%c0_28, %c0_29, %c1_30, %c2_31, %c0_32] : memref<1x1x12x18x4xf32, #tpu.memory_space<vmem>>, vector<1x1x10x16x4xf32>
    %21 = vector.shape_cast %20 : vector<1x1x10x16x4xf32> to vector<10x16x4xf32>
    %22 = vector.shape_cast %21 : vector<10x16x4xf32> to vector<160x4xf32>
    %c0_33 = arith.constant 0 : index
    %c20 = arith.constant 20 : index
    %23 = vector.load %arg9[%c0_33, %c20] : memref<160x36xf32, #tpu.memory_space<vmem>>, vector<160x4xf32>
    tpu.vector_store %arg9[%c0_33, %c20], %22 {strides = array<i32>} : memref<160x36xf32, #tpu.memory_space<vmem>>, vector<160x4xf32>,
    %c0_34 = arith.constant 0 : index
    %c0_35 = arith.constant 0 : index
    %c2_36 = arith.constant 2 : index
    %c0_37 = arith.constant 0 : index
    %c0_38 = arith.constant 0 : index
    %24 = vector.load %arg2[%c0_34, %c0_35, %c2_36, %c0_37, %c0_38] : memref<1x1x12x18x4xf32, #tpu.memory_space<vmem>>, vector<1x1x10x16x4xf32>
    %25 = vector.shape_cast %24 : vector<1x1x10x16x4xf32> to vector<10x16x4xf32>
    %26 = vector.shape_cast %25 : vector<10x16x4xf32> to vector<160x4xf32>
    %c0_39 = arith.constant 0 : index
    %c24 = arith.constant 24 : index
    %27 = vector.load %arg9[%c0_39, %c24] : memref<160x36xf32, #tpu.memory_space<vmem>>, vector<160x4xf32>
    tpu.vector_store %arg9[%c0_39, %c24], %26 {strides = array<i32>} : memref<160x36xf32, #tpu.memory_space<vmem>>, vector<160x4xf32>,
    %c0_40 = arith.constant 0 : index
    %c0_41 = arith.constant 0 : index
    %c2_42 = arith.constant 2 : index
    %c1_43 = arith.constant 1 : index
    %c0_44 = arith.constant 0 : index
    %28 = vector.load %arg2[%c0_40, %c0_41, %c2_42, %c1_43, %c0_44] : memref<1x1x12x18x4xf32, #tpu.memory_space<vmem>>, vector<1x1x10x16x4xf32>
    %29 = vector.shape_cast %28 : vector<1x1x10x16x4xf32> to vector<10x16x4xf32>
    %30 = vector.shape_cast %29 : vector<10x16x4xf32> to vector<160x4xf32>
    %c0_45 = arith.constant 0 : index
    %c28 = arith.constant 28 : index
    %31 = vector.load %arg9[%c0_45, %c28] : memref<160x36xf32, #tpu.memory_space<vmem>>, vector<160x4xf32>
    tpu.vector_store %arg9[%c0_45, %c28], %30 {strides = array<i32>} : memref<160x36xf32, #tpu.memory_space<vmem>>, vector<160x4xf32>,
    %c0_46 = arith.constant 0 : index
    %c0_47 = arith.constant 0 : index
    %c2_48 = arith.constant 2 : index
    %c2_49 = arith.constant 2 : index
    %c0_50 = arith.constant 0 : index
    %32 = vector.load %arg2[%c0_46, %c0_47, %c2_48, %c2_49, %c0_50] : memref<1x1x12x18x4xf32, #tpu.memory_space<vmem>>, vector<1x1x10x16x4xf32>
    %33 = vector.shape_cast %32 : vector<1x1x10x16x4xf32> to vector<10x16x4xf32>
    %34 = vector.shape_cast %33 : vector<10x16x4xf32> to vector<160x4xf32>
    %c0_51 = arith.constant 0 : index
    %c32 = arith.constant 32 : index
    %35 = vector.load %arg9[%c0_51, %c32] : memref<160x36xf32, #tpu.memory_space<vmem>>, vector<160x4xf32>
    tpu.vector_store %arg9[%c0_51, %c32], %34 {strides = array<i32>} : memref<160x36xf32, #tpu.memory_space<vmem>>, vector<160x4xf32>,
    %c0_52 = arith.constant 0 : index
    %c0_53 = arith.constant 0 : index
    %36 = vector.load %arg9[%c0_52, %c0_53] : memref<160x36xf32, #tpu.memory_space<vmem>>, vector<160x36xf32>
    %c0_54 = arith.constant 0 : index
    %c0_55 = arith.constant 0 : index
    %37 = vector.load %arg3[%c0_54, %c0_55] : memref<36x8xf32, #tpu.memory_space<vmem>>, vector<36x8xf32>
    %cst = arith.constant dense<0.000000e+00> : vector<160x8xf32>
    %38 = tpu.matmul %36, %37, %cst {dimension_numbers = #tpu.dot_dimension_numbers<[1], [0], [0], [1], [0, 0, 1, 1], [], []>} : vector<160x36xf32>, vector<36x8xf32>, vector<160x8xf32> -> vector<160x8xf32>
    %c0_56 = arith.constant 0 : index
    %c0_57 = arith.constant 0 : index
    %39 = vector.load %arg4[%c0_56, %c0_57] : memref<1x8xf32, #tpu.memory_space<vmem>>, vector<1x8xf32>
    %40 = vector.broadcast %39 : vector<1x8xf32> to vector<160x8xf32>
    %41 = arith.addf %38, %40 : vector<160x8xf32>
    %cst_58 = arith.constant 0.000000e+00 : f32
    %42 = vector.broadcast %cst_58 : f32 to vector<160x8xf32>
    %43 = arith.maximumf %41, %42 : vector<160x8xf32>
    %44 = vector.shape_cast %43 : vector<160x8xf32> to vector<10x16x8xf32>
    %c0_59 = arith.constant 0 : index
    %c1_60 = arith.constant 1 : index
    %c0_61 = arith.constant 0 : index
    %45 = vector.load %arg8[%c0_59, %c1_60, %c0_61] : memref<10x18x8xf32, #tpu.memory_space<vmem>>, vector<10x16x8xf32>
    tpu.vector_store %arg8[%c0_59, %c1_60, %c0_61], %44 {strides = array<i32>} : memref<10x18x8xf32, #tpu.memory_space<vmem>>, vector<10x16x8xf32>,
    %cst_62 = arith.constant 0.000000e+00 : f32
    %46 = vector.broadcast %cst_62 : f32 to vector<10x1x8xf32>
    %c0_63 = arith.constant 0 : index
    %c0_64 = arith.constant 0 : index
    %c0_65 = arith.constant 0 : index
    %47 = vector.load %arg8[%c0_63, %c0_64, %c0_65] : memref<10x18x8xf32, #tpu.memory_space<vmem>>, vector<10x1x8xf32>
    tpu.vector_store %arg8[%c0_63, %c0_64, %c0_65], %46 {strides = array<i32>} : memref<10x18x8xf32, #tpu.memory_space<vmem>>, vector<10x1x8xf32>,
    %cst_66 = arith.constant 0.000000e+00 : f32
    %48 = vector.broadcast %cst_66 : f32 to vector<10x1x8xf32>
    %c0_67 = arith.constant 0 : index
    %c17 = arith.constant 17 : index
    %c0_68 = arith.constant 0 : index
    %49 = vector.load %arg8[%c0_67, %c17, %c0_68] : memref<10x18x8xf32, #tpu.memory_space<vmem>>, vector<10x1x8xf32>
    tpu.vector_store %arg8[%c0_67, %c17, %c0_68], %48 {strides = array<i32>} : memref<10x18x8xf32, #tpu.memory_space<vmem>>, vector<10x1x8xf32>,
    %c0_i32 = arith.constant 0 : i32
    %50 = arith.cmpi eq, %arg1, %c0_i32 : i32
    %51 = arith.extui %50 : i1 to i32
    %c0_i32_69 = arith.constant 0 : i32
    %52 = arith.cmpi ne, %51, %c0_i32_69 : i32
    scf.if %52 {
      %cst_124 = arith.constant 0.000000e+00 : f32
      %95 = vector.broadcast %cst_124 : f32 to vector<1x18x8xf32>
      %c0_125 = arith.constant 0 : index
      %c0_126 = arith.constant 0 : index
      %c0_127 = arith.constant 0 : index
      %96 = vector.load %arg8[%c0_125, %c0_126, %c0_127] : memref<10x18x8xf32, #tpu.memory_space<vmem>>, vector<1x18x8xf32>
      tpu.vector_store %arg8[%c0_125, %c0_126, %c0_127], %95 {strides = array<i32>} : memref<10x18x8xf32, #tpu.memory_space<vmem>>, vector<1x18x8xf32>,
    } else {
    }
    %c1_i32 = arith.constant 1 : i32
    %53 = arith.cmpi eq, %arg1, %c1_i32 : i32
    %54 = arith.extui %53 : i1 to i32
    %c0_i32_70 = arith.constant 0 : i32
    %55 = arith.cmpi ne, %54, %c0_i32_70 : i32
    scf.if %55 {
      %cst_124 = arith.constant 0.000000e+00 : f32
      %95 = vector.broadcast %cst_124 : f32 to vector<1x18x8xf32>
      %c9 = arith.constant 9 : index
      %c0_125 = arith.constant 0 : index
      %c0_126 = arith.constant 0 : index
      %96 = vector.load %arg8[%c9, %c0_125, %c0_126] : memref<10x18x8xf32, #tpu.memory_space<vmem>>, vector<1x18x8xf32>
      tpu.vector_store %arg8[%c9, %c0_125, %c0_126], %95 {strides = array<i32>} : memref<10x18x8xf32, #tpu.memory_space<vmem>>, vector<1x18x8xf32>,
    } else {
    }
    %c0_71 = arith.constant 0 : index
    %c0_72 = arith.constant 0 : index
    %c0_73 = arith.constant 0 : index
    %56 = vector.load %arg8[%c0_71, %c0_72, %c0_73] : memref<10x18x8xf32, #tpu.memory_space<vmem>>, vector<8x16x8xf32>
    %57 = vector.shape_cast %56 : vector<8x16x8xf32> to vector<128x8xf32>
    %c0_74 = arith.constant 0 : index
    %c0_75 = arith.constant 0 : index
    %58 = vector.load %arg10[%c0_74, %c0_75] : memref<128x72xf32, #tpu.memory_space<vmem>>, vector<128x8xf32>
    tpu.vector_store %arg10[%c0_74, %c0_75], %57 {strides = array<i32>} : memref<128x72xf32, #tpu.memory_space<vmem>>, vector<128x8xf32>,
    %c0_76 = arith.constant 0 : index
    %c1_77 = arith.constant 1 : index
    %c0_78 = arith.constant 0 : index
    %59 = vector.load %arg8[%c0_76, %c1_77, %c0_78] : memref<10x18x8xf32, #tpu.memory_space<vmem>>, vector<8x16x8xf32>
    %60 = vector.shape_cast %59 : vector<8x16x8xf32> to vector<128x8xf32>
    %c0_79 = arith.constant 0 : index
    %c8_80 = arith.constant 8 : index
    %61 = vector.load %arg10[%c0_79, %c8_80] : memref<128x72xf32, #tpu.memory_space<vmem>>, vector<128x8xf32>
    tpu.vector_store %arg10[%c0_79, %c8_80], %60 {strides = array<i32>} : memref<128x72xf32, #tpu.memory_space<vmem>>, vector<128x8xf32>,
    %c0_81 = arith.constant 0 : index
    %c2_82 = arith.constant 2 : index
    %c0_83 = arith.constant 0 : index
    %62 = vector.load %arg8[%c0_81, %c2_82, %c0_83] : memref<10x18x8xf32, #tpu.memory_space<vmem>>, vector<8x16x8xf32>
    %63 = vector.shape_cast %62 : vector<8x16x8xf32> to vector<128x8xf32>
    %c0_84 = arith.constant 0 : index
    %c16_85 = arith.constant 16 : index
    %64 = vector.load %arg10[%c0_84, %c16_85] : memref<128x72xf32, #tpu.memory_space<vmem>>, vector<128x8xf32>
    tpu.vector_store %arg10[%c0_84, %c16_85], %63 {strides = array<i32>} : memref<128x72xf32, #tpu.memory_space<vmem>>, vector<128x8xf32>,
    %c1_86 = arith.constant 1 : index
    %c0_87 = arith.constant 0 : index
    %c0_88 = arith.constant 0 : index
    %65 = vector.load %arg8[%c1_86, %c0_87, %c0_88] : memref<10x18x8xf32, #tpu.memory_space<vmem>>, vector<8x16x8xf32>
    %66 = vector.shape_cast %65 : vector<8x16x8xf32> to vector<128x8xf32>
    %c0_89 = arith.constant 0 : index
    %c24_90 = arith.constant 24 : index
    %67 = vector.load %arg10[%c0_89, %c24_90] : memref<128x72xf32, #tpu.memory_space<vmem>>, vector<128x8xf32>
    tpu.vector_store %arg10[%c0_89, %c24_90], %66 {strides = array<i32>} : memref<128x72xf32, #tpu.memory_space<vmem>>, vector<128x8xf32>,
    %c1_91 = arith.constant 1 : index
    %c1_92 = arith.constant 1 : index
    %c0_93 = arith.constant 0 : index
    %68 = vector.load %arg8[%c1_91, %c1_92, %c0_93] : memref<10x18x8xf32, #tpu.memory_space<vmem>>, vector<8x16x8xf32>
    %69 = vector.shape_cast %68 : vector<8x16x8xf32> to vector<128x8xf32>
    %c0_94 = arith.constant 0 : index
    %c32_95 = arith.constant 32 : index
    %70 = vector.load %arg10[%c0_94, %c32_95] : memref<128x72xf32, #tpu.memory_space<vmem>>, vector<128x8xf32>
    tpu.vector_store %arg10[%c0_94, %c32_95], %69 {strides = array<i32>} : memref<128x72xf32, #tpu.memory_space<vmem>>, vector<128x8xf32>,
    %c1_96 = arith.constant 1 : index
    %c2_97 = arith.constant 2 : index
    %c0_98 = arith.constant 0 : index
    %71 = vector.load %arg8[%c1_96, %c2_97, %c0_98] : memref<10x18x8xf32, #tpu.memory_space<vmem>>, vector<8x16x8xf32>
    %72 = vector.shape_cast %71 : vector<8x16x8xf32> to vector<128x8xf32>
    %c0_99 = arith.constant 0 : index
    %c40 = arith.constant 40 : index
    %73 = vector.load %arg10[%c0_99, %c40] : memref<128x72xf32, #tpu.memory_space<vmem>>, vector<128x8xf32>
    tpu.vector_store %arg10[%c0_99, %c40], %72 {strides = array<i32>} : memref<128x72xf32, #tpu.memory_space<vmem>>, vector<128x8xf32>,
    %c2_100 = arith.constant 2 : index
    %c0_101 = arith.constant 0 : index
    %c0_102 = arith.constant 0 : index
    %74 = vector.load %arg8[%c2_100, %c0_101, %c0_102] : memref<10x18x8xf32, #tpu.memory_space<vmem>>, vector<8x16x8xf32>
    %75 = vector.shape_cast %74 : vector<8x16x8xf32> to vector<128x8xf32>
    %c0_103 = arith.constant 0 : index
    %c48 = arith.constant 48 : index
    %76 = vector.load %arg10[%c0_103, %c48] : memref<128x72xf32, #tpu.memory_space<vmem>>, vector<128x8xf32>
    tpu.vector_store %arg10[%c0_103, %c48], %75 {strides = array<i32>} : memref<128x72xf32, #tpu.memory_space<vmem>>, vector<128x8xf32>,
    %c2_104 = arith.constant 2 : index
    %c1_105 = arith.constant 1 : index
    %c0_106 = arith.constant 0 : index
    %77 = vector.load %arg8[%c2_104, %c1_105, %c0_106] : memref<10x18x8xf32, #tpu.memory_space<vmem>>, vector<8x16x8xf32>
    %78 = vector.shape_cast %77 : vector<8x16x8xf32> to vector<128x8xf32>
    %c0_107 = arith.constant 0 : index
    %c56 = arith.constant 56 : index
    %79 = vector.load %arg10[%c0_107, %c56] : memref<128x72xf32, #tpu.memory_space<vmem>>, vector<128x8xf32>
    tpu.vector_store %arg10[%c0_107, %c56], %78 {strides = array<i32>} : memref<128x72xf32, #tpu.memory_space<vmem>>, vector<128x8xf32>,
    %c2_108 = arith.constant 2 : index
    %c2_109 = arith.constant 2 : index
    %c0_110 = arith.constant 0 : index
    %80 = vector.load %arg8[%c2_108, %c2_109, %c0_110] : memref<10x18x8xf32, #tpu.memory_space<vmem>>, vector<8x16x8xf32>
    %81 = vector.shape_cast %80 : vector<8x16x8xf32> to vector<128x8xf32>
    %c0_111 = arith.constant 0 : index
    %c64 = arith.constant 64 : index
    %82 = vector.load %arg10[%c0_111, %c64] : memref<128x72xf32, #tpu.memory_space<vmem>>, vector<128x8xf32>
    tpu.vector_store %arg10[%c0_111, %c64], %81 {strides = array<i32>} : memref<128x72xf32, #tpu.memory_space<vmem>>, vector<128x8xf32>,
    %c0_112 = arith.constant 0 : index
    %c0_113 = arith.constant 0 : index
    %83 = vector.load %arg10[%c0_112, %c0_113] : memref<128x72xf32, #tpu.memory_space<vmem>>, vector<128x72xf32>
    %c0_114 = arith.constant 0 : index
    %c0_115 = arith.constant 0 : index
    %84 = vector.load %arg5[%c0_114, %c0_115] : memref<72x8xf32, #tpu.memory_space<vmem>>, vector<72x8xf32>
    %cst_116 = arith.constant dense<0.000000e+00> : vector<128x8xf32>
    %85 = tpu.matmul %83, %84, %cst_116 {dimension_numbers = #tpu.dot_dimension_numbers<[1], [0], [0], [1], [0, 0, 1, 1], [], []>} : vector<128x72xf32>, vector<72x8xf32>, vector<128x8xf32> -> vector<128x8xf32>
    %c0_117 = arith.constant 0 : index
    %c0_118 = arith.constant 0 : index
    %86 = vector.load %arg6[%c0_117, %c0_118] : memref<1x8xf32, #tpu.memory_space<vmem>>, vector<1x8xf32>
    %87 = vector.broadcast %86 : vector<1x8xf32> to vector<128x8xf32>
    %88 = arith.addf %85, %87 : vector<128x8xf32>
    %cst_119 = arith.constant 0.000000e+00 : f32
    %89 = vector.broadcast %cst_119 : f32 to vector<128x8xf32>
    %90 = arith.maximumf %88, %89 : vector<128x8xf32>
    %91 = vector.shape_cast %90 : vector<128x8xf32> to vector<8x16x8xf32>
    %c0_120 = arith.constant 0 : index
    %c0_121 = arith.constant 0 : index
    %c0_122 = arith.constant 0 : index
    %c0_123 = arith.constant 0 : index
    %92 = vector.load %arg7[%c0_120, %c0_121, %c0_122, %c0_123] : memref<1x8x16x8xf32, #tpu.memory_space<vmem>>, vector<1x8x16x8xf32>
    %93 = vector.shape_cast %92 : vector<1x8x16x8xf32> to vector<8x16x8xf32>
    %94 = vector.shape_cast %91 : vector<8x16x8xf32> to vector<1x8x16x8xf32>
    tpu.vector_store %arg7[%c0_120, %c0_121, %c0_122, %c0_123], %94 {strides = array<i32>} : memref<1x8x16x8xf32, #tpu.memory_space<vmem>>, vector<1x8x16x8xf32>,
    return
  }
  func.func @transform_0(%arg0: i32, %arg1: i32) -> (i32, i32, i32, i32, i32) {
    %c0_i32 = arith.constant 0 : i32
    %c0_i32_0 = arith.constant 0 : i32
    %c0_i32_1 = arith.constant 0 : i32
    %c0_i32_2 = arith.constant 0 : i32
    return %arg0, %arg1, %c0_i32, %c0_i32_0, %c0_i32_1 : i32, i32, i32, i32, i32
  }
  func.func @transform_1(%arg0: i32, %arg1: i32) -> (i32, i32) {
    %c0_i32 = arith.constant 0 : i32
    %c0_i32_0 = arith.constant 0 : i32
    %c0_i32_1 = arith.constant 0 : i32
    return %c0_i32, %c0_i32_0 : i32, i32
  }
  func.func @transform_2(%arg0: i32, %arg1: i32) -> (i32, i32) {
    %c0_i32 = arith.constant 0 : i32
    %c0_i32_0 = arith.constant 0 : i32
    %c0_i32_1 = arith.constant 0 : i32
    return %c0_i32, %c0_i32_0 : i32, i32
  }
  func.func @transform_3(%arg0: i32, %arg1: i32) -> (i32, i32) {
    %c0_i32 = arith.constant 0 : i32
    %c0_i32_0 = arith.constant 0 : i32
    %c0_i32_1 = arith.constant 0 : i32
    return %c0_i32, %c0_i32_0 : i32, i32
  }
  func.func @transform_4(%arg0: i32, %arg1: i32) -> (i32, i32) {
    %c0_i32 = arith.constant 0 : i32
    %c0_i32_0 = arith.constant 0 : i32
    %c0_i32_1 = arith.constant 0 : i32
    return %c0_i32, %c0_i32_0 : i32, i32
  }
  func.func @transform_5(%arg0: i32, %arg1: i32) -> (i32, i32, i32, i32) {
    %c0_i32 = arith.constant 0 : i32
    %c0_i32_0 = arith.constant 0 : i32
    %c0_i32_1 = arith.constant 0 : i32
    return %arg0, %arg1, %c0_i32, %c0_i32_0 : i32, i32, i32, i32
  }
}

</mosaic_0001>

<llo_original>
// kernel: tpu_custom_call.1
$region0: #{tpu_custom_call.1}
  #allocation0 [shape = 'u32[]', space=smem, size = 0x4, offset = 0x4, fixed_abs, tag = 'smem constant byte address 0x4 - core index']
  #allocation1 [shape = 'u32[144,128]{1,0:T(1,128)}', space=vmem, size = 0x12000, scoped, tag = 'internal scratch']
  #allocation2 [shape = 'f32[10,18,8]{2,1,0:T(8,128)}', space=vmem, size = 0x1e000, scoped, tag = 'scratch operand']
  #allocation3 [shape = 'f32[160,36]{1,0:T(8,128)}', space=vmem, size = 0x14000, scoped, tag = 'scratch operand']
  #allocation4 [shape = 'f32[128,72]{1,0:T(8,128)}', space=vmem, size = 0x10000, scoped, tag = 'scratch operand']
  %s0 = inlined_call_operand.hbm [shape: f32[2,2,12,18,4], index: 0, kind: input, shape index: {}]
  %s1 = inlined_call_operand.hbm [shape: f32[36,8], index: 1, kind: input, shape index: {}]
  %s2 = inlined_call_operand.hbm [shape: f32[1,8], index: 2, kind: input, shape index: {}]
  %s3 = inlined_call_operand.hbm [shape: f32[72,8], index: 3, kind: input, shape index: {}]
  %s4 = inlined_call_operand.hbm [shape: f32[1,8], index: 4, kind: input, shape index: {}]
  %s5 = inlined_call_operand.hbm [shape: f32[2,16,16,8], index: 5, kind: output, shape index: {}]
  %s6 = sld [smem:[#allocation0]]
  $region81: #{tpu_custom_call.1} parent=0
    _
  %s8 = ssub.s32 1, %s6
  %s9 = scalar_select 0, %s8, %s6
  $region1: #{tpu_custom_call.1} parent=0
    #allocation5 [shape = 'u8[294912]{0}', space=vmem, size = 0x48000, scoped, tag = 'input window, operand 0']
    #allocation6 [shape = 's32[2]{0}', space=sflag, size = 0x8, scoped, tag = 'scoped memory for tpu_custom_call.1']
    #allocation7 [shape = 's32[2]{0}', space=sflag, size = 0x8, scoped, tag = 'scoped memory for tpu_custom_call.1']
    #allocation8 [shape = 'u8[20480]{0}', space=vmem, size = 0x5000, scoped, tag = 'input window, operand 1, single buffered']
    #allocation9 [shape = 's32[1]{0}', space=sflag, size = 0x4, scoped, tag = 'scoped memory for tpu_custom_call.1']
    #allocation10 [shape = 'u8[512]{0}', space=vmem, size = 0x400, scoped, tag = 'input window, operand 2, single buffered']
    #allocation11 [shape = 'u8[36864]{0}', space=vmem, size = 0x9000, scoped, tag = 'input window, operand 3, single buffered']
    #allocation12 [shape = 's32[1]{0}', space=sflag, size = 0x4, scoped, tag = 'scoped memory for tpu_custom_call.1']
    #allocation13 [shape = 'u8[512]{0}', space=vmem, size = 0x400, scoped, tag = 'input window, operand 4, single buffered']
    #allocation14 [shape = 'u8[131072]{0}', space=vmem, size = 0x20000, scoped, tag = 'output window, operand 0']
    %10 = vsyncpa [#allocation6], 0
    %s11 = scalar_lea.sflag [#allocation6], 1
    %12 = vsyncpa %s11, 0
    %13 = vsyncpa [#allocation9], 0
    %14 = vsyncpa [#allocation12], 0
    %15 = vsyncpa [#allocation7], 0
    %s16 = scalar_lea.sflag [#allocation7], 1
    %17 = vsyncpa %s16, 0
    loop: start=0, step=1, limit=6
    $region2: #{tpu_custom_call.1} parent=1 // loop_pre_header
      _
    $region3: #{tpu_custom_call.1} parent=1 // loop_header
      %s19 = sphi 0, %s23
      %p20 = scmp.ge.s32.totalorder %s19, 6
      %s26 = sphi 0, %s38
      %s27 = sphi 0, %s34
      %s28 = sphi 0, %s26
      %s29 = sphi 0, %s27
      %s30 = sphi 0, %s28
      %s31 = sphi 0, %s29
      %s43 = sphi 0, %s45
      %s46 = sphi 0, %s43
      %s47 = sphi 0, %s46
      %s63 = sphi 0, %s47
      %s67 = sphi 0, %s67
      %s69 = sphi 0, %s67
      %s70 = sphi 0, %s69
      %s84 = sphi 0, %s70
      %s88 = sphi 0, %s88
      %s90 = sphi 0, %s88
      %s91 = sphi 0, %s90
      %s105 = sphi 0, %s91
      %s109 = sphi 0, %s109
      %s111 = sphi 0, %s109
      %s112 = sphi 0, %s111
      %s126 = sphi 0, %s112
      %s130 = sphi 0, %s130
      %s132 = sphi 0, %s130
      %s133 = sphi 0, %s132
      %s147 = sphi 0, %s133
      %s155 = sphi 0, %s157
      %s158 = sphi 0, %s155
      %s159 = sphi 0, %s158
      %s175 = sphi 0, %s159
    $region4: #{tpu_custom_call.1} parent=1 // loop_header_branch
      %22 = sbr.rel (%p20) target = $region8
    $region5: #{tpu_custom_call.1} parent=1 // loop_body
      %s24 = ssub.s32 %s19, 1
      %s25 = ssub.s32 %s19, 2
      %s32 = sadd.s32 1, %s27
      %p33 = scmp.ge.s32.totalorder %s32, 2
      %s34 = scalar_select %p33, 0, %s32
      %s35 = sadd.s32 1, %s26
      %s36 = scalar_select %p33, %s35, %s26
      %p37 = scmp.ge.s32.totalorder %s36, 2
      %s38 = scalar_select %p37, 0, %s36
      %s39 = ssub.s32 %s26, %s38
      %s40 = ssub.s32 %s27, %s34
      %s41 = sor.u32 %s39, %s40
      %p42 = scmp.eq.s32.totalorder %s41, 0
      %s44 = sadd.s32 %s43, 1
      %s45 = scalar_select %p42, %s43, %s44
      %p48 = pneg %p42
      %p49 = scmp.eq.s32.totalorder %s19, 3
      %p50 = por %p48, %p49
      %p51 = scmp.ne.s32.totalorder %s43, %s46
      %p52 = scmp.eq.s32.totalorder %s19, 0
      %p53 = por %p51, %p52
      %p54 = scmp.ne.s32.totalorder %s43, %s46
      %p55 = scmp.eq.s32.totalorder %s24, 3
      %p56 = por %p54, %p55
      %p57 = scmp.ne.s32.totalorder %s46, %s47
      %p58 = scmp.eq.s32.totalorder %s24, 0
      %p59 = por %p57, %p58
      %p60 = scmp.ne.s32.totalorder %s46, %s47
      %p61 = scmp.eq.s32.totalorder %s25, 3
      %p62 = por %p60, %p61
      %p64 = scmp.ne.s32.totalorder %s47, %s63
      %p65 = scmp.eq.s32.totalorder %s25, 0
      %p66 = por %p64, %p65
      %s68 = sadd.s32 %s67, 1
      %p71 = scmp.eq.s32.totalorder %s19, 3
      %p72 = scmp.ne.s32.totalorder %s67, %s69
      %p73 = scmp.eq.s32.totalorder %s19, 0
      %p74 = por %p72, %p73
      %p75 = scmp.ne.s32.totalorder %s67, %s69
      %p76 = scmp.eq.s32.totalorder %s24, 3
      %p77 = por %p75, %p76
      %p78 = scmp.ne.s32.totalorder %s69, %s70
      %p79 = scmp.eq.s32.totalorder %s24, 0
      %p80 = por %p78, %p79
      %p81 = scmp.ne.s32.totalorder %s69, %s70
      %p82 = scmp.eq.s32.totalorder %s25, 3
      %p83 = por %p81, %p82
      %p85 = scmp.ne.s32.totalorder %s70, %s84
      %p86 = scmp.eq.s32.totalorder %s25, 0
      %p87 = por %p85, %p86
      %s89 = sadd.s32 %s88, 1
      %p92 = scmp.eq.s32.totalorder %s19, 3
      %p93 = scmp.ne.s32.totalorder %s88, %s90
      %p94 = scmp.eq.s32.totalorder %s19, 0
      %p95 = por %p93, %p94
      %p96 = scmp.ne.s32.totalorder %s88, %s90
      %p97 = scmp.eq.s32.totalorder %s24, 3
      %p98 = por %p96, %p97
      %p99 = scmp.ne.s32.totalorder %s90, %s91
      %p100 = scmp.eq.s32.totalorder %s24, 0
      %p101 = por %p99, %p100
      %p102 = scmp.ne.s32.totalorder %s90, %s91
      %p103 = scmp.eq.s32.totalorder %s25, 3
      %p104 = por %p102, %p103
      %p106 = scmp.ne.s32.totalorder %s91, %s105
      %p107 = scmp.eq.s32.totalorder %s25, 0
      %p108 = por %p106, %p107
      %s110 = sadd.s32 %s109, 1
      %p113 = scmp.eq.s32.totalorder %s19, 3
      %p114 = scmp.ne.s32.totalorder %s109, %s111
      %p115 = scmp.eq.s32.totalorder %s19, 0
      %p116 = por %p114, %p115
      %p117 = scmp.ne.s32.totalorder %s109, %s111
      %p118 = scmp.eq.s32.totalorder %s24, 3
      %p119 = por %p117, %p118
      %p120 = scmp.ne.s32.totalorder %s111, %s112
      %p121 = scmp.eq.s32.totalorder %s24, 0
      %p122 = por %p120, %p121
      %p123 = scmp.ne.s32.totalorder %s111, %s112
      %p124 = scmp.eq.s32.totalorder %s25, 3
      %p125 = por %p123, %p124
      %p127 = scmp.ne.s32.totalorder %s112, %s126
      %p128 = scmp.eq.s32.totalorder %s25, 0
      %p129 = por %p127, %p128
      %s131 = sadd.s32 %s130, 1
      %p134 = scmp.eq.s32.totalorder %s19, 3
      %p135 = scmp.ne.s32.totalorder %s130, %s132
      %p136 = scmp.eq.s32.totalorder %s19, 0
      %p137 = por %p135, %p136
      %p138 = scmp.ne.s32.totalorder %s130, %s132
      %p139 = scmp.eq.s32.totalorder %s24, 3
      %p140 = por %p138, %p139
      %p141 = scmp.ne.s32.totalorder %s132, %s133
      %p142 = scmp.eq.s32.totalorder %s24, 0
      %p143 = por %p141, %p142
      %p144 = scmp.ne.s32.totalorder %s132, %s133
      %p145 = scmp.eq.s32.totalorder %s25, 3
      %p146 = por %p144, %p145
      %p148 = scmp.ne.s32.totalorder %s133, %s147
      %p149 = scmp.eq.s32.totalorder %s25, 0
      %p150 = por %p148, %p149
      %s151 = ssub.s32 %s26, %s38
      %s152 = ssub.s32 %s27, %s34
      %s153 = sor.u32 %s151, %s152
      %p154 = scmp.eq.s32.totalorder %s153, 0
      %s156 = sadd.s32 %s155, 1
      %s157 = scalar_select %p154, %s155, %s156
      %p160 = pneg %p154
      %p161 = scmp.eq.s32.totalorder %s19, 3
      %p162 = por %p160, %p161
      %p163 = scmp.ne.s32.totalorder %s155, %s158
      %p164 = scmp.eq.s32.totalorder %s19, 0
      %p165 = por %p163, %p164
      %p166 = scmp.ne.s32.totalorder %s155, %s158
      %p167 = scmp.eq.s32.totalorder %s24, 3
      %p168 = por %p166, %p167
      %p169 = scmp.ne.s32.totalorder %s158, %s159
      %p170 = scmp.eq.s32.totalorder %s24, 0
      %p171 = por %p169, %p170
      %p172 = scmp.ne.s32.totalorder %s158, %s159
      %p173 = scmp.eq.s32.totalorder %s25, 3
      %p174 = por %p172, %p173
      %p176 = scmp.ne.s32.totalorder %s159, %s175
      %p177 = scmp.eq.s32.totalorder %s25, 0
      %p178 = por %p176, %p177
      %p179 = scmp.le.s32.totalorder 1, %s19
      %p180 = scmp.lt.s32.totalorder %s19, 5
      %p181 = pnand %p179, %p180
      %p182 = pneg %p181
      // Predicated region
      $region9: #{tpu_custom_call.1} parent=5 // pred_check
        _
      $region10: #{tpu_custom_call.1} parent=5 // pred_check_branch
        %184 = sbr.rel (%p181) target = $region12
      $region11: #{tpu_custom_call.1} parent=5 // pred_region
        %s185 = ssub.s32 %s19, 1
        // Predicated region
        $region13: #{tpu_custom_call.1} parent=11 // pred_check
          %p186 = pneg %p80
        $region14: #{tpu_custom_call.1} parent=11 // pred_check_branch
          %188 = sbr.rel (%p186) target = $region16
        $region15: #{tpu_custom_call.1} parent=11 // pred_region
          %s190 = ssub.s32 640, 640
          %191 = vsyncadd [#allocation9], %s190
          %s192 = sshll.u32 [#allocation8], 4
          %s193 = int_to_ptr.vmem [resolvable:$true] %s192
          %198 = dma.hbm_to_vmem [thread:$0]  %s1, 640, %s193, [#allocation9], 128, 128, 8
        $region16: #{tpu_custom_call.1} parent=11 // pred_fallthru
          _
        // Predicated region
        $region17: #{tpu_custom_call.1} parent=11 // pred_check
          %p199 = pneg %p101
        $region18: #{tpu_custom_call.1} parent=11 // pred_check_branch
          %201 = sbr.rel (%p199) target = $region20
        $region19: #{tpu_custom_call.1} parent=11 // pred_region
          %s203 = ssub.s32 16, 16
          %204 = vsyncadd [#allocation9], %s203
          %s206 = sshll.u32 [#allocation10], 4
          %s207 = int_to_ptr.vmem [resolvable:$true] %s206
          %209 = dma.hbm_to_vmem [thread:$0]  %s2, 16, %s207, [#allocation9]
        $region20: #{tpu_custom_call.1} parent=11 // pred_fallthru
          _
        // Predicated region
        $region21: #{tpu_custom_call.1} parent=11 // pred_check
          %p210 = pneg %p122
        $region22: #{tpu_custom_call.1} parent=11 // pred_check_branch
          %212 = sbr.rel (%p210) target = $region24
        $region23: #{tpu_custom_call.1} parent=11 // pred_region
          %s214 = ssub.s32 1152, 1152
          %215 = vsyncadd [#allocation12], %s214
          %s216 = sshll.u32 [#allocation11], 4
          %s217 = int_to_ptr.vmem [resolvable:$true] %s216
          %222 = dma.hbm_to_vmem [thread:$0]  %s3, 1152, %s217, [#allocation12], 128, 128, 8
        $region24: #{tpu_custom_call.1} parent=11 // pred_fallthru
          _
        // Predicated region
        $region25: #{tpu_custom_call.1} parent=11 // pred_check
          %p223 = pneg %p143
        $region26: #{tpu_custom_call.1} parent=11 // pred_check_branch
          %225 = sbr.rel (%p223) target = $region28
        $region27: #{tpu_custom_call.1} parent=11 // pred_region
          %s227 = ssub.s32 16, 16
          %228 = vsyncadd [#allocation12], %s227
          %s230 = sshll.u32 [#allocation13], 4
          %s231 = int_to_ptr.vmem [resolvable:$true] %s230
          %233 = dma.hbm_to_vmem [thread:$0]  %s4, 16, %s231, [#allocation12]
        $region28: #{tpu_custom_call.1} parent=11 // pred_fallthru
          _
      $region12: #{tpu_custom_call.1} parent=5 // pred_fallthru
        _
      %p234 = scmp.lt.s32.totalorder %s19, 4
      // Predicated region
      $region29: #{tpu_custom_call.1} parent=5 // pred_check
        %p235 = pneg %p234
      $region30: #{tpu_custom_call.1} parent=5 // pred_check_branch
        %237 = sbr.rel (%p235) target = $region32
      $region31: #{tpu_custom_call.1} parent=5 // pred_region
        // Predicated region
        $region33: #{tpu_custom_call.1} parent=31 // pred_check
          %p238 = pneg %p53
        $region34: #{tpu_custom_call.1} parent=31 // pred_check_branch
          %240 = sbr.rel (%p238) target = $region36
        $region35: #{tpu_custom_call.1} parent=31 // pred_region
          %s241 = sand.u32 %s43, 1
          %s242 = scalar_lea.sflag [#allocation6], %s241
          %s243 = sand.u32 %s43, 1
          %s244 = smul.addr %s243, 288
          %s245 = scalar_lea.vmem [#allocation5], %s244
          %s247 = ssub.s32 4608, 4608
          %248 = vsyncadd %s242, %s247
          %s249 = smul.addr %s27, 36
          %s250 = smul.addr %s26, 72
          %s251 = sadd.s32 %s249, %s250
          %s252 = smul.addr %s251, 128
          %s253 = scalar_lea.hbm %s0, %s252
          %s254 = sshll.u32 %s245, 4
          %s255 = int_to_ptr.vmem [resolvable:$true] %s254
          %260 = dma.hbm_to_vmem [thread:$0]  %s253, 4608, %s255, %s242, 128, 128, 8
        $region36: #{tpu_custom_call.1} parent=31 // pred_fallthru
          _
      $region32: #{tpu_custom_call.1} parent=5 // pred_fallthru
        _
      %p261 = scmp.le.s32.totalorder 1, %s19
      %p262 = scmp.lt.s32.totalorder %s19, 5
      %p263 = pnand %p261, %p262
      %p264 = pneg %p263
      // Predicated region
      $region37: #{tpu_custom_call.1} parent=5 // pred_check
        _
      $region38: #{tpu_custom_call.1} parent=5 // pred_check_branch
        %266 = sbr.rel (%p263) target = $region40
      $region39: #{tpu_custom_call.1} parent=5 // pred_region
        %s267 = ssub.s32 %s19, 1
        %s268 = sand.u32 %s46, 1
        %s269 = scalar_lea.sflag [#allocation6], %s268
        %s270 = sand.u32 %s46, 1
        %s271 = smul.addr %s270, 288
        %s272 = scalar_lea.vmem [#allocation5], %s271
        // Predicated region
        $region41: #{tpu_custom_call.1} parent=39 // pred_check
          %p273 = pneg %p59
        $region42: #{tpu_custom_call.1} parent=39 // pred_check_branch
          %275 = sbr.rel (%p273) target = $region44
        $region43: #{tpu_custom_call.1} parent=39 // pred_region
          %276 = dma.done %s269, 4608
        $region44: #{tpu_custom_call.1} parent=39 // pred_fallthru
          _
        // Predicated region
        $region45: #{tpu_custom_call.1} parent=39 // pred_check
          %p277 = pneg %p80
        $region46: #{tpu_custom_call.1} parent=39 // pred_check_branch
          %279 = sbr.rel (%p277) target = $region48
        $region47: #{tpu_custom_call.1} parent=39 // pred_region
          %280 = dma.done [#allocation9], 640
        $region48: #{tpu_custom_call.1} parent=39 // pred_fallthru
          _
        // Predicated region
        $region49: #{tpu_custom_call.1} parent=39 // pred_check
          %p281 = pneg %p101
        $region50: #{tpu_custom_call.1} parent=39 // pred_check_branch
          %283 = sbr.rel (%p281) target = $region52
        $region51: #{tpu_custom_call.1} parent=39 // pred_region
          %284 = dma.done [#allocation9], 16
        $region52: #{tpu_custom_call.1} parent=39 // pred_fallthru
          _
        // Predicated region
        $region53: #{tpu_custom_call.1} parent=39 // pred_check
          %p285 = pneg %p122
        $region54: #{tpu_custom_call.1} parent=39 // pred_check_branch
          %287 = sbr.rel (%p285) target = $region56
        $region55: #{tpu_custom_call.1} parent=39 // pred_region
          %288 = dma.done [#allocation12], 1152
        $region56: #{tpu_custom_call.1} parent=39 // pred_fallthru
          _
        // Predicated region
        $region57: #{tpu_custom_call.1} parent=39 // pred_check
          %p289 = pneg %p143
        $region58: #{tpu_custom_call.1} parent=39 // pred_check_branch
          %291 = sbr.rel (%p289) target = $region60
        $region59: #{tpu_custom_call.1} parent=39 // pred_region
          %292 = dma.done [#allocation12], 16
        $region60: #{tpu_custom_call.1} parent=39 // pred_fallthru
          _
        %s293 = sand.u32 %s46, 1
        %s294 = scalar_lea.sflag [#allocation6], %s293
        %s295 = sand.u32 %s46, 1
        %s296 = smul.addr %s295, 288
        %s297 = scalar_lea.vmem [#allocation5], %s296
        %p298 = pneg %p59
        %p299 = pneg %p56
        %p300 = pneg %p80
        %p301 = pneg %p77
        %p302 = pneg %p101
        %p303 = pneg %p98
        %p304 = pneg %p122
        %p305 = pneg %p119
        %p306 = pneg %p143
        %p307 = pneg %p140
        %p308 = pneg %p171
        %p309 = pneg %p168
        %s310 = sand.u32 %s158, 1
        %s311 = scalar_lea.sflag [#allocation7], %s310
        %s312 = sand.u32 %s158, 1
        %s313 = smul.addr %s312, 128
        %s314 = scalar_lea.vmem [#allocation14], %s313
        %s315 = smul.u32 8, %s29
        %v316 = vld [vmem:[%s272] sm:$0xff]
        %v317 = vld [vmem:[%s272 + $0x8] sm:$0xff]
        %v318 = vld [vmem:[%s272 + $0x18] sm:$0xff]
        %v319 = vld [vmem:[%s272 + $0x20] sm:$0xff]
        %v320 = vld [vmem:[%s272 + $0x30] sm:$0xff]
        %v321 = vld [vmem:[%s272 + $0x38] sm:$0xff]
        %v322 = vld [vmem:[%s272 + $0x48] sm:$0xff]
        %v323 = vld [vmem:[%s272 + $0x50] sm:$0xff]
        %v324 = vld [vmem:[%s272 + $0x60] sm:$0xff]
        %v325 = vld [vmem:[%s272 + $0x68] sm:$0xff]
        %v326 = vld [vmem:[%s272 + $0x78] sm:$0xff]
        %v327 = vld [vmem:[%s272 + $0x80] sm:$0xff]
        %v328 = vld [vmem:[%s272 + $0x90] sm:$0xff]
        %v329 = vld [vmem:[%s272 + $0x98] sm:$0xff]
        %v330 = vld [vmem:[%s272 + $0xa8] sm:$0xff]
        %v331 = vld [vmem:[%s272 + $0xb0] sm:$0xff]
        %v332 = vld [vmem:[%s272 + $0xc0] sm:$0xff]
        %v333 = vld [vmem:[%s272 + $0xc8] sm:$0xff]
        %v334 = vld [vmem:[%s272 + $0xd8] sm:$0xff]
        %v335 = vld [vmem:[%s272 + $0xe0] sm:$0xff]
        %vm336 = vcmask 31744
        %337 = vst.msk [vmem:[#allocation3] sm:$0xff] %vm336, %v316
        %338 = vst.msk [vmem:[#allocation3 + $0x8] sm:$0xff] %vm336, %v317
        %339 = vst.msk [vmem:[#allocation3 + $0x10] sm:$0xff] %vm336, %v318
        %340 = vst.msk [vmem:[#allocation3 + $0x18] sm:$0xff] %vm336, %v319
        %341 = vst.msk [vmem:[#allocation3 + $0x20] sm:$0xff] %vm336, %v320
        %342 = vst.msk [vmem:[#allocation3 + $0x28] sm:$0xff] %vm336, %v321
        %343 = vst.msk [vmem:[#allocation3 + $0x30] sm:$0xff] %vm336, %v322
        %344 = vst.msk [vmem:[#allocation3 + $0x38] sm:$0xff] %vm336, %v323
        %345 = vst.msk [vmem:[#allocation3 + $0x40] sm:$0xff] %vm336, %v324
        %346 = vst.msk [vmem:[#allocation3 + $0x48] sm:$0xff] %vm336, %v325
        %347 = vst.msk [vmem:[#allocation3 + $0x50] sm:$0xff] %vm336, %v326
        %348 = vst.msk [vmem:[#allocation3 + $0x58] sm:$0xff] %vm336, %v327
        %349 = vst.msk [vmem:[#allocation3 + $0x60] sm:$0xff] %vm336, %v328
        %350 = vst.msk [vmem:[#allocation3 + $0x68] sm:$0xff] %vm336, %v329
        %351 = vst.msk [vmem:[#allocation3 + $0x70] sm:$0xff] %vm336, %v330
        %352 = vst.msk [vmem:[#allocation3 + $0x78] sm:$0xff] %vm336, %v331
        %353 = vst.msk [vmem:[#allocation3 + $0x80] sm:$0xff] %vm336, %v332
        %354 = vst.msk [vmem:[#allocation3 + $0x88] sm:$0xff] %vm336, %v333
        %355 = vst.msk [vmem:[#allocation3 + $0x90] sm:$0xff] %vm336, %v334
        %356 = vst.msk [vmem:[#allocation3 + $0x98] sm:$0xff] %vm336, %v335
        %v357 = vld [vmem:[%s272 + $0x1] sm:$0xff]
        %v358 = vld [vmem:[%s272 + $0x9] sm:$0xff]
        %v359 = vld [vmem:[%s272 + $0x19] sm:$0xff]
        %v360 = vld [vmem:[%s272 + $0x21] sm:$0xff]
        %v361 = vld [vmem:[%s272 + $0x31] sm:$0xff]
        %v362 = vld [vmem:[%s272 + $0x39] sm:$0xff]
        %v363 = vld [vmem:[%s272 + $0x49] sm:$0xff]
        %v364 = vld [vmem:[%s272 + $0x51] sm:$0xff]
        %v365 = vld [vmem:[%s272 + $0x61] sm:$0xff]
        %v366 = vld [vmem:[%s272 + $0x69] sm:$0xff]
        %v367 = vld [vmem:[%s272 + $0x79] sm:$0xff]
        %v368 = vld [vmem:[%s272 + $0x81] sm:$0xff]
        %v369 = vld [vmem:[%s272 + $0x91] sm:$0xff]
        %v370 = vld [vmem:[%s272 + $0x99] sm:$0xff]
        %v371 = vld [vmem:[%s272 + $0xa9] sm:$0xff]
        %v372 = vld [vmem:[%s272 + $0xb1] sm:$0xff]
        %v373 = vld [vmem:[%s272 + $0xc1] sm:$0xff]
        %v374 = vld [vmem:[%s272 + $0xc9] sm:$0xff]
        %v375 = vld [vmem:[%s272 + $0xd9] sm:$0xff]
        %v376 = vld [vmem:[%s272 + $0xe1] sm:$0xff]
        %397 = vrot.lane.b32.xlu0 %v357, 4
        %v398 = vpop.permute.xlu0 %397
        %399 = vrot.lane.b32.xlu0 %v358, 4
        %v400 = vpop.permute.xlu0 %399
        %401 = vrot.lane.b32.xlu0 %v359, 4
        %v402 = vpop.permute.xlu0 %401
        %403 = vrot.lane.b32.xlu0 %v360, 4
        %v404 = vpop.permute.xlu0 %403
        %405 = vrot.lane.b32.xlu0 %v361, 4
        %v406 = vpop.permute.xlu0 %405
        %407 = vrot.lane.b32.xlu0 %v362, 4
        %v408 = vpop.permute.xlu0 %407
        %409 = vrot.lane.b32.xlu0 %v363, 4
        %v410 = vpop.permute.xlu0 %409
        %411 = vrot.lane.b32.xlu0 %v364, 4
        %v412 = vpop.permute.xlu0 %411
        %413 = vrot.lane.b32.xlu0 %v365, 4
        %v414 = vpop.permute.xlu0 %413
        %415 = vrot.lane.b32.xlu0 %v366, 4
        %v416 = vpop.permute.xlu0 %415
        %417 = vrot.lane.b32.xlu0 %v367, 4
        %v418 = vpop.permute.xlu0 %417
        %419 = vrot.lane.b32.xlu0 %v368, 4
        %v420 = vpop.permute.xlu0 %419
        %421 = vrot.lane.b32.xlu0 %v369, 4
        %v422 = vpop.permute.xlu0 %421
        %423 = vrot.lane.b32.xlu0 %v370, 4
        %v424 = vpop.permute.xlu0 %423
        %425 = vrot.lane.b32.xlu0 %v371, 4
        %v426 = vpop.permute.xlu0 %425
        %427 = vrot.lane.b32.xlu0 %v372, 4
        %v428 = vpop.permute.xlu0 %427
        %429 = vrot.lane.b32.xlu0 %v373, 4
        %v430 = vpop.permute.xlu0 %429
        %431 = vrot.lane.b32.xlu0 %v374, 4
        %v432 = vpop.permute.xlu0 %431
        %433 = vrot.lane.b32.xlu0 %v375, 4
        %v434 = vpop.permute.xlu0 %433
        %435 = vrot.lane.b32.xlu0 %v376, 4
        %v436 = vpop.permute.xlu0 %435
        %vm457 = vcmask 64544
        %458 = vst.msk [vmem:[#allocation3] sm:$0xff] %vm457, %v398
        %459 = vst.msk [vmem:[#allocation3 + $0x8] sm:$0xff] %vm457, %v400
        %460 = vst.msk [vmem:[#allocation3 + $0x10] sm:$0xff] %vm457, %v402
        %461 = vst.msk [vmem:[#allocation3 + $0x18] sm:$0xff] %vm457, %v404
        %462 = vst.msk [vmem:[#allocation3 + $0x20] sm:$0xff] %vm457, %v406
        %463 = vst.msk [vmem:[#allocation3 + $0x28] sm:$0xff] %vm457, %v408
        %464 = vst.msk [vmem:[#allocation3 + $0x30] sm:$0xff] %vm457, %v410
        %465 = vst.msk [vmem:[#allocation3 + $0x38] sm:$0xff] %vm457, %v412
        %466 = vst.msk [vmem:[#allocation3 + $0x40] sm:$0xff] %vm457, %v414
        %467 = vst.msk [vmem:[#allocation3 + $0x48] sm:$0xff] %vm457, %v416
        %468 = vst.msk [vmem:[#allocation3 + $0x50] sm:$0xff] %vm457, %v418
        %469 = vst.msk [vmem:[#allocation3 + $0x58] sm:$0xff] %vm457, %v420
        %470 = vst.msk [vmem:[#allocation3 + $0x60] sm:$0xff] %vm457, %v422
        %471 = vst.msk [vmem:[#allocation3 + $0x68] sm:$0xff] %vm457, %v424
        %472 = vst.msk [vmem:[#allocation3 + $0x70] sm:$0xff] %vm457, %v426
        %473 = vst.msk [vmem:[#allocation3 + $0x78] sm:$0xff] %vm457, %v428
        %474 = vst.msk [vmem:[#allocation3 + $0x80] sm:$0xff] %vm457, %v430
        %475 = vst.msk [vmem:[#allocation3 + $0x88] sm:$0xff] %vm457, %v432
        %476 = vst.msk [vmem:[#allocation3 + $0x90] sm:$0xff] %vm457, %v434
        %477 = vst.msk [vmem:[#allocation3 + $0x98] sm:$0xff] %vm457, %v436
        %v478 = vld [vmem:[%s272 + $0x2] sm:$0xff]
        %v479 = vld [vmem:[%s272 + $0xa] sm:$0xff]
        %v480 = vld [vmem:[%s272 + $0x1a] sm:$0xff]
        %v481 = vld [vmem:[%s272 + $0x22] sm:$0xff]
        %v482 = vld [vmem:[%s272 + $0x32] sm:$0xff]
        %v483 = vld [vmem:[%s272 + $0x3a] sm:$0xff]
        %v484 = vld [vmem:[%s272 + $0x4a] sm:$0xff]
        %v485 = vld [vmem:[%s272 + $0x52] sm:$0xff]
        %v486 = vld [vmem:[%s272 + $0x62] sm:$0xff]
        %v487 = vld [vmem:[%s272 + $0x6a] sm:$0xff]
        %v488 = vld [vmem:[%s272 + $0x7a] sm:$0xff]
        %v489 = vld [vmem:[%s272 + $0x82] sm:$0xff]
        %v490 = vld [vmem:[%s272 + $0x92] sm:$0xff]
        %v491 = vld [vmem:[%s272 + $0x9a] sm:$0xff]
        %v492 = vld [vmem:[%s272 + $0xaa] sm:$0xff]
        %v493 = vld [vmem:[%s272 + $0xb2] sm:$0xff]
        %v494 = vld [vmem:[%s272 + $0xc2] sm:$0xff]
        %v495 = vld [vmem:[%s272 + $0xca] sm:$0xff]
        %v496 = vld [vmem:[%s272 + $0xda] sm:$0xff]
        %v497 = vld [vmem:[%s272 + $0xe2] sm:$0xff]
        %518 = vrot.lane.b32.xlu0 %v478, 8
        %v519 = vpop.permute.xlu0 %518
        %520 = vrot.lane.b32.xlu0 %v479, 8
        %v521 = vpop.permute.xlu0 %520
        %522 = vrot.lane.b32.xlu0 %v480, 8
        %v523 = vpop.permute.xlu0 %522
        %524 = vrot.lane.b32.xlu0 %v481, 8
        %v525 = vpop.permute.xlu0 %524
        %526 = vrot.lane.b32.xlu0 %v482, 8
        %v527 = vpop.permute.xlu0 %526
        %528 = vrot.lane.b32.xlu0 %v483, 8
        %v529 = vpop.permute.xlu0 %528
        %530 = vrot.lane.b32.xlu0 %v484, 8
        %v531 = vpop.permute.xlu0 %530
        %532 = vrot.lane.b32.xlu0 %v485, 8
        %v533 = vpop.permute.xlu0 %532
        %534 = vrot.lane.b32.xlu0 %v486, 8
        %v535 = vpop.permute.xlu0 %534
        %536 = vrot.lane.b32.xlu0 %v487, 8
        %v537 = vpop.permute.xlu0 %536
        %538 = vrot.lane.b32.xlu0 %v488, 8
        %v539 = vpop.permute.xlu0 %538
        %540 = vrot.lane.b32.xlu0 %v489, 8
        %v541 = vpop.permute.xlu0 %540
        %542 = vrot.lane.b32.xlu0 %v490, 8
        %v543 = vpop.permute.xlu0 %542
        %544 = vrot.lane.b32.xlu0 %v491, 8
        %v545 = vpop.permute.xlu0 %544
        %546 = vrot.lane.b32.xlu0 %v492, 8
        %v547 = vpop.permute.xlu0 %546
        %548 = vrot.lane.b32.xlu0 %v493, 8
        %v549 = vpop.permute.xlu0 %548
        %550 = vrot.lane.b32.xlu0 %v494, 8
        %v551 = vpop.permute.xlu0 %550
        %552 = vrot.lane.b32.xlu0 %v495, 8
        %v553 = vpop.permute.xlu0 %552
        %554 = vrot.lane.b32.xlu0 %v496, 8
        %v555 = vpop.permute.xlu0 %554
        %556 = vrot.lane.b32.xlu0 %v497, 8
        %v557 = vpop.permute.xlu0 %556
        %vm578 = vcmask 97344
        %579 = vst.msk [vmem:[#allocation3] sm:$0xff] %vm578, %v519
        %580 = vst.msk [vmem:[#allocation3 + $0x8] sm:$0xff] %vm578, %v521
        %581 = vst.msk [vmem:[#allocation3 + $0x10] sm:$0xff] %vm578, %v523
        %582 = vst.msk [vmem:[#allocation3 + $0x18] sm:$0xff] %vm578, %v525
        %583 = vst.msk [vmem:[#allocation3 + $0x20] sm:$0xff] %vm578, %v527
        %584 = vst.msk [vmem:[#allocation3 + $0x28] sm:$0xff] %vm578, %v529
        %585 = vst.msk [vmem:[#allocation3 + $0x30] sm:$0xff] %vm578, %v531
        %586 = vst.msk [vmem:[#allocation3 + $0x38] sm:$0xff] %vm578, %v533
        %587 = vst.msk [vmem:[#allocation3 + $0x40] sm:$0xff] %vm578, %v535
        %588 = vst.msk [vmem:[#allocation3 + $0x48] sm:$0xff] %vm578, %v537
        %589 = vst.msk [vmem:[#allocation3 + $0x50] sm:$0xff] %vm578, %v539
        %590 = vst.msk [vmem:[#allocation3 + $0x58] sm:$0xff] %vm578, %v541
        %591 = vst.msk [vmem:[#allocation3 + $0x60] sm:$0xff] %vm578, %v543
        %592 = vst.msk [vmem:[#allocation3 + $0x68] sm:$0xff] %vm578, %v545
        %593 = vst.msk [vmem:[#allocation3 + $0x70] sm:$0xff] %vm578, %v547
        %594 = vst.msk [vmem:[#allocation3 + $0x78] sm:$0xff] %vm578, %v549
        %595 = vst.msk [vmem:[#allocation3 + $0x80] sm:$0xff] %vm578, %v551
        %596 = vst.msk [vmem:[#allocation3 + $0x88] sm:$0xff] %vm578, %v553
        %597 = vst.msk [vmem:[#allocation3 + $0x90] sm:$0xff] %vm578, %v555
        %598 = vst.msk [vmem:[#allocation3 + $0x98] sm:$0xff] %vm578, %v557
        %s599 = scalar_lea.vmem %s272, 24 [#allocation5]
        %v600 = vld [vmem:[%s599] sm:$0xff]
        %v601 = vld [vmem:[%s599 + $0x8] sm:$0xff]
        %v602 = vld [vmem:[%s599 + $0x18] sm:$0xff]
        %v603 = vld [vmem:[%s599 + $0x20] sm:$0xff]
        %v604 = vld [vmem:[%s599 + $0x30] sm:$0xff]
        %v605 = vld [vmem:[%s599 + $0x38] sm:$0xff]
        %v606 = vld [vmem:[%s599 + $0x48] sm:$0xff]
        %v607 = vld [vmem:[%s599 + $0x50] sm:$0xff]
        %v608 = vld [vmem:[%s599 + $0x60] sm:$0xff]
        %v609 = vld [vmem:[%s599 + $0x68] sm:$0xff]
        %v610 = vld [vmem:[%s599 + $0x78] sm:$0xff]
        %v611 = vld [vmem:[%s599 + $0x80] sm:$0xff]
        %v612 = vld [vmem:[%s599 + $0x90] sm:$0xff]
        %v613 = vld [vmem:[%s599 + $0x98] sm:$0xff]
        %v614 = vld [vmem:[%s599 + $0xa8] sm:$0xff]
        %v615 = vld [vmem:[%s599 + $0xb0] sm:$0xff]
        %v616 = vld [vmem:[%s599 + $0xc0] sm:$0xff]
        %v617 = vld [vmem:[%s599 + $0xc8] sm:$0xff]
        %v618 = vld [vmem:[%s599 + $0xd8] sm:$0xff]
        %v619 = vld [vmem:[%s599 + $0xe0] sm:$0xff]
        %640 = vrot.lane.b32.xlu0 %v600, 12
        %v641 = vpop.permute.xlu0 %640
        %642 = vrot.lane.b32.xlu0 %v601, 12
        %v643 = vpop.permute.xlu0 %642
        %644 = vrot.lane.b32.xlu0 %v602, 12
        %v645 = vpop.permute.xlu0 %644
        %646 = vrot.lane.b32.xlu0 %v603, 12
        %v647 = vpop.permute.xlu0 %646
        %648 = vrot.lane.b32.xlu0 %v604, 12
        %v649 = vpop.permute.xlu0 %648
        %650 = vrot.lane.b32.xlu0 %v605, 12
        %v651 = vpop.permute.xlu0 %650
        %652 = vrot.lane.b32.xlu0 %v606, 12
        %v653 = vpop.permute.xlu0 %652
        %654 = vrot.lane.b32.xlu0 %v607, 12
        %v655 = vpop.permute.xlu0 %654
        %656 = vrot.lane.b32.xlu0 %v608, 12
        %v657 = vpop.permute.xlu0 %656
        %658 = vrot.lane.b32.xlu0 %v609, 12
        %v659 = vpop.permute.xlu0 %658
        %660 = vrot.lane.b32.xlu0 %v610, 12
        %v661 = vpop.permute.xlu0 %660
        %662 = vrot.lane.b32.xlu0 %v611, 12
        %v663 = vpop.permute.xlu0 %662
        %664 = vrot.lane.b32.xlu0 %v612, 12
        %v665 = vpop.permute.xlu0 %664
        %666 = vrot.lane.b32.xlu0 %v613, 12
        %v667 = vpop.permute.xlu0 %666
        %668 = vrot.lane.b32.xlu0 %v614, 12
        %v669 = vpop.permute.xlu0 %668
        %670 = vrot.lane.b32.xlu0 %v615, 12
        %v671 = vpop.permute.xlu0 %670
        %672 = vrot.lane.b32.xlu0 %v616, 12
        %v673 = vpop.permute.xlu0 %672
        %674 = vrot.lane.b32.xlu0 %v617, 12
        %v675 = vpop.permute.xlu0 %674
        %676 = vrot.lane.b32.xlu0 %v618, 12
        %v677 = vpop.permute.xlu0 %676
        %678 = vrot.lane.b32.xlu0 %v619, 12
        %v679 = vpop.permute.xlu0 %678
        %vm700 = vcmask 130144
        %701 = vst.msk [vmem:[#allocation3] sm:$0xff] %vm700, %v641
        %702 = vst.msk [vmem:[#allocation3 + $0x8] sm:$0xff] %vm700, %v643
        %703 = vst.msk [vmem:[#allocation3 + $0x10] sm:$0xff] %vm700, %v645
        %704 = vst.msk [vmem:[#allocation3 + $0x18] sm:$0xff] %vm700, %v647
        %705 = vst.msk [vmem:[#allocation3 + $0x20] sm:$0xff] %vm700, %v649
        %706 = vst.msk [vmem:[#allocation3 + $0x28] sm:$0xff] %vm700, %v651
        %707 = vst.msk [vmem:[#allocation3 + $0x30] sm:$0xff] %vm700, %v653
        %708 = vst.msk [vmem:[#allocation3 + $0x38] sm:$0xff] %vm700, %v655
        %709 = vst.msk [vmem:[#allocation3 + $0x40] sm:$0xff] %vm700, %v657
        %710 = vst.msk [vmem:[#allocation3 + $0x48] sm:$0xff] %vm700, %v659
        %711 = vst.msk [vmem:[#allocation3 + $0x50] sm:$0xff] %vm700, %v661
        %712 = vst.msk [vmem:[#allocation3 + $0x58] sm:$0xff] %vm700, %v663
        %713 = vst.msk [vmem:[#allocation3 + $0x60] sm:$0xff] %vm700, %v665
        %714 = vst.msk [vmem:[#allocation3 + $0x68] sm:$0xff] %vm700, %v667
        %715 = vst.msk [vmem:[#allocation3 + $0x70] sm:$0xff] %vm700, %v669
        %716 = vst.msk [vmem:[#allocation3 + $0x78] sm:$0xff] %vm700, %v671
        %717 = vst.msk [vmem:[#allocation3 + $0x80] sm:$0xff] %vm700, %v673
        %718 = vst.msk [vmem:[#allocation3 + $0x88] sm:$0xff] %vm700, %v675
        %719 = vst.msk [vmem:[#allocation3 + $0x90] sm:$0xff] %vm700, %v677
        %720 = vst.msk [vmem:[#allocation3 + $0x98] sm:$0xff] %vm700, %v679
        %v721 = vld [vmem:[%s599 + $0x1] sm:$0xff]
        %v722 = vld [vmem:[%s599 + $0x9] sm:$0xff]
        %v723 = vld [vmem:[%s599 + $0x19] sm:$0xff]
        %v724 = vld [vmem:[%s599 + $0x21] sm:$0xff]
        %v725 = vld [vmem:[%s599 + $0x31] sm:$0xff]
        %v726 = vld [vmem:[%s599 + $0x39] sm:$0xff]
        %v727 = vld [vmem:[%s599 + $0x49] sm:$0xff]
        %v728 = vld [vmem:[%s599 + $0x51] sm:$0xff]
        %v729 = vld [vmem:[%s599 + $0x61] sm:$0xff]
        %v730 = vld [vmem:[%s599 + $0x69] sm:$0xff]
        %v731 = vld [vmem:[%s599 + $0x79] sm:$0xff]
        %v732 = vld [vmem:[%s599 + $0x81] sm:$0xff]
        %v733 = vld [vmem:[%s599 + $0x91] sm:$0xff]
        %v734 = vld [vmem:[%s599 + $0x99] sm:$0xff]
        %v735 = vld [vmem:[%s599 + $0xa9] sm:$0xff]
        %v736 = vld [vmem:[%s599 + $0xb1] sm:$0xff]
        %v737 = vld [vmem:[%s599 + $0xc1] sm:$0xff]
        %v738 = vld [vmem:[%s599 + $0xc9] sm:$0xff]
        %v739 = vld [vmem:[%s599 + $0xd9] sm:$0xff]
        %v740 = vld [vmem:[%s599 + $0xe1] sm:$0xff]
        %761 = vrot.lane.b32.xlu0 %v721, 16
        %v762 = vpop.permute.xlu0 %761
        %763 = vrot.lane.b32.xlu0 %v722, 16
        %v764 = vpop.permute.xlu0 %763
        %765 = vrot.lane.b32.xlu0 %v723, 16
        %v766 = vpop.permute.xlu0 %765
        %767 = vrot.lane.b32.xlu0 %v724, 16
        %v768 = vpop.permute.xlu0 %767
        %769 = vrot.lane.b32.xlu0 %v725, 16
        %v770 = vpop.permute.xlu0 %769
        %771 = vrot.lane.b32.xlu0 %v726, 16
        %v772 = vpop.permute.xlu0 %771
        %773 = vrot.lane.b32.xlu0 %v727, 16
        %v774 = vpop.permute.xlu0 %773
        %775 = vrot.lane.b32.xlu0 %v728, 16
        %v776 = vpop.permute.xlu0 %775
        %777 = vrot.lane.b32.xlu0 %v729, 16
        %v778 = vpop.permute.xlu0 %777
        %779 = vrot.lane.b32.xlu0 %v730, 16
        %v780 = vpop.permute.xlu0 %779
        %781 = vrot.lane.b32.xlu0 %v731, 16
        %v782 = vpop.permute.xlu0 %781
        %783 = vrot.lane.b32.xlu0 %v732, 16
        %v784 = vpop.permute.xlu0 %783
        %785 = vrot.lane.b32.xlu0 %v733, 16
        %v786 = vpop.permute.xlu0 %785
        %787 = vrot.lane.b32.xlu0 %v734, 16
        %v788 = vpop.permute.xlu0 %787
        %789 = vrot.lane.b32.xlu0 %v735, 16
        %v790 = vpop.permute.xlu0 %789
        %791 = vrot.lane.b32.xlu0 %v736, 16
        %v792 = vpop.permute.xlu0 %791
        %793 = vrot.lane.b32.xlu0 %v737, 16
        %v794 = vpop.permute.xlu0 %793
        %795 = vrot.lane.b32.xlu0 %v738, 16
        %v796 = vpop.permute.xlu0 %795
        %797 = vrot.lane.b32.xlu0 %v739, 16
        %v798 = vpop.permute.xlu0 %797
        %799 = vrot.lane.b32.xlu0 %v740, 16
        %v800 = vpop.permute.xlu0 %799
        %vm821 = vcmask 162944
        %822 = vst.msk [vmem:[#allocation3] sm:$0xff] %vm821, %v762
        %823 = vst.msk [vmem:[#allocation3 + $0x8] sm:$0xff] %vm821, %v764
        %824 = vst.msk [vmem:[#allocation3 + $0x10] sm:$0xff] %vm821, %v766
        %825 = vst.msk [vmem:[#allocation3 + $0x18] sm:$0xff] %vm821, %v768
        %826 = vst.msk [vmem:[#allocation3 + $0x20] sm:$0xff] %vm821, %v770
        %827 = vst.msk [vmem:[#allocation3 + $0x28] sm:$0xff] %vm821, %v772
        %828 = vst.msk [vmem:[#allocation3 + $0x30] sm:$0xff] %vm821, %v774
        %829 = vst.msk [vmem:[#allocation3 + $0x38] sm:$0xff] %vm821, %v776
        %830 = vst.msk [vmem:[#allocation3 + $0x40] sm:$0xff] %vm821, %v778
        %831 = vst.msk [vmem:[#allocation3 + $0x48] sm:$0xff] %vm821, %v780
        %832 = vst.msk [vmem:[#allocation3 + $0x50] sm:$0xff] %vm821, %v782
        %833 = vst.msk [vmem:[#allocation3 + $0x58] sm:$0xff] %vm821, %v784
        %834 = vst.msk [vmem:[#allocation3 + $0x60] sm:$0xff] %vm821, %v786
        %835 = vst.msk [vmem:[#allocation3 + $0x68] sm:$0xff] %vm821, %v788
        %836 = vst.msk [vmem:[#allocation3 + $0x70] sm:$0xff] %vm821, %v790
        %837 = vst.msk [vmem:[#allocation3 + $0x78] sm:$0xff] %vm821, %v792
        %838 = vst.msk [vmem:[#allocation3 + $0x80] sm:$0xff] %vm821, %v794
        %839 = vst.msk [vmem:[#allocation3 + $0x88] sm:$0xff] %vm821, %v796
        %840 = vst.msk [vmem:[#allocation3 + $0x90] sm:$0xff] %vm821, %v798
        %841 = vst.msk [vmem:[#allocation3 + $0x98] sm:$0xff] %vm821, %v800
        %v842 = vld [vmem:[%s599 + $0x2] sm:$0xff]
        %v843 = vld [vmem:[%s599 + $0xa] sm:$0xff]
        %v844 = vld [vmem:[%s599 + $0x1a] sm:$0xff]
        %v845 = vld [vmem:[%s599 + $0x22] sm:$0xff]
        %v846 = vld [vmem:[%s599 + $0x32] sm:$0xff]
        %v847 = vld [vmem:[%s599 + $0x3a] sm:$0xff]
        %v848 = vld [vmem:[%s599 + $0x4a] sm:$0xff]
        %v849 = vld [vmem:[%s599 + $0x52] sm:$0xff]
        %v850 = vld [vmem:[%s599 + $0x62] sm:$0xff]
        %v851 = vld [vmem:[%s599 + $0x6a] sm:$0xff]
        %v852 = vld [vmem:[%s599 + $0x7a] sm:$0xff]
        %v853 = vld [vmem:[%s599 + $0x82] sm:$0xff]
        %v854 = vld [vmem:[%s599 + $0x92] sm:$0xff]
        %v855 = vld [vmem:[%s599 + $0x9a] sm:$0xff]
        %v856 = vld [vmem:[%s599 + $0xaa] sm:$0xff]
        %v857 = vld [vmem:[%s599 + $0xb2] sm:$0xff]
        %v858 = vld [vmem:[%s599 + $0xc2] sm:$0xff]
        %v859 = vld [vmem:[%s599 + $0xca] sm:$0xff]
        %v860 = vld [vmem:[%s599 + $0xda] sm:$0xff]
        %v861 = vld [vmem:[%s599 + $0xe2] sm:$0xff]
        %882 = vrot.lane.b32.xlu0 %v842, 20
        %v883 = vpop.permute.xlu0 %882
        %884 = vrot.lane.b32.xlu0 %v843, 20
        %v885 = vpop.permute.xlu0 %884
        %886 = vrot.lane.b32.xlu0 %v844, 20
        %v887 = vpop.permute.xlu0 %886
        %888 = vrot.lane.b32.xlu0 %v845, 20
        %v889 = vpop.permute.xlu0 %888
        %890 = vrot.lane.b32.xlu0 %v846, 20
        %v891 = vpop.permute.xlu0 %890
        %892 = vrot.lane.b32.xlu0 %v847, 20
        %v893 = vpop.permute.xlu0 %892
        %894 = vrot.lane.b32.xlu0 %v848, 20
        %v895 = vpop.permute.xlu0 %894
        %896 = vrot.lane.b32.xlu0 %v849, 20
        %v897 = vpop.permute.xlu0 %896
        %898 = vrot.lane.b32.xlu0 %v850, 20
        %v899 = vpop.permute.xlu0 %898
        %900 = vrot.lane.b32.xlu0 %v851, 20
        %v901 = vpop.permute.xlu0 %900
        %902 = vrot.lane.b32.xlu0 %v852, 20
        %v903 = vpop.permute.xlu0 %902
        %904 = vrot.lane.b32.xlu0 %v853, 20
        %v905 = vpop.permute.xlu0 %904
        %906 = vrot.lane.b32.xlu0 %v854, 20
        %v907 = vpop.permute.xlu0 %906
        %908 = vrot.lane.b32.xlu0 %v855, 20
        %v909 = vpop.permute.xlu0 %908
        %910 = vrot.lane.b32.xlu0 %v856, 20
        %v911 = vpop.permute.xlu0 %910
        %912 = vrot.lane.b32.xlu0 %v857, 20
        %v913 = vpop.permute.xlu0 %912
        %914 = vrot.lane.b32.xlu0 %v858, 20
        %v915 = vpop.permute.xlu0 %914
        %916 = vrot.lane.b32.xlu0 %v859, 20
        %v917 = vpop.permute.xlu0 %916
        %918 = vrot.lane.b32.xlu0 %v860, 20
        %v919 = vpop.permute.xlu0 %918
        %920 = vrot.lane.b32.xlu0 %v861, 20
        %v921 = vpop.permute.xlu0 %920
        %vm942 = vcmask 195744
        %943 = vst.msk [vmem:[#allocation3] sm:$0xff] %vm942, %v883
        %944 = vst.msk [vmem:[#allocation3 + $0x8] sm:$0xff] %vm942, %v885
        %945 = vst.msk [vmem:[#allocation3 + $0x10] sm:$0xff] %vm942, %v887
        %946 = vst.msk [vmem:[#allocation3 + $0x18] sm:$0xff] %vm942, %v889
        %947 = vst.msk [vmem:[#allocation3 + $0x20] sm:$0xff] %vm942, %v891
        %948 = vst.msk [vmem:[#allocation3 + $0x28] sm:$0xff] %vm942, %v893
        %949 = vst.msk [vmem:[#allocation3 + $0x30] sm:$0xff] %vm942, %v895
        %950 = vst.msk [vmem:[#allocation3 + $0x38] sm:$0xff] %vm942, %v897
        %951 = vst.msk [vmem:[#allocation3 + $0x40] sm:$0xff] %vm942, %v899
        %952 = vst.msk [vmem:[#allocation3 + $0x48] sm:$0xff] %vm942, %v901
        %953 = vst.msk [vmem:[#allocation3 + $0x50] sm:$0xff] %vm942, %v903
        %954 = vst.msk [vmem:[#allocation3 + $0x58] sm:$0xff] %vm942, %v905
        %955 = vst.msk [vmem:[#allocation3 + $0x60] sm:$0xff] %vm942, %v907
        %956 = vst.msk [vmem:[#allocation3 + $0x68] sm:$0xff] %vm942, %v909
        %957 = vst.msk [vmem:[#allocation3 + $0x70] sm:$0xff] %vm942, %v911
        %958 = vst.msk [vmem:[#allocation3 + $0x78] sm:$0xff] %vm942, %v913
        %959 = vst.msk [vmem:[#allocation3 + $0x80] sm:$0xff] %vm942, %v915
        %960 = vst.msk [vmem:[#allocation3 + $0x88] sm:$0xff] %vm942, %v917
        %961 = vst.msk [vmem:[#allocation3 + $0x90] sm:$0xff] %vm942, %v919
        %962 = vst.msk [vmem:[#allocation3 + $0x98] sm:$0xff] %vm942, %v921
        %s963 = scalar_lea.vmem %s272, 48 [#allocation5]
        %v964 = vld [vmem:[%s963] sm:$0xff]
        %v965 = vld [vmem:[%s963 + $0x8] sm:$0xff]
        %v966 = vld [vmem:[%s963 + $0x18] sm:$0xff]
        %v967 = vld [vmem:[%s963 + $0x20] sm:$0xff]
        %v968 = vld [vmem:[%s963 + $0x30] sm:$0xff]
        %v969 = vld [vmem:[%s963 + $0x38] sm:$0xff]
        %v970 = vld [vmem:[%s963 + $0x48] sm:$0xff]
        %v971 = vld [vmem:[%s963 + $0x50] sm:$0xff]
        %v972 = vld [vmem:[%s963 + $0x60] sm:$0xff]
        %v973 = vld [vmem:[%s963 + $0x68] sm:$0xff]
        %v974 = vld [vmem:[%s963 + $0x78] sm:$0xff]
        %v975 = vld [vmem:[%s963 + $0x80] sm:$0xff]
        %v976 = vld [vmem:[%s963 + $0x90] sm:$0xff]
        %v977 = vld [vmem:[%s963 + $0x98] sm:$0xff]
        %v978 = vld [vmem:[%s963 + $0xa8] sm:$0xff]
        %v979 = vld [vmem:[%s963 + $0xb0] sm:$0xff]
        %v980 = vld [vmem:[%s963 + $0xc0] sm:$0xff]
        %v981 = vld [vmem:[%s963 + $0xc8] sm:$0xff]
        %v982 = vld [vmem:[%s963 + $0xd8] sm:$0xff]
        %v983 = vld [vmem:[%s963 + $0xe0] sm:$0xff]
        %1004 = vrot.lane.b32.xlu0 %v964, 24
        %v1005 = vpop.permute.xlu0 %1004
        %1006 = vrot.lane.b32.xlu0 %v965, 24
        %v1007 = vpop.permute.xlu0 %1006
        %1008 = vrot.lane.b32.xlu0 %v966, 24
        %v1009 = vpop.permute.xlu0 %1008
        %1010 = vrot.lane.b32.xlu0 %v967, 24
        %v1011 = vpop.permute.xlu0 %1010
        %1012 = vrot.lane.b32.xlu0 %v968, 24
        %v1013 = vpop.permute.xlu0 %1012
        %1014 = vrot.lane.b32.xlu0 %v969, 24
        %v1015 = vpop.permute.xlu0 %1014
        %1016 = vrot.lane.b32.xlu0 %v970, 24
        %v1017 = vpop.permute.xlu0 %1016
        %1018 = vrot.lane.b32.xlu0 %v971, 24
        %v1019 = vpop.permute.xlu0 %1018
        %1020 = vrot.lane.b32.xlu0 %v972, 24
        %v1021 = vpop.permute.xlu0 %1020
        %1022 = vrot.lane.b32.xlu0 %v973, 24
        %v1023 = vpop.permute.xlu0 %1022
        %1024 = vrot.lane.b32.xlu0 %v974, 24
        %v1025 = vpop.permute.xlu0 %1024
        %1026 = vrot.lane.b32.xlu0 %v975, 24
        %v1027 = vpop.permute.xlu0 %1026
        %1028 = vrot.lane.b32.xlu0 %v976, 24
        %v1029 = vpop.permute.xlu0 %1028
        %1030 = vrot.lane.b32.xlu0 %v977, 24
        %v1031 = vpop.permute.xlu0 %1030
        %1032 = vrot.lane.b32.xlu0 %v978, 24
        %v1033 = vpop.permute.xlu0 %1032
        %1034 = vrot.lane.b32.xlu0 %v979, 24
        %v1035 = vpop.permute.xlu0 %1034
        %1036 = vrot.lane.b32.xlu0 %v980, 24
        %v1037 = vpop.permute.xlu0 %1036
        %1038 = vrot.lane.b32.xlu0 %v981, 24
        %v1039 = vpop.permute.xlu0 %1038
        %1040 = vrot.lane.b32.xlu0 %v982, 24
        %v1041 = vpop.permute.xlu0 %1040
        %1042 = vrot.lane.b32.xlu0 %v983, 24
        %v1043 = vpop.permute.xlu0 %1042
        %vm1064 = vcmask 228544
        %1065 = vst.msk [vmem:[#allocation3] sm:$0xff] %vm1064, %v1005
        %1066 = vst.msk [vmem:[#allocation3 + $0x8] sm:$0xff] %vm1064, %v1007
        %1067 = vst.msk [vmem:[#allocation3 + $0x10] sm:$0xff] %vm1064, %v1009
        %1068 = vst.msk [vmem:[#allocation3 + $0x18] sm:$0xff] %vm1064, %v1011
        %1069 = vst.msk [vmem:[#allocation3 + $0x20] sm:$0xff] %vm1064, %v1013
        %1070 = vst.msk [vmem:[#allocation3 + $0x28] sm:$0xff] %vm1064, %v1015
        %1071 = vst.msk [vmem:[#allocation3 + $0x30] sm:$0xff] %vm1064, %v1017
        %1072 = vst.msk [vmem:[#allocation3 + $0x38] sm:$0xff] %vm1064, %v1019
        %1073 = vst.msk [vmem:[#allocation3 + $0x40] sm:$0xff] %vm1064, %v1021
        %1074 = vst.msk [vmem:[#allocation3 + $0x48] sm:$0xff] %vm1064, %v1023
        %1075 = vst.msk [vmem:[#allocation3 + $0x50] sm:$0xff] %vm1064, %v1025
        %1076 = vst.msk [vmem:[#allocation3 + $0x58] sm:$0xff] %vm1064, %v1027
        %1077 = vst.msk [vmem:[#allocation3 + $0x60] sm:$0xff] %vm1064, %v1029
        %1078 = vst.msk [vmem:[#allocation3 + $0x68] sm:$0xff] %vm1064, %v1031
        %1079 = vst.msk [vmem:[#allocation3 + $0x70] sm:$0xff] %vm1064, %v1033
        %1080 = vst.msk [vmem:[#allocation3 + $0x78] sm:$0xff] %vm1064, %v1035
        %1081 = vst.msk [vmem:[#allocation3 + $0x80] sm:$0xff] %vm1064, %v1037
        %1082 = vst.msk [vmem:[#allocation3 + $0x88] sm:$0xff] %vm1064, %v1039
        %1083 = vst.msk [vmem:[#allocation3 + $0x90] sm:$0xff] %vm1064, %v1041
        %1084 = vst.msk [vmem:[#allocation3 + $0x98] sm:$0xff] %vm1064, %v1043
        %v1085 = vld [vmem:[%s963 + $0x1] sm:$0xff]
        %v1086 = vld [vmem:[%s963 + $0x9] sm:$0xff]
        %v1087 = vld [vmem:[%s963 + $0x19] sm:$0xff]
        %v1088 = vld [vmem:[%s963 + $0x21] sm:$0xff]
        %v1089 = vld [vmem:[%s963 + $0x31] sm:$0xff]
        %v1090 = vld [vmem:[%s963 + $0x39] sm:$0xff]
        %v1091 = vld [vmem:[%s963 + $0x49] sm:$0xff]
        %v1092 = vld [vmem:[%s963 + $0x51] sm:$0xff]
        %v1093 = vld [vmem:[%s963 + $0x61] sm:$0xff]
        %v1094 = vld [vmem:[%s963 + $0x69] sm:$0xff]
        %v1095 = vld [vmem:[%s963 + $0x79] sm:$0xff]
        %v1096 = vld [vmem:[%s963 + $0x81] sm:$0xff]
        %v1097 = vld [vmem:[%s963 + $0x91] sm:$0xff]
        %v1098 = vld [vmem:[%s963 + $0x99] sm:$0xff]
        %v1099 = vld [vmem:[%s963 + $0xa9] sm:$0xff]
        %v1100 = vld [vmem:[%s963 + $0xb1] sm:$0xff]
        %v1101 = vld [vmem:[%s963 + $0xc1] sm:$0xff]
        %v1102 = vld [vmem:[%s963 + $0xc9] sm:$0xff]
        %v1103 = vld [vmem:[%s963 + $0xd9] sm:$0xff]
        %v1104 = vld [vmem:[%s963 + $0xe1] sm:$0xff]
        %1125 = vrot.lane.b32.xlu0 %v1085, 28
        %v1126 = vpop.permute.xlu0 %1125
        %1127 = vrot.lane.b32.xlu0 %v1086, 28
        %v1128 = vpop.permute.xlu0 %1127
        %1129 = vrot.lane.b32.xlu0 %v1087, 28
        %v1130 = vpop.permute.xlu0 %1129
        %1131 = vrot.lane.b32.xlu0 %v1088, 28
        %v1132 = vpop.permute.xlu0 %1131
        %1133 = vrot.lane.b32.xlu0 %v1089, 28
        %v1134 = vpop.permute.xlu0 %1133
        %1135 = vrot.lane.b32.xlu0 %v1090, 28
        %v1136 = vpop.permute.xlu0 %1135
        %1137 = vrot.lane.b32.xlu0 %v1091, 28
        %v1138 = vpop.permute.xlu0 %1137
        %1139 = vrot.lane.b32.xlu0 %v1092, 28
        %v1140 = vpop.permute.xlu0 %1139
        %1141 = vrot.lane.b32.xlu0 %v1093, 28
        %v1142 = vpop.permute.xlu0 %1141
        %1143 = vrot.lane.b32.xlu0 %v1094, 28
        %v1144 = vpop.permute.xlu0 %1143
        %1145 = vrot.lane.b32.xlu0 %v1095, 28
        %v1146 = vpop.permute.xlu0 %1145
        %1147 = vrot.lane.b32.xlu0 %v1096, 28
        %v1148 = vpop.permute.xlu0 %1147
        %1149 = vrot.lane.b32.xlu0 %v1097, 28
        %v1150 = vpop.permute.xlu0 %1149
        %1151 = vrot.lane.b32.xlu0 %v1098, 28
        %v1152 = vpop.permute.xlu0 %1151
        %1153 = vrot.lane.b32.xlu0 %v1099, 28
        %v1154 = vpop.permute.xlu0 %1153
        %1155 = vrot.lane.b32.xlu0 %v1100, 28
        %v1156 = vpop.permute.xlu0 %1155
        %1157 = vrot.lane.b32.xlu0 %v1101, 28
        %v1158 = vpop.permute.xlu0 %1157
        %1159 = vrot.lane.b32.xlu0 %v1102, 28
        %v1160 = vpop.permute.xlu0 %1159
        %1161 = vrot.lane.b32.xlu0 %v1103, 28
        %v1162 = vpop.permute.xlu0 %1161
        %1163 = vrot.lane.b32.xlu0 %v1104, 28
        %v1164 = vpop.permute.xlu0 %1163
        %vm1185 = vcmask 261344
        %1186 = vst.msk [vmem:[#allocation3] sm:$0xff] %vm1185, %v1126
        %1187 = vst.msk [vmem:[#allocation3 + $0x8] sm:$0xff] %vm1185, %v1128
        %1188 = vst.msk [vmem:[#allocation3 + $0x10] sm:$0xff] %vm1185, %v1130
        %1189 = vst.msk [vmem:[#allocation3 + $0x18] sm:$0xff] %vm1185, %v1132
        %1190 = vst.msk [vmem:[#allocation3 + $0x20] sm:$0xff] %vm1185, %v1134
        %1191 = vst.msk [vmem:[#allocation3 + $0x28] sm:$0xff] %vm1185, %v1136
        %1192 = vst.msk [vmem:[#allocation3 + $0x30] sm:$0xff] %vm1185, %v1138
        %1193 = vst.msk [vmem:[#allocation3 + $0x38] sm:$0xff] %vm1185, %v1140
        %1194 = vst.msk [vmem:[#allocation3 + $0x40] sm:$0xff] %vm1185, %v1142
        %1195 = vst.msk [vmem:[#allocation3 + $0x48] sm:$0xff] %vm1185, %v1144
        %1196 = vst.msk [vmem:[#allocation3 + $0x50] sm:$0xff] %vm1185, %v1146
        %1197 = vst.msk [vmem:[#allocation3 + $0x58] sm:$0xff] %vm1185, %v1148
        %1198 = vst.msk [vmem:[#allocation3 + $0x60] sm:$0xff] %vm1185, %v1150
        %1199 = vst.msk [vmem:[#allocation3 + $0x68] sm:$0xff] %vm1185, %v1152
        %1200 = vst.msk [vmem:[#allocation3 + $0x70] sm:$0xff] %vm1185, %v1154
        %1201 = vst.msk [vmem:[#allocation3 + $0x78] sm:$0xff] %vm1185, %v1156
        %1202 = vst.msk [vmem:[#allocation3 + $0x80] sm:$0xff] %vm1185, %v1158
        %1203 = vst.msk [vmem:[#allocation3 + $0x88] sm:$0xff] %vm1185, %v1160
        %1204 = vst.msk [vmem:[#allocation3 + $0x90] sm:$0xff] %vm1185, %v1162
        %1205 = vst.msk [vmem:[#allocation3 + $0x98] sm:$0xff] %vm1185, %v1164
        %v1206 = vld [vmem:[%s963 + $0x2] sm:$0xff]
        %v1207 = vld [vmem:[%s963 + $0xa] sm:$0xff]
        %v1208 = vld [vmem:[%s963 + $0x1a] sm:$0xff]
        %v1209 = vld [vmem:[%s963 + $0x22] sm:$0xff]
        %v1210 = vld [vmem:[%s963 + $0x32] sm:$0xff]
        %v1211 = vld [vmem:[%s963 + $0x3a] sm:$0xff]
        %v1212 = vld [vmem:[%s963 + $0x4a] sm:$0xff]
        %v1213 = vld [vmem:[%s963 + $0x52] sm:$0xff]
        %v1214 = vld [vmem:[%s963 + $0x62] sm:$0xff]
        %v1215 = vld [vmem:[%s963 + $0x6a] sm:$0xff]
        %v1216 = vld [vmem:[%s963 + $0x7a] sm:$0xff]
        %v1217 = vld [vmem:[%s963 + $0x82] sm:$0xff]
        %v1218 = vld [vmem:[%s963 + $0x92] sm:$0xff]
        %v1219 = vld [vmem:[%s963 + $0x9a] sm:$0xff]
        %v1220 = vld [vmem:[%s963 + $0xaa] sm:$0xff]
        %v1221 = vld [vmem:[%s963 + $0xb2] sm:$0xff]
        %v1222 = vld [vmem:[%s963 + $0xc2] sm:$0xff]
        %v1223 = vld [vmem:[%s963 + $0xca] sm:$0xff]
        %v1224 = vld [vmem:[%s963 + $0xda] sm:$0xff]
        %v1225 = vld [vmem:[%s963 + $0xe2] sm:$0xff]
        %1246 = vrot.lane.b32.xlu0 %v1206, 32
        %v1247 = vpop.permute.xlu0 %1246
        %1248 = vrot.lane.b32.xlu0 %v1207, 32
        %v1249 = vpop.permute.xlu0 %1248
        %1250 = vrot.lane.b32.xlu0 %v1208, 32
        %v1251 = vpop.permute.xlu0 %1250
        %1252 = vrot.lane.b32.xlu0 %v1209, 32
        %v1253 = vpop.permute.xlu0 %1252
        %1254 = vrot.lane.b32.xlu0 %v1210, 32
        %v1255 = vpop.permute.xlu0 %1254
        %1256 = vrot.lane.b32.xlu0 %v1211, 32
        %v1257 = vpop.permute.xlu0 %1256
        %1258 = vrot.lane.b32.xlu0 %v1212, 32
        %v1259 = vpop.permute.xlu0 %1258
        %1260 = vrot.lane.b32.xlu0 %v1213, 32
        %v1261 = vpop.permute.xlu0 %1260
        %1262 = vrot.lane.b32.xlu0 %v1214, 32
        %v1263 = vpop.permute.xlu0 %1262
        %1264 = vrot.lane.b32.xlu0 %v1215, 32
        %v1265 = vpop.permute.xlu0 %1264
        %1266 = vrot.lane.b32.xlu0 %v1216, 32
        %v1267 = vpop.permute.xlu0 %1266
        %1268 = vrot.lane.b32.xlu0 %v1217, 32
        %v1269 = vpop.permute.xlu0 %1268
        %1270 = vrot.lane.b32.xlu0 %v1218, 32
        %v1271 = vpop.permute.xlu0 %1270
        %1272 = vrot.lane.b32.xlu0 %v1219, 32
        %v1273 = vpop.permute.xlu0 %1272
        %1274 = vrot.lane.b32.xlu0 %v1220, 32
        %v1275 = vpop.permute.xlu0 %1274
        %1276 = vrot.lane.b32.xlu0 %v1221, 32
        %v1277 = vpop.permute.xlu0 %1276
        %1278 = vrot.lane.b32.xlu0 %v1222, 32
        %v1279 = vpop.permute.xlu0 %1278
        %1280 = vrot.lane.b32.xlu0 %v1223, 32
        %v1281 = vpop.permute.xlu0 %1280
        %1282 = vrot.lane.b32.xlu0 %v1224, 32
        %v1283 = vpop.permute.xlu0 %1282
        %1284 = vrot.lane.b32.xlu0 %v1225, 32
        %v1285 = vpop.permute.xlu0 %1284
        %vm1306 = vcmask 294144
        %1307 = vst.msk [vmem:[#allocation3] sm:$0xff] %vm1306, %v1247
        %1308 = vst.msk [vmem:[#allocation3 + $0x8] sm:$0xff] %vm1306, %v1249
        %1309 = vst.msk [vmem:[#allocation3 + $0x10] sm:$0xff] %vm1306, %v1251
        %1310 = vst.msk [vmem:[#allocation3 + $0x18] sm:$0xff] %vm1306, %v1253
        %1311 = vst.msk [vmem:[#allocation3 + $0x20] sm:$0xff] %vm1306, %v1255
        %1312 = vst.msk [vmem:[#allocation3 + $0x28] sm:$0xff] %vm1306, %v1257
        %1313 = vst.msk [vmem:[#allocation3 + $0x30] sm:$0xff] %vm1306, %v1259
        %1314 = vst.msk [vmem:[#allocation3 + $0x38] sm:$0xff] %vm1306, %v1261
        %1315 = vst.msk [vmem:[#allocation3 + $0x40] sm:$0xff] %vm1306, %v1263
        %1316 = vst.msk [vmem:[#allocation3 + $0x48] sm:$0xff] %vm1306, %v1265
        %1317 = vst.msk [vmem:[#allocation3 + $0x50] sm:$0xff] %vm1306, %v1267
        %1318 = vst.msk [vmem:[#allocation3 + $0x58] sm:$0xff] %vm1306, %v1269
        %1319 = vst.msk [vmem:[#allocation3 + $0x60] sm:$0xff] %vm1306, %v1271
        %1320 = vst.msk [vmem:[#allocation3 + $0x68] sm:$0xff] %vm1306, %v1273
        %1321 = vst.msk [vmem:[#allocation3 + $0x70] sm:$0xff] %vm1306, %v1275
        %1322 = vst.msk [vmem:[#allocation3 + $0x78] sm:$0xff] %vm1306, %v1277
        %1323 = vst.msk [vmem:[#allocation3 + $0x80] sm:$0xff] %vm1306, %v1279
        %1324 = vst.msk [vmem:[#allocation3 + $0x88] sm:$0xff] %vm1306, %v1281
        %1325 = vst.msk [vmem:[#allocation3 + $0x90] sm:$0xff] %vm1306, %v1283
        %1326 = vst.msk [vmem:[#allocation3 + $0x98] sm:$0xff] %vm1306, %v1285
        %v1327 = vld [vmem:[#allocation3] sm:$0xff]
        %v1328 = vld [vmem:[#allocation3 + $0x8] sm:$0xff]
        %v1329 = vld [vmem:[#allocation3 + $0x10] sm:$0xff]
        %v1330 = vld [vmem:[#allocation3 + $0x18] sm:$0xff]
        %v1331 = vld [vmem:[#allocation3 + $0x20] sm:$0xff]
        %v1332 = vld [vmem:[#allocation3 + $0x28] sm:$0xff]
        %v1333 = vld [vmem:[#allocation3 + $0x30] sm:$0xff]
        %v1334 = vld [vmem:[#allocation3 + $0x38] sm:$0xff]
        %v1335 = vld [vmem:[#allocation3 + $0x40] sm:$0xff]
        %v1336 = vld [vmem:[#allocation3 + $0x48] sm:$0xff]
        %v1337 = vld [vmem:[#allocation3 + $0x50] sm:$0xff]
        %v1338 = vld [vmem:[#allocation3 + $0x58] sm:$0xff]
        %v1339 = vld [vmem:[#allocation3 + $0x60] sm:$0xff]
        %v1340 = vld [vmem:[#allocation3 + $0x68] sm:$0xff]
        %v1341 = vld [vmem:[#allocation3 + $0x70] sm:$0xff]
        %v1342 = vld [vmem:[#allocation3 + $0x78] sm:$0xff]
        %v1343 = vld [vmem:[#allocation3 + $0x80] sm:$0xff]
        %v1344 = vld [vmem:[#allocation3 + $0x88] sm:$0xff]
        %v1345 = vld [vmem:[#allocation3 + $0x90] sm:$0xff]
        %v1346 = vld [vmem:[#allocation3 + $0x98] sm:$0xff]
        %v1347 = vld [vmem:[#allocation8] sm:$0xff]
        %v1348 = vld [vmem:[#allocation8 + $0x8] sm:$0xff]
        %v1349 = vld [vmem:[#allocation8 + $0x10] sm:$0xff]
        %v1350 = vld [vmem:[#allocation8 + $0x18] sm:$0xff]
        %v1351 = vld [vmem:[#allocation8 + $0x20] sm:$0xf]
        %v1352 = vld [vmem:[#allocation10] sm:$0x1]
        %v1354 = vlaneseq
        %v1355 = vshrl.u32 %v1354, 7
        %v1356 = vsub.s32 0, %v1355
        %v1357 = vrot.slane %v1352, %v1356
        %vm1359 = vcmask 293888
        %v1361 = vsel %vm1359, %v1327, 0
        %v1364 = vsel %vm1359, %v1328, 0
        %v1367 = vsel %vm1359, %v1329, 0
        %v1370 = vsel %vm1359, %v1330, 0
        %v1373 = vsel %vm1359, %v1331, 0
        %v1376 = vsel %vm1359, %v1332, 0
        %v1379 = vsel %vm1359, %v1333, 0
        %v1382 = vsel %vm1359, %v1334, 0
        %v1385 = vsel %vm1359, %v1335, 0
        %v1388 = vsel %vm1359, %v1336, 0
        %v1391 = vsel %vm1359, %v1337, 0
        %v1394 = vsel %vm1359, %v1338, 0
        %v1397 = vsel %vm1359, %v1339, 0
        %v1400 = vsel %vm1359, %v1340, 0
        %v1403 = vsel %vm1359, %v1341, 0
        %v1406 = vsel %vm1359, %v1342, 0
        %v1409 = vsel %vm1359, %v1343, 0
        %v1412 = vsel %vm1359, %v1344, 0
        %v1415 = vsel %vm1359, %v1345, 0
        %v1418 = vsel %vm1359, %v1346, 0
        %vm1420 = vcmask 1043456
        %v1422 = vsel %vm1420, %v1351, 0
        %1424 = vmatprep.subr.mxu0 0.0
        %1425 = vmatpush1.msra.mxu0 %v1347
        %1426 = vmatprep.subr.mxu0 0.0
        %1427 = vmatpush1.msra.mxu0 %v1348
        %1428 = vmatprep.subr.mxu0 0.0
        %1429 = vmatpush1.msra.mxu0 %v1349
        %1430 = vmatprep.subr.mxu0 0.0
        %1431 = vmatpush1.msra.mxu0 %v1350
        %1432 = vmatprep.subr.mxu0 0.0
        %1433 = vmatpush1.msra.mxu0 %v1422
        %1434 = vmatprep.subr.mxu0 0.0
        %1435 = vmatpush1.msra.mxu0 0.0
        %1436 = vmatprep.subr.mxu0 0.0
        %1437 = vmatpush1.msra.mxu0 0.0
        %1438 = vmatprep.subr.mxu0 0.0
        %1439 = vmatpush1.msra.mxu0 0.0
        %1440 = vmatprep.subr.mxu0 0.0
        %1441 = vmatpush1.msra.mxu0 0.0
        %1442 = vmatprep.subr.mxu0 0.0
        %1443 = vmatpush1.msra.mxu0 0.0
        %1444 = vmatprep.subr.mxu0 0.0
        %1445 = vmatpush1.msra.mxu0 0.0
        %1446 = vmatprep.subr.mxu0 0.0
        %1447 = vmatpush1.msra.mxu0 0.0
        %1448 = vmatprep.subr.mxu0 0.0
        %1449 = vmatpush1.msra.mxu0 0.0
        %1450 = vmatprep.subr.mxu0 0.0
        %1451 = vmatpush1.msra.mxu0 0.0
        %1452 = vmatprep.subr.mxu0 0.0
        %1453 = vmatpush1.msra.mxu0 0.0
        %1454 = vmatprep.subr.mxu0 0.0
        %1455 = vmatpush1.msra.mxu0 0.0
        %1456 = vmatprep.subr.mxu0 0.0
        %1457 = vmatpush1.msra.mxu0 0.0
        %1458 = vmatprep.subr.mxu0 0.0
        %1459 = vmatpush1.msra.mxu0 0.0
        %1460 = vmatprep.subr.mxu0 0.0
        %1461 = vmatpush1.msra.mxu0 0.0
        %1462 = vmatprep.subr.mxu0 0.0
        %1463 = vmatpush1.msra.mxu0 0.0
        %1464 = vmatprep.subr.mxu0 0.0
        %1465 = vmatpush1.msra.mxu0 0.0
        %1466 = vmatprep.subr.mxu0 0.0
        %1467 = vmatpush1.msra.mxu0 0.0
        %1468 = vmatprep.subr.mxu0 0.0
        %1469 = vmatpush1.msra.mxu0 0.0
        %1470 = vmatprep.subr.mxu0 0.0
        %1471 = vmatpush1.msra.mxu0 0.0
        %1472 = vmatprep.subr.mxu0 0.0
        %1473 = vmatpush1.msra.mxu0 0.0
        %1474 = vmatprep.subr.mxu0 0.0
        %1475 = vmatpush1.msra.mxu0 0.0
        %1476 = vmatprep.subr.mxu0 0.0
        %1477 = vmatpush1.msra.mxu0 0.0
        %1478 = vmatprep.subr.mxu0 0.0
        %1479 = vmatpush1.msra.mxu0 0.0
        %1480 = vmatprep.subr.mxu0 0.0
        %1481 = vmatpush1.msra.mxu0 0.0
        %1482 = vmatprep.subr.mxu0 0.0
        %1483 = vmatpush1.msra.mxu0 0.0
        %1484 = vmatprep.subr.mxu0 0.0
        %1485 = vmatpush1.msra.mxu0 0.0
        %1486 = vmatprep.subr.mxu0 0.0
        %1487 = vmatpush1.msra.mxu0 0.0
        %1488 = vmatprep.mubr.f32.mxu0 0.0
        %1489 = vmatmul.mubr.f32.gmra.mrb[0].mxu0 %v1361
        %v1490 = vpop.f32.mrb[0].mxu0
        %v1491 = vadd.f32 %v1357, %v1490
        %v1492 = vpop.f32.mrb[0].mxu0
        %1493 = vmatprep.mubr.f32.mxu0 0.0
        %1494 = vmatmul.mubr.f32.gmra.mrb[0].mxu0 %v1364
        %v1495 = vpop.f32.mrb[0].mxu0
        %v1496 = vadd.f32 %v1357, %v1495
        %v1497 = vpop.f32.mrb[0].mxu0
        %1498 = vmatprep.mubr.f32.mxu0 0.0
        %1499 = vmatmul.mubr.f32.gmra.mrb[0].mxu0 %v1367
        %v1500 = vpop.f32.mrb[0].mxu0
        %v1501 = vadd.f32 %v1357, %v1500
        %v1502 = vpop.f32.mrb[0].mxu0
        %1503 = vmatprep.mubr.f32.mxu0 0.0
        %1504 = vmatmul.mubr.f32.gmra.mrb[0].mxu0 %v1370
        %v1505 = vpop.f32.mrb[0].mxu0
        %v1506 = vadd.f32 %v1357, %v1505
        %v1507 = vpop.f32.mrb[0].mxu0
        %1508 = vmatprep.mubr.f32.mxu0 0.0
        %1509 = vmatmul.mubr.f32.gmra.mrb[0].mxu0 %v1373
        %v1510 = vpop.f32.mrb[0].mxu0
        %v1511 = vadd.f32 %v1357, %v1510
        %v1512 = vpop.f32.mrb[0].mxu0
        %1513 = vmatprep.mubr.f32.mxu0 0.0
        %1514 = vmatmul.mubr.f32.gmra.mrb[0].mxu0 %v1376
        %v1515 = vpop.f32.mrb[0].mxu0
        %v1516 = vadd.f32 %v1357, %v1515
        %v1517 = vpop.f32.mrb[0].mxu0
        %1518 = vmatprep.mubr.f32.mxu0 0.0
        %1519 = vmatmul.mubr.f32.gmra.mrb[0].mxu0 %v1379
        %v1520 = vpop.f32.mrb[0].mxu0
        %v1521 = vadd.f32 %v1357, %v1520
        %v1522 = vpop.f32.mrb[0].mxu0
        %1523 = vmatprep.mubr.f32.mxu0 0.0
        %1524 = vmatmul.mubr.f32.gmra.mrb[0].mxu0 %v1382
        %v1525 = vpop.f32.mrb[0].mxu0
        %v1526 = vadd.f32 %v1357, %v1525
        %v1527 = vpop.f32.mrb[0].mxu0
        %1528 = vmatprep.mubr.f32.mxu0 0.0
        %1529 = vmatmul.mubr.f32.gmra.mrb[0].mxu0 %v1385
        %v1530 = vpop.f32.mrb[0].mxu0
        %v1531 = vadd.f32 %v1357, %v1530
        %v1532 = vpop.f32.mrb[0].mxu0
        %1533 = vmatprep.mubr.f32.mxu0 0.0
        %1534 = vmatmul.mubr.f32.gmra.mrb[0].mxu0 %v1388
        %v1535 = vpop.f32.mrb[0].mxu0
        %v1536 = vadd.f32 %v1357, %v1535
        %v1537 = vpop.f32.mrb[0].mxu0
        %1538 = vmatprep.mubr.f32.mxu0 0.0
        %1539 = vmatmul.mubr.f32.gmra.mrb[0].mxu0 %v1391
        %v1540 = vpop.f32.mrb[0].mxu0
        %v1541 = vadd.f32 %v1357, %v1540
        %v1542 = vpop.f32.mrb[0].mxu0
        %1543 = vmatprep.mubr.f32.mxu0 0.0
        %1544 = vmatmul.mubr.f32.gmra.mrb[0].mxu0 %v1394
        %v1545 = vpop.f32.mrb[0].mxu0
        %v1546 = vadd.f32 %v1357, %v1545
        %v1547 = vpop.f32.mrb[0].mxu0
        %1548 = vmatprep.mubr.f32.mxu0 0.0
        %1549 = vmatmul.mubr.f32.gmra.mrb[0].mxu0 %v1397
        %v1550 = vpop.f32.mrb[0].mxu0
        %v1551 = vadd.f32 %v1357, %v1550
        %v1552 = vpop.f32.mrb[0].mxu0
        %1553 = vmatprep.mubr.f32.mxu0 0.0
        %1554 = vmatmul.mubr.f32.gmra.mrb[0].mxu0 %v1400
        %v1555 = vpop.f32.mrb[0].mxu0
        %v1556 = vadd.f32 %v1357, %v1555
        %v1557 = vpop.f32.mrb[0].mxu0
        %1558 = vmatprep.mubr.f32.mxu0 0.0
        %1559 = vmatmul.mubr.f32.gmra.mrb[0].mxu0 %v1403
        %v1560 = vpop.f32.mrb[0].mxu0
        %v1561 = vadd.f32 %v1357, %v1560
        %v1562 = vpop.f32.mrb[0].mxu0
        %1563 = vmatprep.mubr.f32.mxu0 0.0
        %1564 = vmatmul.mubr.f32.gmra.mrb[0].mxu0 %v1406
        %v1565 = vpop.f32.mrb[0].mxu0
        %v1566 = vadd.f32 %v1357, %v1565
        %v1567 = vpop.f32.mrb[0].mxu0
        %1568 = vmatprep.mubr.f32.mxu0 0.0
        %1569 = vmatmul.mubr.f32.gmra.mrb[0].mxu0 %v1409
        %v1570 = vpop.f32.mrb[0].mxu0
        %v1571 = vadd.f32 %v1357, %v1570
        %v1572 = vpop.f32.mrb[0].mxu0
        %1573 = vmatprep.mubr.f32.mxu0 0.0
        %1574 = vmatmul.mubr.f32.gmra.mrb[0].mxu0 %v1412
        %v1575 = vpop.f32.mrb[0].mxu0
        %v1576 = vadd.f32 %v1357, %v1575
        %v1577 = vpop.f32.mrb[0].mxu0
        %1578 = vmatprep.mubr.f32.mxu0 0.0
        %1579 = vmatmul.mubr.f32.gmra.mrb[0].mxu0 %v1415
        %v1580 = vpop.f32.mrb[0].mxu0
        %v1581 = vadd.f32 %v1357, %v1580
        %v1582 = vpop.f32.mrb[0].mxu0
        %1583 = vmatprep.mubr.f32.mxu0 0.0
        %1584 = vmatmul.mubr.f32.gmra.mrb[0].mxu0 %v1418
        %v1585 = vpop.f32.mrb[0].mxu0
        %v1586 = vadd.f32 %v1357, %v1585
        %v1587 = vpop.f32.mrb[0].mxu0
        %1588 = vdwg.mxu0
        %v1589 = vmax.f32 %v1491, 0.0
        %v1590 = vmax.f32 %v1496, 0.0
        %v1591 = vmax.f32 %v1501, 0.0
        %v1592 = vmax.f32 %v1506, 0.0
        %v1593 = vmax.f32 %v1511, 0.0
        %v1594 = vmax.f32 %v1516, 0.0
        %v1595 = vmax.f32 %v1521, 0.0
        %v1596 = vmax.f32 %v1526, 0.0
        %v1597 = vmax.f32 %v1531, 0.0
        %v1598 = vmax.f32 %v1536, 0.0
        %v1599 = vmax.f32 %v1541, 0.0
        %v1600 = vmax.f32 %v1546, 0.0
        %v1601 = vmax.f32 %v1551, 0.0
        %v1602 = vmax.f32 %v1556, 0.0
        %v1603 = vmax.f32 %v1561, 0.0
        %v1604 = vmax.f32 %v1566, 0.0
        %v1605 = vmax.f32 %v1571, 0.0
        %v1606 = vmax.f32 %v1576, 0.0
        %v1607 = vmax.f32 %v1581, 0.0
        %v1608 = vmax.f32 %v1586, 0.0
        %vm1609 = vcmask 64512
        %1610 = vst.msk [vmem:[#allocation2 + $0x1] sm:$0xff] %vm1609, %v1589
        %1611 = vst.msk [vmem:[#allocation2 + $0x9] sm:$0xff] %vm1609, %v1590
        %1612 = vst.msk [vmem:[#allocation2 + $0x19] sm:$0xff] %vm1609, %v1591
        %1613 = vst.msk [vmem:[#allocation2 + $0x21] sm:$0xff] %vm1609, %v1592
        %1614 = vst.msk [vmem:[#allocation2 + $0x31] sm:$0xff] %vm1609, %v1593
        %1615 = vst.msk [vmem:[#allocation2 + $0x39] sm:$0xff] %vm1609, %v1594
        %1616 = vst.msk [vmem:[#allocation2 + $0x49] sm:$0xff] %vm1609, %v1595
        %1617 = vst.msk [vmem:[#allocation2 + $0x51] sm:$0xff] %vm1609, %v1596
        %1618 = vst.msk [vmem:[#allocation2 + $0x61] sm:$0xff] %vm1609, %v1597
        %1619 = vst.msk [vmem:[#allocation2 + $0x69] sm:$0xff] %vm1609, %v1598
        %1620 = vst.msk [vmem:[#allocation2 + $0x79] sm:$0xff] %vm1609, %v1599
        %1621 = vst.msk [vmem:[#allocation2 + $0x81] sm:$0xff] %vm1609, %v1600
        %1622 = vst.msk [vmem:[#allocation2 + $0x91] sm:$0xff] %vm1609, %v1601
        %1623 = vst.msk [vmem:[#allocation2 + $0x99] sm:$0xff] %vm1609, %v1602
        %1624 = vst.msk [vmem:[#allocation2 + $0xa9] sm:$0xff] %vm1609, %v1603
        %1625 = vst.msk [vmem:[#allocation2 + $0xb1] sm:$0xff] %vm1609, %v1604
        %1626 = vst.msk [vmem:[#allocation2 + $0xc1] sm:$0xff] %vm1609, %v1605
        %1627 = vst.msk [vmem:[#allocation2 + $0xc9] sm:$0xff] %vm1609, %v1606
        %1628 = vst.msk [vmem:[#allocation2 + $0xd9] sm:$0xff] %vm1609, %v1607
        %1629 = vst.msk [vmem:[#allocation2 + $0xe1] sm:$0xff] %vm1609, %v1608
        %vm1630 = vcmask 57344
        %1631 = vst.msk [vmem:[#allocation2] sm:$0x1] %vm1630, 0.0
        %1632 = vst.msk [vmem:[#allocation2 + $0x18] sm:$0x1] %vm1630, 0.0
        %1633 = vst.msk [vmem:[#allocation2 + $0x30] sm:$0x1] %vm1630, 0.0
        %1634 = vst.msk [vmem:[#allocation2 + $0x48] sm:$0x1] %vm1630, 0.0
        %1635 = vst.msk [vmem:[#allocation2 + $0x60] sm:$0x1] %vm1630, 0.0
        %1636 = vst.msk [vmem:[#allocation2 + $0x78] sm:$0x1] %vm1630, 0.0
        %1637 = vst.msk [vmem:[#allocation2 + $0x90] sm:$0x1] %vm1630, 0.0
        %1638 = vst.msk [vmem:[#allocation2 + $0xa8] sm:$0x1] %vm1630, 0.0
        %1639 = vst.msk [vmem:[#allocation2 + $0xc0] sm:$0x1] %vm1630, 0.0
        %1640 = vst.msk [vmem:[#allocation2 + $0xd8] sm:$0x1] %vm1630, 0.0
        %1641 = vst.msk [vmem:[#allocation2 + $0x11] sm:$0x1] %vm1630, 0.0
        %1642 = vst.msk [vmem:[#allocation2 + $0x29] sm:$0x1] %vm1630, 0.0
        %1643 = vst.msk [vmem:[#allocation2 + $0x41] sm:$0x1] %vm1630, 0.0
        %1644 = vst.msk [vmem:[#allocation2 + $0x59] sm:$0x1] %vm1630, 0.0
        %1645 = vst.msk [vmem:[#allocation2 + $0x71] sm:$0x1] %vm1630, 0.0
        %1646 = vst.msk [vmem:[#allocation2 + $0x89] sm:$0x1] %vm1630, 0.0
        %1647 = vst.msk [vmem:[#allocation2 + $0xa1] sm:$0x1] %vm1630, 0.0
        %1648 = vst.msk [vmem:[#allocation2 + $0xb9] sm:$0x1] %vm1630, 0.0
        %1649 = vst.msk [vmem:[#allocation2 + $0xd1] sm:$0x1] %vm1630, 0.0
        %1650 = vst.msk [vmem:[#allocation2 + $0xe9] sm:$0x1] %vm1630, 0.0
        %p1651 = scmp.eq.s32.totalorder %s29, 0
        // Predicated region
        $region61: #{tpu_custom_call.1} parent=39 // pred_check
          %p1652 = pneg %p1651
        $region62: #{tpu_custom_call.1} parent=39 // pred_check_branch
          %1654 = sbr.rel (%p1652) target = $region64
        $region63: #{tpu_custom_call.1} parent=39 // pred_region
          %1655 = vst.msk [vmem:[#allocation2] sm:$0xff] %vm1609, 0.0
          %1656 = vst.msk [vmem:[#allocation2 + $0x8] sm:$0xff] %vm1609, 0.0
          %vm1657 = vcmask 58368
          %1658 = vst.msk [vmem:[#allocation2 + $0x10] sm:$0x3] %vm1657, 0.0
        $region64: #{tpu_custom_call.1} parent=39 // pred_fallthru
          _
        %p1659 = scmp.eq.s32.totalorder %s29, 1
        // Predicated region
        $region65: #{tpu_custom_call.1} parent=39 // pred_check
          %p1660 = pneg %p1659
        $region66: #{tpu_custom_call.1} parent=39 // pred_check_branch
          %1662 = sbr.rel (%p1660) target = $region68
        $region67: #{tpu_custom_call.1} parent=39 // pred_region
          %s1663 = scalar_lea.vmem [#allocation2], 216
          %1664 = vst.msk [vmem:[%s1663] sm:$0xff] %vm1609, 0.0
          %1665 = vst.msk [vmem:[%s1663 + $0x8] sm:$0xff] %vm1609, 0.0
          %vm1666 = vcmask 58368
          %1667 = vst.msk [vmem:[%s1663 + $0x10] sm:$0x3] %vm1666, 0.0
        $region68: #{tpu_custom_call.1} parent=39 // pred_fallthru
          _
        %v1668 = vld [vmem:[#allocation2] sm:$0xff]
        %v1669 = vld [vmem:[#allocation2 + $0x8] sm:$0xff]
        %v1670 = vld [vmem:[#allocation2 + $0x18] sm:$0xff]
        %v1671 = vld [vmem:[#allocation2 + $0x20] sm:$0xff]
        %v1672 = vld [vmem:[#allocation2 + $0x30] sm:$0xff]
        %v1673 = vld [vmem:[#allocation2 + $0x38] sm:$0xff]
        %v1674 = vld [vmem:[#allocation2 + $0x48] sm:$0xff]
        %v1675 = vld [vmem:[#allocation2 + $0x50] sm:$0xff]
        %v1676 = vld [vmem:[#allocation2 + $0x60] sm:$0xff]
        %v1677 = vld [vmem:[#allocation2 + $0x68] sm:$0xff]
        %v1678 = vld [vmem:[#allocation2 + $0x78] sm:$0xff]
        %v1679 = vld [vmem:[#allocation2 + $0x80] sm:$0xff]
        %v1680 = vld [vmem:[#allocation2 + $0x90] sm:$0xff]
        %v1681 = vld [vmem:[#allocation2 + $0x98] sm:$0xff]
        %v1682 = vld [vmem:[#allocation2 + $0xa8] sm:$0xff]
        %v1683 = vld [vmem:[#allocation2 + $0xb0] sm:$0xff]
        %1684 = vst.msk [vmem:[#allocation4] sm:$0xff] %vm1609, %v1668
        %1685 = vst.msk [vmem:[#allocation4 + $0x8] sm:$0xff] %vm1609, %v1669
        %1686 = vst.msk [vmem:[#allocation4 + $0x10] sm:$0xff] %vm1609, %v1670
        %1687 = vst.msk [vmem:[#allocation4 + $0x18] sm:$0xff] %vm1609, %v1671
        %1688 = vst.msk [vmem:[#allocation4 + $0x20] sm:$0xff] %vm1609, %v1672
        %1689 = vst.msk [vmem:[#allocation4 + $0x28] sm:$0xff] %vm1609, %v1673
        %1690 = vst.msk [vmem:[#allocation4 + $0x30] sm:$0xff] %vm1609, %v1674
        %1691 = vst.msk [vmem:[#allocation4 + $0x38] sm:$0xff] %vm1609, %v1675
        %1692 = vst.msk [vmem:[#allocation4 + $0x40] sm:$0xff] %vm1609, %v1676
        %1693 = vst.msk [vmem:[#allocation4 + $0x48] sm:$0xff] %vm1609, %v1677
        %1694 = vst.msk [vmem:[#allocation4 + $0x50] sm:$0xff] %vm1609, %v1678
        %1695 = vst.msk [vmem:[#allocation4 + $0x58] sm:$0xff] %vm1609, %v1679
        %1696 = vst.msk [vmem:[#allocation4 + $0x60] sm:$0xff] %vm1609, %v1680
        %1697 = vst.msk [vmem:[#allocation4 + $0x68] sm:$0xff] %vm1609, %v1681
        %1698 = vst.msk [vmem:[#allocation4 + $0x70] sm:$0xff] %vm1609, %v1682
        %1699 = vst.msk [vmem:[#allocation4 + $0x78] sm:$0xff] %vm1609, %v1683
        %v1700 = vld [vmem:[#allocation2 + $0x1] sm:$0xff]
        %v1701 = vld [vmem:[#allocation2 + $0x9] sm:$0xff]
        %v1702 = vld [vmem:[#allocation2 + $0x19] sm:$0xff]
        %v1703 = vld [vmem:[#allocation2 + $0x21] sm:$0xff]
        %v1704 = vld [vmem:[#allocation2 + $0x31] sm:$0xff]
        %v1705 = vld [vmem:[#allocation2 + $0x39] sm:$0xff]
        %v1706 = vld [vmem:[#allocation2 + $0x49] sm:$0xff]
        %v1707 = vld [vmem:[#allocation2 + $0x51] sm:$0xff]
        %v1708 = vld [vmem:[#allocation2 + $0x61] sm:$0xff]
        %v1709 = vld [vmem:[#allocation2 + $0x69] sm:$0xff]
        %v1710 = vld [vmem:[#allocation2 + $0x79] sm:$0xff]
        %v1711 = vld [vmem:[#allocation2 + $0x81] sm:$0xff]
        %v1712 = vld [vmem:[#allocation2 + $0x91] sm:$0xff]
        %v1713 = vld [vmem:[#allocation2 + $0x99] sm:$0xff]
        %v1714 = vld [vmem:[#allocation2 + $0xa9] sm:$0xff]
        %v1715 = vld [vmem:[#allocation2 + $0xb1] sm:$0xff]
        %1732 = vrot.lane.b32.xlu0 %v1700, 8
        %v1733 = vpop.permute.xlu0 %1732
        %1734 = vrot.lane.b32.xlu0 %v1701, 8
        %v1735 = vpop.permute.xlu0 %1734
        %1736 = vrot.lane.b32.xlu0 %v1702, 8
        %v1737 = vpop.permute.xlu0 %1736
        %1738 = vrot.lane.b32.xlu0 %v1703, 8
        %v1739 = vpop.permute.xlu0 %1738
        %1740 = vrot.lane.b32.xlu0 %v1704, 8
        %v1741 = vpop.permute.xlu0 %1740
        %1742 = vrot.lane.b32.xlu0 %v1705, 8
        %v1743 = vpop.permute.xlu0 %1742
        %1744 = vrot.lane.b32.xlu0 %v1706, 8
        %v1745 = vpop.permute.xlu0 %1744
        %1746 = vrot.lane.b32.xlu0 %v1707, 8
        %v1747 = vpop.permute.xlu0 %1746
        %1748 = vrot.lane.b32.xlu0 %v1708, 8
        %v1749 = vpop.permute.xlu0 %1748
        %1750 = vrot.lane.b32.xlu0 %v1709, 8
        %v1751 = vpop.permute.xlu0 %1750
        %1752 = vrot.lane.b32.xlu0 %v1710, 8
        %v1753 = vpop.permute.xlu0 %1752
        %1754 = vrot.lane.b32.xlu0 %v1711, 8
        %v1755 = vpop.permute.xlu0 %1754
        %1756 = vrot.lane.b32.xlu0 %v1712, 8
        %v1757 = vpop.permute.xlu0 %1756
        %1758 = vrot.lane.b32.xlu0 %v1713, 8
        %v1759 = vpop.permute.xlu0 %1758
        %1760 = vrot.lane.b32.xlu0 %v1714, 8
        %v1761 = vpop.permute.xlu0 %1760
        %1762 = vrot.lane.b32.xlu0 %v1715, 8
        %v1763 = vpop.permute.xlu0 %1762
        %vm1780 = vcmask 130112
        %1781 = vst.msk [vmem:[#allocation4] sm:$0xff] %vm1780, %v1733
        %1782 = vst.msk [vmem:[#allocation4 + $0x8] sm:$0xff] %vm1780, %v1735
        %1783 = vst.msk [vmem:[#allocation4 + $0x10] sm:$0xff] %vm1780, %v1737
        %1784 = vst.msk [vmem:[#allocation4 + $0x18] sm:$0xff] %vm1780, %v1739
        %1785 = vst.msk [vmem:[#allocation4 + $0x20] sm:$0xff] %vm1780, %v1741
        %1786 = vst.msk [vmem:[#allocation4 + $0x28] sm:$0xff] %vm1780, %v1743
        %1787 = vst.msk [vmem:[#allocation4 + $0x30] sm:$0xff] %vm1780, %v1745
        %1788 = vst.msk [vmem:[#allocation4 + $0x38] sm:$0xff] %vm1780, %v1747
        %1789 = vst.msk [vmem:[#allocation4 + $0x40] sm:$0xff] %vm1780, %v1749
        %1790 = vst.msk [vmem:[#allocation4 + $0x48] sm:$0xff] %vm1780, %v1751
        %1791 = vst.msk [vmem:[#allocation4 + $0x50] sm:$0xff] %vm1780, %v1753
        %1792 = vst.msk [vmem:[#allocation4 + $0x58] sm:$0xff] %vm1780, %v1755
        %1793 = vst.msk [vmem:[#allocation4 + $0x60] sm:$0xff] %vm1780, %v1757
        %1794 = vst.msk [vmem:[#allocation4 + $0x68] sm:$0xff] %vm1780, %v1759
        %1795 = vst.msk [vmem:[#allocation4 + $0x70] sm:$0xff] %vm1780, %v1761
        %1796 = vst.msk [vmem:[#allocation4 + $0x78] sm:$0xff] %vm1780, %v1763
        %v1797 = vld [vmem:[#allocation2 + $0x2] sm:$0xff]
        %v1798 = vld [vmem:[#allocation2 + $0xa] sm:$0xff]
        %v1799 = vld [vmem:[#allocation2 + $0x1a] sm:$0xff]
        %v1800 = vld [vmem:[#allocation2 + $0x22] sm:$0xff]
        %v1801 = vld [vmem:[#allocation2 + $0x32] sm:$0xff]
        %v1802 = vld [vmem:[#allocation2 + $0x3a] sm:$0xff]
        %v1803 = vld [vmem:[#allocation2 + $0x4a] sm:$0xff]
        %v1804 = vld [vmem:[#allocation2 + $0x52] sm:$0xff]
        %v1805 = vld [vmem:[#allocation2 + $0x62] sm:$0xff]
        %v1806 = vld [vmem:[#allocation2 + $0x6a] sm:$0xff]
        %v1807 = vld [vmem:[#allocation2 + $0x7a] sm:$0xff]
        %v1808 = vld [vmem:[#allocation2 + $0x82] sm:$0xff]
        %v1809 = vld [vmem:[#allocation2 + $0x92] sm:$0xff]
        %v1810 = vld [vmem:[#allocation2 + $0x9a] sm:$0xff]
        %v1811 = vld [vmem:[#allocation2 + $0xaa] sm:$0xff]
        %v1812 = vld [vmem:[#allocation2 + $0xb2] sm:$0xff]
        %1829 = vrot.lane.b32.xlu0 %v1797, 16
        %v1830 = vpop.permute.xlu0 %1829
        %1831 = vrot.lane.b32.xlu0 %v1798, 16
        %v1832 = vpop.permute.xlu0 %1831
        %1833 = vrot.lane.b32.xlu0 %v1799, 16
        %v1834 = vpop.permute.xlu0 %1833
        %1835 = vrot.lane.b32.xlu0 %v1800, 16
        %v1836 = vpop.permute.xlu0 %1835
        %1837 = vrot.lane.b32.xlu0 %v1801, 16
        %v1838 = vpop.permute.xlu0 %1837
        %1839 = vrot.lane.b32.xlu0 %v1802, 16
        %v1840 = vpop.permute.xlu0 %1839
        %1841 = vrot.lane.b32.xlu0 %v1803, 16
        %v1842 = vpop.permute.xlu0 %1841
        %1843 = vrot.lane.b32.xlu0 %v1804, 16
        %v1844 = vpop.permute.xlu0 %1843
        %1845 = vrot.lane.b32.xlu0 %v1805, 16
        %v1846 = vpop.permute.xlu0 %1845
        %1847 = vrot.lane.b32.xlu0 %v1806, 16
        %v1848 = vpop.permute.xlu0 %1847
        %1849 = vrot.lane.b32.xlu0 %v1807, 16
        %v1850 = vpop.permute.xlu0 %1849
        %1851 = vrot.lane.b32.xlu0 %v1808, 16
        %v1852 = vpop.permute.xlu0 %1851
        %1853 = vrot.lane.b32.xlu0 %v1809, 16
        %v1854 = vpop.permute.xlu0 %1853
        %1855 = vrot.lane.b32.xlu0 %v1810, 16
        %v1856 = vpop.permute.xlu0 %1855
        %1857 = vrot.lane.b32.xlu0 %v1811, 16
        %v1858 = vpop.permute.xlu0 %1857
        %1859 = vrot.lane.b32.xlu0 %v1812, 16
        %v1860 = vpop.permute.xlu0 %1859
        %vm1877 = vcmask 195712
        %1878 = vst.msk [vmem:[#allocation4] sm:$0xff] %vm1877, %v1830
        %1879 = vst.msk [vmem:[#allocation4 + $0x8] sm:$0xff] %vm1877, %v1832
        %1880 = vst.msk [vmem:[#allocation4 + $0x10] sm:$0xff] %vm1877, %v1834
        %1881 = vst.msk [vmem:[#allocation4 + $0x18] sm:$0xff] %vm1877, %v1836
        %1882 = vst.msk [vmem:[#allocation4 + $0x20] sm:$0xff] %vm1877, %v1838
        %1883 = vst.msk [vmem:[#allocation4 + $0x28] sm:$0xff] %vm1877, %v1840
        %1884 = vst.msk [vmem:[#allocation4 + $0x30] sm:$0xff] %vm1877, %v1842
        %1885 = vst.msk [vmem:[#allocation4 + $0x38] sm:$0xff] %vm1877, %v1844
        %1886 = vst.msk [vmem:[#allocation4 + $0x40] sm:$0xff] %vm1877, %v1846
        %1887 = vst.msk [vmem:[#allocation4 + $0x48] sm:$0xff] %vm1877, %v1848
        %1888 = vst.msk [vmem:[#allocation4 + $0x50] sm:$0xff] %vm1877, %v1850
        %1889 = vst.msk [vmem:[#allocation4 + $0x58] sm:$0xff] %vm1877, %v1852
        %1890 = vst.msk [vmem:[#allocation4 + $0x60] sm:$0xff] %vm1877, %v1854
        %1891 = vst.msk [vmem:[#allocation4 + $0x68] sm:$0xff] %vm1877, %v1856
        %1892 = vst.msk [vmem:[#allocation4 + $0x70] sm:$0xff] %vm1877, %v1858
        %1893 = vst.msk [vmem:[#allocation4 + $0x78] sm:$0xff] %vm1877, %v1860
        %s1894 = scalar_lea.vmem [#allocation2], 24
        %v1895 = vld [vmem:[%s1894] sm:$0xff]
        %v1896 = vld [vmem:[%s1894 + $0x8] sm:$0xff]
        %v1897 = vld [vmem:[%s1894 + $0x18] sm:$0xff]
        %v1898 = vld [vmem:[%s1894 + $0x20] sm:$0xff]
        %v1899 = vld [vmem:[%s1894 + $0x30] sm:$0xff]
        %v1900 = vld [vmem:[%s1894 + $0x38] sm:$0xff]
        %v1901 = vld [vmem:[%s1894 + $0x48] sm:$0xff]
        %v1902 = vld [vmem:[%s1894 + $0x50] sm:$0xff]
        %v1903 = vld [vmem:[%s1894 + $0x60] sm:$0xff]
        %v1904 = vld [vmem:[%s1894 + $0x68] sm:$0xff]
        %v1905 = vld [vmem:[%s1894 + $0x78] sm:$0xff]
        %v1906 = vld [vmem:[%s1894 + $0x80] sm:$0xff]
        %v1907 = vld [vmem:[%s1894 + $0x90] sm:$0xff]
        %v1908 = vld [vmem:[%s1894 + $0x98] sm:$0xff]
        %v1909 = vld [vmem:[%s1894 + $0xa8] sm:$0xff]
        %v1910 = vld [vmem:[%s1894 + $0xb0] sm:$0xff]
        %1927 = vrot.lane.b32.xlu0 %v1895, 24
        %v1928 = vpop.permute.xlu0 %1927
        %1929 = vrot.lane.b32.xlu0 %v1896, 24
        %v1930 = vpop.permute.xlu0 %1929
        %1931 = vrot.lane.b32.xlu0 %v1897, 24
        %v1932 = vpop.permute.xlu0 %1931
        %1933 = vrot.lane.b32.xlu0 %v1898, 24
        %v1934 = vpop.permute.xlu0 %1933
        %1935 = vrot.lane.b32.xlu0 %v1899, 24
        %v1936 = vpop.permute.xlu0 %1935
        %1937 = vrot.lane.b32.xlu0 %v1900, 24
        %v1938 = vpop.permute.xlu0 %1937
        %1939 = vrot.lane.b32.xlu0 %v1901, 24
        %v1940 = vpop.permute.xlu0 %1939
        %1941 = vrot.lane.b32.xlu0 %v1902, 24
        %v1942 = vpop.permute.xlu0 %1941
        %1943 = vrot.lane.b32.xlu0 %v1903, 24
        %v1944 = vpop.permute.xlu0 %1943
        %1945 = vrot.lane.b32.xlu0 %v1904, 24
        %v1946 = vpop.permute.xlu0 %1945
        %1947 = vrot.lane.b32.xlu0 %v1905, 24
        %v1948 = vpop.permute.xlu0 %1947
        %1949 = vrot.lane.b32.xlu0 %v1906, 24
        %v1950 = vpop.permute.xlu0 %1949
        %1951 = vrot.lane.b32.xlu0 %v1907, 24
        %v1952 = vpop.permute.xlu0 %1951
        %1953 = vrot.lane.b32.xlu0 %v1908, 24
        %v1954 = vpop.permute.xlu0 %1953
        %1955 = vrot.lane.b32.xlu0 %v1909, 24
        %v1956 = vpop.permute.xlu0 %1955
        %1957 = vrot.lane.b32.xlu0 %v1910, 24
        %v1958 = vpop.permute.xlu0 %1957
        %vm1975 = vcmask 261312
        %1976 = vst.msk [vmem:[#allocation4] sm:$0xff] %vm1975, %v1928
        %1977 = vst.msk [vmem:[#allocation4 + $0x8] sm:$0xff] %vm1975, %v1930
        %1978 = vst.msk [vmem:[#allocation4 + $0x10] sm:$0xff] %vm1975, %v1932
        %1979 = vst.msk [vmem:[#allocation4 + $0x18] sm:$0xff] %vm1975, %v1934
        %1980 = vst.msk [vmem:[#allocation4 + $0x20] sm:$0xff] %vm1975, %v1936
        %1981 = vst.msk [vmem:[#allocation4 + $0x28] sm:$0xff] %vm1975, %v1938
        %1982 = vst.msk [vmem:[#allocation4 + $0x30] sm:$0xff] %vm1975, %v1940
        %1983 = vst.msk [vmem:[#allocation4 + $0x38] sm:$0xff] %vm1975, %v1942
        %1984 = vst.msk [vmem:[#allocation4 + $0x40] sm:$0xff] %vm1975, %v1944
        %1985 = vst.msk [vmem:[#allocation4 + $0x48] sm:$0xff] %vm1975, %v1946
        %1986 = vst.msk [vmem:[#allocation4 + $0x50] sm:$0xff] %vm1975, %v1948
        %1987 = vst.msk [vmem:[#allocation4 + $0x58] sm:$0xff] %vm1975, %v1950
        %1988 = vst.msk [vmem:[#allocation4 + $0x60] sm:$0xff] %vm1975, %v1952
        %1989 = vst.msk [vmem:[#allocation4 + $0x68] sm:$0xff] %vm1975, %v1954
        %1990 = vst.msk [vmem:[#allocation4 + $0x70] sm:$0xff] %vm1975, %v1956
        %1991 = vst.msk [vmem:[#allocation4 + $0x78] sm:$0xff] %vm1975, %v1958
        %v1992 = vld [vmem:[%s1894 + $0x1] sm:$0xff]
        %v1993 = vld [vmem:[%s1894 + $0x9] sm:$0xff]
        %v1994 = vld [vmem:[%s1894 + $0x19] sm:$0xff]
        %v1995 = vld [vmem:[%s1894 + $0x21] sm:$0xff]
        %v1996 = vld [vmem:[%s1894 + $0x31] sm:$0xff]
        %v1997 = vld [vmem:[%s1894 + $0x39] sm:$0xff]
        %v1998 = vld [vmem:[%s1894 + $0x49] sm:$0xff]
        %v1999 = vld [vmem:[%s1894 + $0x51] sm:$0xff]
        %v2000 = vld [vmem:[%s1894 + $0x61] sm:$0xff]
        %v2001 = vld [vmem:[%s1894 + $0x69] sm:$0xff]
        %v2002 = vld [vmem:[%s1894 + $0x79] sm:$0xff]
        %v2003 = vld [vmem:[%s1894 + $0x81] sm:$0xff]
        %v2004 = vld [vmem:[%s1894 + $0x91] sm:$0xff]
        %v2005 = vld [vmem:[%s1894 + $0x99] sm:$0xff]
        %v2006 = vld [vmem:[%s1894 + $0xa9] sm:$0xff]
        %v2007 = vld [vmem:[%s1894 + $0xb1] sm:$0xff]
        %2024 = vrot.lane.b32.xlu0 %v1992, 32
        %v2025 = vpop.permute.xlu0 %2024
        %2026 = vrot.lane.b32.xlu0 %v1993, 32
        %v2027 = vpop.permute.xlu0 %2026
        %2028 = vrot.lane.b32.xlu0 %v1994, 32
        %v2029 = vpop.permute.xlu0 %2028
        %2030 = vrot.lane.b32.xlu0 %v1995, 32
        %v2031 = vpop.permute.xlu0 %2030
        %2032 = vrot.lane.b32.xlu0 %v1996, 32
        %v2033 = vpop.permute.xlu0 %2032
        %2034 = vrot.lane.b32.xlu0 %v1997, 32
        %v2035 = vpop.permute.xlu0 %2034
        %2036 = vrot.lane.b32.xlu0 %v1998, 32
        %v2037 = vpop.permute.xlu0 %2036
        %2038 = vrot.lane.b32.xlu0 %v1999, 32
        %v2039 = vpop.permute.xlu0 %2038
        %2040 = vrot.lane.b32.xlu0 %v2000, 32
        %v2041 = vpop.permute.xlu0 %2040
        %2042 = vrot.lane.b32.xlu0 %v2001, 32
        %v2043 = vpop.permute.xlu0 %2042
        %2044 = vrot.lane.b32.xlu0 %v2002, 32
        %v2045 = vpop.permute.xlu0 %2044
        %2046 = vrot.lane.b32.xlu0 %v2003, 32
        %v2047 = vpop.permute.xlu0 %2046
        %2048 = vrot.lane.b32.xlu0 %v2004, 32
        %v2049 = vpop.permute.xlu0 %2048
        %2050 = vrot.lane.b32.xlu0 %v2005, 32
        %v2051 = vpop.permute.xlu0 %2050
        %2052 = vrot.lane.b32.xlu0 %v2006, 32
        %v2053 = vpop.permute.xlu0 %2052
        %2054 = vrot.lane.b32.xlu0 %v2007, 32
        %v2055 = vpop.permute.xlu0 %2054
        %vm2072 = vcmask 326912
        %2073 = vst.msk [vmem:[#allocation4] sm:$0xff] %vm2072, %v2025
        %2074 = vst.msk [vmem:[#allocation4 + $0x8] sm:$0xff] %vm2072, %v2027
        %2075 = vst.msk [vmem:[#allocation4 + $0x10] sm:$0xff] %vm2072, %v2029
        %2076 = vst.msk [vmem:[#allocation4 + $0x18] sm:$0xff] %vm2072, %v2031
        %2077 = vst.msk [vmem:[#allocation4 + $0x20] sm:$0xff] %vm2072, %v2033
        %2078 = vst.msk [vmem:[#allocation4 + $0x28] sm:$0xff] %vm2072, %v2035
        %2079 = vst.msk [vmem:[#allocation4 + $0x30] sm:$0xff] %vm2072, %v2037
        %2080 = vst.msk [vmem:[#allocation4 + $0x38] sm:$0xff] %vm2072, %v2039
        %2081 = vst.msk [vmem:[#allocation4 + $0x40] sm:$0xff] %vm2072, %v2041
        %2082 = vst.msk [vmem:[#allocation4 + $0x48] sm:$0xff] %vm2072, %v2043
        %2083 = vst.msk [vmem:[#allocation4 + $0x50] sm:$0xff] %vm2072, %v2045
        %2084 = vst.msk [vmem:[#allocation4 + $0x58] sm:$0xff] %vm2072, %v2047
        %2085 = vst.msk [vmem:[#allocation4 + $0x60] sm:$0xff] %vm2072, %v2049
        %2086 = vst.msk [vmem:[#allocation4 + $0x68] sm:$0xff] %vm2072, %v2051
        %2087 = vst.msk [vmem:[#allocation4 + $0x70] sm:$0xff] %vm2072, %v2053
        %2088 = vst.msk [vmem:[#allocation4 + $0x78] sm:$0xff] %vm2072, %v2055
        %v2089 = vld [vmem:[%s1894 + $0x2] sm:$0xff]
        %v2090 = vld [vmem:[%s1894 + $0xa] sm:$0xff]
        %v2091 = vld [vmem:[%s1894 + $0x1a] sm:$0xff]
        %v2092 = vld [vmem:[%s1894 + $0x22] sm:$0xff]
        %v2093 = vld [vmem:[%s1894 + $0x32] sm:$0xff]
        %v2094 = vld [vmem:[%s1894 + $0x3a] sm:$0xff]
        %v2095 = vld [vmem:[%s1894 + $0x4a] sm:$0xff]
        %v2096 = vld [vmem:[%s1894 + $0x52] sm:$0xff]
        %v2097 = vld [vmem:[%s1894 + $0x62] sm:$0xff]
        %v2098 = vld [vmem:[%s1894 + $0x6a] sm:$0xff]
        %v2099 = vld [vmem:[%s1894 + $0x7a] sm:$0xff]
        %v2100 = vld [vmem:[%s1894 + $0x82] sm:$0xff]
        %v2101 = vld [vmem:[%s1894 + $0x92] sm:$0xff]
        %v2102 = vld [vmem:[%s1894 + $0x9a] sm:$0xff]
        %v2103 = vld [vmem:[%s1894 + $0xaa] sm:$0xff]
        %v2104 = vld [vmem:[%s1894 + $0xb2] sm:$0xff]
        %2121 = vrot.lane.b32.xlu0 %v2089, 40
        %v2122 = vpop.permute.xlu0 %2121
        %2123 = vrot.lane.b32.xlu0 %v2090, 40
        %v2124 = vpop.permute.xlu0 %2123
        %2125 = vrot.lane.b32.xlu0 %v2091, 40
        %v2126 = vpop.permute.xlu0 %2125
        %2127 = vrot.lane.b32.xlu0 %v2092, 40
        %v2128 = vpop.permute.xlu0 %2127
        %2129 = vrot.lane.b32.xlu0 %v2093, 40
        %v2130 = vpop.permute.xlu0 %2129
        %2131 = vrot.lane.b32.xlu0 %v2094, 40
        %v2132 = vpop.permute.xlu0 %2131
        %2133 = vrot.lane.b32.xlu0 %v2095, 40
        %v2134 = vpop.permute.xlu0 %2133
        %2135 = vrot.lane.b32.xlu0 %v2096, 40
        %v2136 = vpop.permute.xlu0 %2135
        %2137 = vrot.lane.b32.xlu0 %v2097, 40
        %v2138 = vpop.permute.xlu0 %2137
        %2139 = vrot.lane.b32.xlu0 %v2098, 40
        %v2140 = vpop.permute.xlu0 %2139
        %2141 = vrot.lane.b32.xlu0 %v2099, 40
        %v2142 = vpop.permute.xlu0 %2141
        %2143 = vrot.lane.b32.xlu0 %v2100, 40
        %v2144 = vpop.permute.xlu0 %2143
        %2145 = vrot.lane.b32.xlu0 %v2101, 40
        %v2146 = vpop.permute.xlu0 %2145
        %2147 = vrot.lane.b32.xlu0 %v2102, 40
        %v2148 = vpop.permute.xlu0 %2147
        %2149 = vrot.lane.b32.xlu0 %v2103, 40
        %v2150 = vpop.permute.xlu0 %2149
        %2151 = vrot.lane.b32.xlu0 %v2104, 40
        %v2152 = vpop.permute.xlu0 %2151
        %vm2169 = vcmask 392512
        %2170 = vst.msk [vmem:[#allocation4] sm:$0xff] %vm2169, %v2122
        %2171 = vst.msk [vmem:[#allocation4 + $0x8] sm:$0xff] %vm2169, %v2124
        %2172 = vst.msk [vmem:[#allocation4 + $0x10] sm:$0xff] %vm2169, %v2126
        %2173 = vst.msk [vmem:[#allocation4 + $0x18] sm:$0xff] %vm2169, %v2128
        %2174 = vst.msk [vmem:[#allocation4 + $0x20] sm:$0xff] %vm2169, %v2130
        %2175 = vst.msk [vmem:[#allocation4 + $0x28] sm:$0xff] %vm2169, %v2132
        %2176 = vst.msk [vmem:[#allocation4 + $0x30] sm:$0xff] %vm2169, %v2134
        %2177 = vst.msk [vmem:[#allocation4 + $0x38] sm:$0xff] %vm2169, %v2136
        %2178 = vst.msk [vmem:[#allocation4 + $0x40] sm:$0xff] %vm2169, %v2138
        %2179 = vst.msk [vmem:[#allocation4 + $0x48] sm:$0xff] %vm2169, %v2140
        %2180 = vst.msk [vmem:[#allocation4 + $0x50] sm:$0xff] %vm2169, %v2142
        %2181 = vst.msk [vmem:[#allocation4 + $0x58] sm:$0xff] %vm2169, %v2144
        %2182 = vst.msk [vmem:[#allocation4 + $0x60] sm:$0xff] %vm2169, %v2146
        %2183 = vst.msk [vmem:[#allocation4 + $0x68] sm:$0xff] %vm2169, %v2148
        %2184 = vst.msk [vmem:[#allocation4 + $0x70] sm:$0xff] %vm2169, %v2150
        %2185 = vst.msk [vmem:[#allocation4 + $0x78] sm:$0xff] %vm2169, %v2152
        %s2186 = scalar_lea.vmem [#allocation2], 48
        %v2187 = vld [vmem:[%s2186] sm:$0xff]
        %v2188 = vld [vmem:[%s2186 + $0x8] sm:$0xff]
        %v2189 = vld [vmem:[%s2186 + $0x18] sm:$0xff]
        %v2190 = vld [vmem:[%s2186 + $0x20] sm:$0xff]
        %v2191 = vld [vmem:[%s2186 + $0x30] sm:$0xff]
        %v2192 = vld [vmem:[%s2186 + $0x38] sm:$0xff]
        %v2193 = vld [vmem:[%s2186 + $0x48] sm:$0xff]
        %v2194 = vld [vmem:[%s2186 + $0x50] sm:$0xff]
        %v2195 = vld [vmem:[%s2186 + $0x60] sm:$0xff]
        %v2196 = vld [vmem:[%s2186 + $0x68] sm:$0xff]
        %v2197 = vld [vmem:[%s2186 + $0x78] sm:$0xff]
        %v2198 = vld [vmem:[%s2186 + $0x80] sm:$0xff]
        %v2199 = vld [vmem:[%s2186 + $0x90] sm:$0xff]
        %v2200 = vld [vmem:[%s2186 + $0x98] sm:$0xff]
        %v2201 = vld [vmem:[%s2186 + $0xa8] sm:$0xff]
        %v2202 = vld [vmem:[%s2186 + $0xb0] sm:$0xff]
        %2219 = vrot.lane.b32.xlu0 %v2187, 48
        %v2220 = vpop.permute.xlu0 %2219
        %2221 = vrot.lane.b32.xlu0 %v2188, 48
        %v2222 = vpop.permute.xlu0 %2221
        %2223 = vrot.lane.b32.xlu0 %v2189, 48
        %v2224 = vpop.permute.xlu0 %2223
        %2225 = vrot.lane.b32.xlu0 %v2190, 48
        %v2226 = vpop.permute.xlu0 %2225
        %2227 = vrot.lane.b32.xlu0 %v2191, 48
        %v2228 = vpop.permute.xlu0 %2227
        %2229 = vrot.lane.b32.xlu0 %v2192, 48
        %v2230 = vpop.permute.xlu0 %2229
        %2231 = vrot.lane.b32.xlu0 %v2193, 48
        %v2232 = vpop.permute.xlu0 %2231
        %2233 = vrot.lane.b32.xlu0 %v2194, 48
        %v2234 = vpop.permute.xlu0 %2233
        %2235 = vrot.lane.b32.xlu0 %v2195, 48
        %v2236 = vpop.permute.xlu0 %2235
        %2237 = vrot.lane.b32.xlu0 %v2196, 48
        %v2238 = vpop.permute.xlu0 %2237
        %2239 = vrot.lane.b32.xlu0 %v2197, 48
        %v2240 = vpop.permute.xlu0 %2239
        %2241 = vrot.lane.b32.xlu0 %v2198, 48
        %v2242 = vpop.permute.xlu0 %2241
        %2243 = vrot.lane.b32.xlu0 %v2199, 48
        %v2244 = vpop.permute.xlu0 %2243
        %2245 = vrot.lane.b32.xlu0 %v2200, 48
        %v2246 = vpop.permute.xlu0 %2245
        %2247 = vrot.lane.b32.xlu0 %v2201, 48
        %v2248 = vpop.permute.xlu0 %2247
        %2249 = vrot.lane.b32.xlu0 %v2202, 48
        %v2250 = vpop.permute.xlu0 %2249
        %vm2267 = vcmask 458112
        %2268 = vst.msk [vmem:[#allocation4] sm:$0xff] %vm2267, %v2220
        %2269 = vst.msk [vmem:[#allocation4 + $0x8] sm:$0xff] %vm2267, %v2222
        %2270 = vst.msk [vmem:[#allocation4 + $0x10] sm:$0xff] %vm2267, %v2224
        %2271 = vst.msk [vmem:[#allocation4 + $0x18] sm:$0xff] %vm2267, %v2226
        %2272 = vst.msk [vmem:[#allocation4 + $0x20] sm:$0xff] %vm2267, %v2228
        %2273 = vst.msk [vmem:[#allocation4 + $0x28] sm:$0xff] %vm2267, %v2230
        %2274 = vst.msk [vmem:[#allocation4 + $0x30] sm:$0xff] %vm2267, %v2232
        %2275 = vst.msk [vmem:[#allocation4 + $0x38] sm:$0xff] %vm2267, %v2234
        %2276 = vst.msk [vmem:[#allocation4 + $0x40] sm:$0xff] %vm2267, %v2236
        %2277 = vst.msk [vmem:[#allocation4 + $0x48] sm:$0xff] %vm2267, %v2238
        %2278 = vst.msk [vmem:[#allocation4 + $0x50] sm:$0xff] %vm2267, %v2240
        %2279 = vst.msk [vmem:[#allocation4 + $0x58] sm:$0xff] %vm2267, %v2242
        %2280 = vst.msk [vmem:[#allocation4 + $0x60] sm:$0xff] %vm2267, %v2244
        %2281 = vst.msk [vmem:[#allocation4 + $0x68] sm:$0xff] %vm2267, %v2246
        %2282 = vst.msk [vmem:[#allocation4 + $0x70] sm:$0xff] %vm2267, %v2248
        %2283 = vst.msk [vmem:[#allocation4 + $0x78] sm:$0xff] %vm2267, %v2250
        %v2284 = vld [vmem:[%s2186 + $0x1] sm:$0xff]
        %v2285 = vld [vmem:[%s2186 + $0x9] sm:$0xff]
        %v2286 = vld [vmem:[%s2186 + $0x19] sm:$0xff]
        %v2287 = vld [vmem:[%s2186 + $0x21] sm:$0xff]
        %v2288 = vld [vmem:[%s2186 + $0x31] sm:$0xff]
        %v2289 = vld [vmem:[%s2186 + $0x39] sm:$0xff]
        %v2290 = vld [vmem:[%s2186 + $0x49] sm:$0xff]
        %v2291 = vld [vmem:[%s2186 + $0x51] sm:$0xff]
        %v2292 = vld [vmem:[%s2186 + $0x61] sm:$0xff]
        %v2293 = vld [vmem:[%s2186 + $0x69] sm:$0xff]
        %v2294 = vld [vmem:[%s2186 + $0x79] sm:$0xff]
        %v2295 = vld [vmem:[%s2186 + $0x81] sm:$0xff]
        %v2296 = vld [vmem:[%s2186 + $0x91] sm:$0xff]
        %v2297 = vld [vmem:[%s2186 + $0x99] sm:$0xff]
        %v2298 = vld [vmem:[%s2186 + $0xa9] sm:$0xff]
        %v2299 = vld [vmem:[%s2186 + $0xb1] sm:$0xff]
        %2316 = vrot.lane.b32.xlu0 %v2284, 56
        %v2317 = vpop.permute.xlu0 %2316
        %2318 = vrot.lane.b32.xlu0 %v2285, 56
        %v2319 = vpop.permute.xlu0 %2318
        %2320 = vrot.lane.b32.xlu0 %v2286, 56
        %v2321 = vpop.permute.xlu0 %2320
        %2322 = vrot.lane.b32.xlu0 %v2287, 56
        %v2323 = vpop.permute.xlu0 %2322
        %2324 = vrot.lane.b32.xlu0 %v2288, 56
        %v2325 = vpop.permute.xlu0 %2324
        %2326 = vrot.lane.b32.xlu0 %v2289, 56
        %v2327 = vpop.permute.xlu0 %2326
        %2328 = vrot.lane.b32.xlu0 %v2290, 56
        %v2329 = vpop.permute.xlu0 %2328
        %2330 = vrot.lane.b32.xlu0 %v2291, 56
        %v2331 = vpop.permute.xlu0 %2330
        %2332 = vrot.lane.b32.xlu0 %v2292, 56
        %v2333 = vpop.permute.xlu0 %2332
        %2334 = vrot.lane.b32.xlu0 %v2293, 56
        %v2335 = vpop.permute.xlu0 %2334
        %2336 = vrot.lane.b32.xlu0 %v2294, 56
        %v2337 = vpop.permute.xlu0 %2336
        %2338 = vrot.lane.b32.xlu0 %v2295, 56
        %v2339 = vpop.permute.xlu0 %2338
        %2340 = vrot.lane.b32.xlu0 %v2296, 56
        %v2341 = vpop.permute.xlu0 %2340
        %2342 = vrot.lane.b32.xlu0 %v2297, 56
        %v2343 = vpop.permute.xlu0 %2342
        %2344 = vrot.lane.b32.xlu0 %v2298, 56
        %v2345 = vpop.permute.xlu0 %2344
        %2346 = vrot.lane.b32.xlu0 %v2299, 56
        %v2347 = vpop.permute.xlu0 %2346
        %vm2364 = vcmask 523712
        %2365 = vst.msk [vmem:[#allocation4] sm:$0xff] %vm2364, %v2317
        %2366 = vst.msk [vmem:[#allocation4 + $0x8] sm:$0xff] %vm2364, %v2319
        %2367 = vst.msk [vmem:[#allocation4 + $0x10] sm:$0xff] %vm2364, %v2321
        %2368 = vst.msk [vmem:[#allocation4 + $0x18] sm:$0xff] %vm2364, %v2323
        %2369 = vst.msk [vmem:[#allocation4 + $0x20] sm:$0xff] %vm2364, %v2325
        %2370 = vst.msk [vmem:[#allocation4 + $0x28] sm:$0xff] %vm2364, %v2327
        %2371 = vst.msk [vmem:[#allocation4 + $0x30] sm:$0xff] %vm2364, %v2329
        %2372 = vst.msk [vmem:[#allocation4 + $0x38] sm:$0xff] %vm2364, %v2331
        %2373 = vst.msk [vmem:[#allocation4 + $0x40] sm:$0xff] %vm2364, %v2333
        %2374 = vst.msk [vmem:[#allocation4 + $0x48] sm:$0xff] %vm2364, %v2335
        %2375 = vst.msk [vmem:[#allocation4 + $0x50] sm:$0xff] %vm2364, %v2337
        %2376 = vst.msk [vmem:[#allocation4 + $0x58] sm:$0xff] %vm2364, %v2339
        %2377 = vst.msk [vmem:[#allocation4 + $0x60] sm:$0xff] %vm2364, %v2341
        %2378 = vst.msk [vmem:[#allocation4 + $0x68] sm:$0xff] %vm2364, %v2343
        %2379 = vst.msk [vmem:[#allocation4 + $0x70] sm:$0xff] %vm2364, %v2345
        %2380 = vst.msk [vmem:[#allocation4 + $0x78] sm:$0xff] %vm2364, %v2347
        %v2381 = vld [vmem:[%s2186 + $0x2] sm:$0xff]
        %v2382 = vld [vmem:[%s2186 + $0xa] sm:$0xff]
        %v2383 = vld [vmem:[%s2186 + $0x1a] sm:$0xff]
        %v2384 = vld [vmem:[%s2186 + $0x22] sm:$0xff]
        %v2385 = vld [vmem:[%s2186 + $0x32] sm:$0xff]
        %v2386 = vld [vmem:[%s2186 + $0x3a] sm:$0xff]
        %v2387 = vld [vmem:[%s2186 + $0x4a] sm:$0xff]
        %v2388 = vld [vmem:[%s2186 + $0x52] sm:$0xff]
        %v2389 = vld [vmem:[%s2186 + $0x62] sm:$0xff]
        %v2390 = vld [vmem:[%s2186 + $0x6a] sm:$0xff]
        %v2391 = vld [vmem:[%s2186 + $0x7a] sm:$0xff]
        %v2392 = vld [vmem:[%s2186 + $0x82] sm:$0xff]
        %v2393 = vld [vmem:[%s2186 + $0x92] sm:$0xff]
        %v2394 = vld [vmem:[%s2186 + $0x9a] sm:$0xff]
        %v2395 = vld [vmem:[%s2186 + $0xaa] sm:$0xff]
        %v2396 = vld [vmem:[%s2186 + $0xb2] sm:$0xff]
        %2413 = vrot.lane.b32.xlu0 %v2381, 64
        %v2414 = vpop.permute.xlu0 %2413
        %2415 = vrot.lane.b32.xlu0 %v2382, 64
        %v2416 = vpop.permute.xlu0 %2415
        %2417 = vrot.lane.b32.xlu0 %v2383, 64
        %v2418 = vpop.permute.xlu0 %2417
        %2419 = vrot.lane.b32.xlu0 %v2384, 64
        %v2420 = vpop.permute.xlu0 %2419
        %2421 = vrot.lane.b32.xlu0 %v2385, 64
        %v2422 = vpop.permute.xlu0 %2421
        %2423 = vrot.lane.b32.xlu0 %v2386, 64
        %v2424 = vpop.permute.xlu0 %2423
        %2425 = vrot.lane.b32.xlu0 %v2387, 64
        %v2426 = vpop.permute.xlu0 %2425
        %2427 = vrot.lane.b32.xlu0 %v2388, 64
        %v2428 = vpop.permute.xlu0 %2427
        %2429 = vrot.lane.b32.xlu0 %v2389, 64
        %v2430 = vpop.permute.xlu0 %2429
        %2431 = vrot.lane.b32.xlu0 %v2390, 64
        %v2432 = vpop.permute.xlu0 %2431
        %2433 = vrot.lane.b32.xlu0 %v2391, 64
        %v2434 = vpop.permute.xlu0 %2433
        %2435 = vrot.lane.b32.xlu0 %v2392, 64
        %v2436 = vpop.permute.xlu0 %2435
        %2437 = vrot.lane.b32.xlu0 %v2393, 64
        %v2438 = vpop.permute.xlu0 %2437
        %2439 = vrot.lane.b32.xlu0 %v2394, 64
        %v2440 = vpop.permute.xlu0 %2439
        %2441 = vrot.lane.b32.xlu0 %v2395, 64
        %v2442 = vpop.permute.xlu0 %2441
        %2443 = vrot.lane.b32.xlu0 %v2396, 64
        %v2444 = vpop.permute.xlu0 %2443
        %vm2461 = vcmask 589312
        %2462 = vst.msk [vmem:[#allocation4] sm:$0xff] %vm2461, %v2414
        %2463 = vst.msk [vmem:[#allocation4 + $0x8] sm:$0xff] %vm2461, %v2416
        %2464 = vst.msk [vmem:[#allocation4 + $0x10] sm:$0xff] %vm2461, %v2418
        %2465 = vst.msk [vmem:[#allocation4 + $0x18] sm:$0xff] %vm2461, %v2420
        %2466 = vst.msk [vmem:[#allocation4 + $0x20] sm:$0xff] %vm2461, %v2422
        %2467 = vst.msk [vmem:[#allocation4 + $0x28] sm:$0xff] %vm2461, %v2424
        %2468 = vst.msk [vmem:[#allocation4 + $0x30] sm:$0xff] %vm2461, %v2426
        %2469 = vst.msk [vmem:[#allocation4 + $0x38] sm:$0xff] %vm2461, %v2428
        %2470 = vst.msk [vmem:[#allocation4 + $0x40] sm:$0xff] %vm2461, %v2430
        %2471 = vst.msk [vmem:[#allocation4 + $0x48] sm:$0xff] %vm2461, %v2432
        %2472 = vst.msk [vmem:[#allocation4 + $0x50] sm:$0xff] %vm2461, %v2434
        %2473 = vst.msk [vmem:[#allocation4 + $0x58] sm:$0xff] %vm2461, %v2436
        %2474 = vst.msk [vmem:[#allocation4 + $0x60] sm:$0xff] %vm2461, %v2438
        %2475 = vst.msk [vmem:[#allocation4 + $0x68] sm:$0xff] %vm2461, %v2440
        %2476 = vst.msk [vmem:[#allocation4 + $0x70] sm:$0xff] %vm2461, %v2442
        %2477 = vst.msk [vmem:[#allocation4 + $0x78] sm:$0xff] %vm2461, %v2444
        %v2478 = vld [vmem:[#allocation4] sm:$0xff]
        %v2479 = vld [vmem:[#allocation4 + $0x8] sm:$0xff]
        %v2480 = vld [vmem:[#allocation4 + $0x10] sm:$0xff]
        %v2481 = vld [vmem:[#allocation4 + $0x18] sm:$0xff]
        %v2482 = vld [vmem:[#allocation4 + $0x20] sm:$0xff]
        %v2483 = vld [vmem:[#allocation4 + $0x28] sm:$0xff]
        %v2484 = vld [vmem:[#allocation4 + $0x30] sm:$0xff]
        %v2485 = vld [vmem:[#allocation4 + $0x38] sm:$0xff]
        %v2486 = vld [vmem:[#allocation4 + $0x40] sm:$0xff]
        %v2487 = vld [vmem:[#allocation4 + $0x48] sm:$0xff]
        %v2488 = vld [vmem:[#allocation4 + $0x50] sm:$0xff]
        %v2489 = vld [vmem:[#allocation4 + $0x58] sm:$0xff]
        %v2490 = vld [vmem:[#allocation4 + $0x60] sm:$0xff]
        %v2491 = vld [vmem:[#allocation4 + $0x68] sm:$0xff]
        %v2492 = vld [vmem:[#allocation4 + $0x70] sm:$0xff]
        %v2493 = vld [vmem:[#allocation4 + $0x78] sm:$0xff]
        %v2494 = vld [vmem:[#allocation11] sm:$0xff]
        %v2495 = vld [vmem:[#allocation11 + $0x8] sm:$0xff]
        %v2496 = vld [vmem:[#allocation11 + $0x10] sm:$0xff]
        %v2497 = vld [vmem:[#allocation11 + $0x18] sm:$0xff]
        %v2498 = vld [vmem:[#allocation11 + $0x20] sm:$0xff]
        %v2499 = vld [vmem:[#allocation11 + $0x28] sm:$0xff]
        %v2500 = vld [vmem:[#allocation11 + $0x30] sm:$0xff]
        %v2501 = vld [vmem:[#allocation11 + $0x38] sm:$0xff]
        %v2502 = vld [vmem:[#allocation11 + $0x40] sm:$0xff]
        %v2503 = vld [vmem:[#allocation13] sm:$0x1]
        %v2505 = vlaneseq
        %v2506 = vshrl.u32 %v2505, 7
        %v2507 = vsub.s32 0, %v2506
        %v2508 = vrot.slane %v2503, %v2507
        %vm2510 = vcmask 588800
        %v2512 = vsel %vm2510, %v2478, 0
        %v2515 = vsel %vm2510, %v2479, 0
        %v2518 = vsel %vm2510, %v2480, 0
        %v2521 = vsel %vm2510, %v2481, 0
        %v2524 = vsel %vm2510, %v2482, 0
        %v2527 = vsel %vm2510, %v2483, 0
        %v2530 = vsel %vm2510, %v2484, 0
        %v2533 = vsel %vm2510, %v2485, 0
        %v2536 = vsel %vm2510, %v2486, 0
        %v2539 = vsel %vm2510, %v2487, 0
        %v2542 = vsel %vm2510, %v2488, 0
        %v2545 = vsel %vm2510, %v2489, 0
        %v2548 = vsel %vm2510, %v2490, 0
        %v2551 = vsel %vm2510, %v2491, 0
        %v2554 = vsel %vm2510, %v2492, 0
        %v2557 = vsel %vm2510, %v2493, 0
        %2559 = vmatprep.subr.mxu0 0.0
        %2560 = vmatpush1.msra.mxu0 %v2494
        %2561 = vmatprep.subr.mxu0 0.0
        %2562 = vmatpush1.msra.mxu0 %v2495
        %2563 = vmatprep.subr.mxu0 0.0
        %2564 = vmatpush1.msra.mxu0 %v2496
        %2565 = vmatprep.subr.mxu0 0.0
        %2566 = vmatpush1.msra.mxu0 %v2497
        %2567 = vmatprep.subr.mxu0 0.0
        %2568 = vmatpush1.msra.mxu0 %v2498
        %2569 = vmatprep.subr.mxu0 0.0
        %2570 = vmatpush1.msra.mxu0 %v2499
        %2571 = vmatprep.subr.mxu0 0.0
        %2572 = vmatpush1.msra.mxu0 %v2500
        %2573 = vmatprep.subr.mxu0 0.0
        %2574 = vmatpush1.msra.mxu0 %v2501
        %2575 = vmatprep.subr.mxu0 0.0
        %2576 = vmatpush1.msra.mxu0 %v2502
        %2577 = vmatprep.subr.mxu0 0.0
        %2578 = vmatpush1.msra.mxu0 0.0
        %2579 = vmatprep.subr.mxu0 0.0
        %2580 = vmatpush1.msra.mxu0 0.0
        %2581 = vmatprep.subr.mxu0 0.0
        %2582 = vmatpush1.msra.mxu0 0.0
        %2583 = vmatprep.subr.mxu0 0.0
        %2584 = vmatpush1.msra.mxu0 0.0
        %2585 = vmatprep.subr.mxu0 0.0
        %2586 = vmatpush1.msra.mxu0 0.0
        %2587 = vmatprep.subr.mxu0 0.0
        %2588 = vmatpush1.msra.mxu0 0.0
        %2589 = vmatprep.subr.mxu0 0.0
        %2590 = vmatpush1.msra.mxu0 0.0
        %2591 = vmatprep.subr.mxu0 0.0
        %2592 = vmatpush1.msra.mxu0 0.0
        %2593 = vmatprep.subr.mxu0 0.0
        %2594 = vmatpush1.msra.mxu0 0.0
        %2595 = vmatprep.subr.mxu0 0.0
        %2596 = vmatpush1.msra.mxu0 0.0
        %2597 = vmatprep.subr.mxu0 0.0
        %2598 = vmatpush1.msra.mxu0 0.0
        %2599 = vmatprep.subr.mxu0 0.0
        %2600 = vmatpush1.msra.mxu0 0.0
        %2601 = vmatprep.subr.mxu0 0.0
        %2602 = vmatpush1.msra.mxu0 0.0
        %2603 = vmatprep.subr.mxu0 0.0
        %2604 = vmatpush1.msra.mxu0 0.0
        %2605 = vmatprep.subr.mxu0 0.0
        %2606 = vmatpush1.msra.mxu0 0.0
        %2607 = vmatprep.subr.mxu0 0.0
        %2608 = vmatpush1.msra.mxu0 0.0
        %2609 = vmatprep.subr.mxu0 0.0
        %2610 = vmatpush1.msra.mxu0 0.0
        %2611 = vmatprep.subr.mxu0 0.0
        %2612 = vmatpush1.msra.mxu0 0.0
        %2613 = vmatprep.subr.mxu0 0.0
        %2614 = vmatpush1.msra.mxu0 0.0
        %2615 = vmatprep.subr.mxu0 0.0
        %2616 = vmatpush1.msra.mxu0 0.0
        %2617 = vmatprep.subr.mxu0 0.0
        %2618 = vmatpush1.msra.mxu0 0.0
        %2619 = vmatprep.subr.mxu0 0.0
        %2620 = vmatpush1.msra.mxu0 0.0
        %2621 = vmatprep.subr.mxu0 0.0
        %2622 = vmatpush1.msra.mxu0 0.0
        %2623 = vmatprep.mubr.f32.mxu0 0.0
        %2624 = vmatmul.mubr.f32.gmra.mrb[0].mxu0 %v2512
        %v2625 = vpop.f32.mrb[0].mxu0
        %v2626 = vadd.f32 %v2508, %v2625
        %v2627 = vpop.f32.mrb[0].mxu0
        %2628 = vmatprep.mubr.f32.mxu0 0.0
        %2629 = vmatmul.mubr.f32.gmra.mrb[0].mxu0 %v2515
        %v2630 = vpop.f32.mrb[0].mxu0
        %v2631 = vadd.f32 %v2508, %v2630
        %v2632 = vpop.f32.mrb[0].mxu0
        %2633 = vmatprep.mubr.f32.mxu0 0.0
        %2634 = vmatmul.mubr.f32.gmra.mrb[0].mxu0 %v2518
        %v2635 = vpop.f32.mrb[0].mxu0
        %v2636 = vadd.f32 %v2508, %v2635
        %v2637 = vpop.f32.mrb[0].mxu0
        %2638 = vmatprep.mubr.f32.mxu0 0.0
        %2639 = vmatmul.mubr.f32.gmra.mrb[0].mxu0 %v2521
        %v2640 = vpop.f32.mrb[0].mxu0
        %v2641 = vadd.f32 %v2508, %v2640
        %v2642 = vpop.f32.mrb[0].mxu0
        %2643 = vmatprep.mubr.f32.mxu0 0.0
        %2644 = vmatmul.mubr.f32.gmra.mrb[0].mxu0 %v2524
        %v2645 = vpop.f32.mrb[0].mxu0
        %v2646 = vadd.f32 %v2508, %v2645
        %v2647 = vpop.f32.mrb[0].mxu0
        %2648 = vmatprep.mubr.f32.mxu0 0.0
        %2649 = vmatmul.mubr.f32.gmra.mrb[0].mxu0 %v2527
        %v2650 = vpop.f32.mrb[0].mxu0
        %v2651 = vadd.f32 %v2508, %v2650
        %v2652 = vpop.f32.mrb[0].mxu0
        %2653 = vmatprep.mubr.f32.mxu0 0.0
        %2654 = vmatmul.mubr.f32.gmra.mrb[0].mxu0 %v2530
        %v2655 = vpop.f32.mrb[0].mxu0
        %v2656 = vadd.f32 %v2508, %v2655
        %v2657 = vpop.f32.mrb[0].mxu0
        %2658 = vmatprep.mubr.f32.mxu0 0.0
        %2659 = vmatmul.mubr.f32.gmra.mrb[0].mxu0 %v2533
        %v2660 = vpop.f32.mrb[0].mxu0
        %v2661 = vadd.f32 %v2508, %v2660
        %v2662 = vpop.f32.mrb[0].mxu0
        %2663 = vmatprep.mubr.f32.mxu0 0.0
        %2664 = vmatmul.mubr.f32.gmra.mrb[0].mxu0 %v2536
        %v2665 = vpop.f32.mrb[0].mxu0
        %v2666 = vadd.f32 %v2508, %v2665
        %v2667 = vpop.f32.mrb[0].mxu0
        %2668 = vmatprep.mubr.f32.mxu0 0.0
        %2669 = vmatmul.mubr.f32.gmra.mrb[0].mxu0 %v2539
        %v2670 = vpop.f32.mrb[0].mxu0
        %v2671 = vadd.f32 %v2508, %v2670
        %v2672 = vpop.f32.mrb[0].mxu0
        %2673 = vmatprep.mubr.f32.mxu0 0.0
        %2674 = vmatmul.mubr.f32.gmra.mrb[0].mxu0 %v2542
        %v2675 = vpop.f32.mrb[0].mxu0
        %v2676 = vadd.f32 %v2508, %v2675
        %v2677 = vpop.f32.mrb[0].mxu0
        %2678 = vmatprep.mubr.f32.mxu0 0.0
        %2679 = vmatmul.mubr.f32.gmra.mrb[0].mxu0 %v2545
        %v2680 = vpop.f32.mrb[0].mxu0
        %v2681 = vadd.f32 %v2508, %v2680
        %v2682 = vpop.f32.mrb[0].mxu0
        %2683 = vmatprep.mubr.f32.mxu0 0.0
        %2684 = vmatmul.mubr.f32.gmra.mrb[0].mxu0 %v2548
        %v2685 = vpop.f32.mrb[0].mxu0
        %v2686 = vadd.f32 %v2508, %v2685
        %v2687 = vpop.f32.mrb[0].mxu0
        %2688 = vmatprep.mubr.f32.mxu0 0.0
        %2689 = vmatmul.mubr.f32.gmra.mrb[0].mxu0 %v2551
        %v2690 = vpop.f32.mrb[0].mxu0
        %v2691 = vadd.f32 %v2508, %v2690
        %v2692 = vpop.f32.mrb[0].mxu0
        %2693 = vmatprep.mubr.f32.mxu0 0.0
        %2694 = vmatmul.mubr.f32.gmra.mrb[0].mxu0 %v2554
        %v2695 = vpop.f32.mrb[0].mxu0
        %v2696 = vadd.f32 %v2508, %v2695
        %v2697 = vpop.f32.mrb[0].mxu0
        %2698 = vmatprep.mubr.f32.mxu0 0.0
        %2699 = vmatmul.mubr.f32.gmra.mrb[0].mxu0 %v2557
        %v2700 = vpop.f32.mrb[0].mxu0
        %v2701 = vadd.f32 %v2508, %v2700
        %v2702 = vpop.f32.mrb[0].mxu0
        %2703 = vdwg.mxu0
        %v2704 = vmax.f32 %v2626, 0.0
        %v2705 = vmax.f32 %v2631, 0.0
        %v2706 = vmax.f32 %v2636, 0.0
        %v2707 = vmax.f32 %v2641, 0.0
        %v2708 = vmax.f32 %v2646, 0.0
        %v2709 = vmax.f32 %v2651, 0.0
        %v2710 = vmax.f32 %v2656, 0.0
        %v2711 = vmax.f32 %v2661, 0.0
        %v2712 = vmax.f32 %v2666, 0.0
        %v2713 = vmax.f32 %v2671, 0.0
        %v2714 = vmax.f32 %v2676, 0.0
        %v2715 = vmax.f32 %v2681, 0.0
        %v2716 = vmax.f32 %v2686, 0.0
        %v2717 = vmax.f32 %v2691, 0.0
        %v2718 = vmax.f32 %v2696, 0.0
        %v2719 = vmax.f32 %v2701, 0.0
        %2720 = vst.msk [vmem:[%s314] sm:$0xff] %vm1609, %v2704
        %2721 = vst.msk [vmem:[%s314 + $0x8] sm:$0xff] %vm1609, %v2705
        %2722 = vst.msk [vmem:[%s314 + $0x10] sm:$0xff] %vm1609, %v2706
        %2723 = vst.msk [vmem:[%s314 + $0x18] sm:$0xff] %vm1609, %v2707
        %2724 = vst.msk [vmem:[%s314 + $0x20] sm:$0xff] %vm1609, %v2708
        %2725 = vst.msk [vmem:[%s314 + $0x28] sm:$0xff] %vm1609, %v2709
        %2726 = vst.msk [vmem:[%s314 + $0x30] sm:$0xff] %vm1609, %v2710
        %2727 = vst.msk [vmem:[%s314 + $0x38] sm:$0xff] %vm1609, %v2711
        %2728 = vst.msk [vmem:[%s314 + $0x40] sm:$0xff] %vm1609, %v2712
        %2729 = vst.msk [vmem:[%s314 + $0x48] sm:$0xff] %vm1609, %v2713
        %2730 = vst.msk [vmem:[%s314 + $0x50] sm:$0xff] %vm1609, %v2714
        %2731 = vst.msk [vmem:[%s314 + $0x58] sm:$0xff] %vm1609, %v2715
        %2732 = vst.msk [vmem:[%s314 + $0x60] sm:$0xff] %vm1609, %v2716
        %2733 = vst.msk [vmem:[%s314 + $0x68] sm:$0xff] %vm1609, %v2717
        %2734 = vst.msk [vmem:[%s314 + $0x70] sm:$0xff] %vm1609, %v2718
        %2735 = vst.msk [vmem:[%s314 + $0x78] sm:$0xff] %vm1609, %v2719
        %s2736 = sand.u32 %s158, 1
        %s2737 = scalar_lea.sflag [#allocation7], %s2736
        %s2738 = sand.u32 %s158, 1
        %s2739 = smul.addr %s2738, 128
        %s2740 = scalar_lea.vmem [#allocation14], %s2739
        // Predicated region
        $region69: #{tpu_custom_call.1} parent=39 // pred_check
          %p2741 = pneg %p168
        $region70: #{tpu_custom_call.1} parent=39 // pred_check_branch
          %2743 = sbr.rel (%p2741) target = $region72
        $region71: #{tpu_custom_call.1} parent=39 // pred_region
          %s2744 = smul.u32 8, %s29
          %s2746 = ssub.s32 2048, 2048
          %2747 = vsyncadd %s2737, %s2746
          %s2748 = smul.addr %s2744, 2
          %s2749 = smul.addr %s28, 32
          %s2750 = sadd.s32 %s2748, %s2749
          %s2751 = smul.addr %s2750, 128
          %s2752 = scalar_lea.hbm %s5, %s2751
          %s2753 = sshll.u32 %s2740, 4
          %s2754 = int_to_ptr.vmem [resolvable:$true] %s2753
          %2759 = dma.vmem_to_hbm [thread:$0]  %s2754, 2048, %s2752, %s2737, 128, 128, 8
        $region72: #{tpu_custom_call.1} parent=39 // pred_fallthru
          _
      $region40: #{tpu_custom_call.1} parent=5 // pred_fallthru
        _
      %p2760 = scmp.le.s32.totalorder 2, %s19
      // Predicated region
      $region73: #{tpu_custom_call.1} parent=5 // pred_check
        %p2761 = pneg %p2760
      $region74: #{tpu_custom_call.1} parent=5 // pred_check_branch
        %2763 = sbr.rel (%p2761) target = $region76
      $region75: #{tpu_custom_call.1} parent=5 // pred_region
        %s2764 = ssub.s32 %s19, 2
        // Predicated region
        $region77: #{tpu_custom_call.1} parent=75 // pred_check
          %p2765 = pneg %p174
        $region78: #{tpu_custom_call.1} parent=75 // pred_check_branch
          %2767 = sbr.rel (%p2765) target = $region80
        $region79: #{tpu_custom_call.1} parent=75 // pred_region
          %s2768 = sand.u32 %s159, 1
          %s2769 = scalar_lea.sflag [#allocation7], %s2768
          %s2770 = sand.u32 %s159, 1
          %s2771 = smul.addr %s2770, 128
          %s2772 = scalar_lea.vmem [#allocation14], %s2771
          %2773 = dma.done %s2769, 2048
        $region80: #{tpu_custom_call.1} parent=75 // pred_fallthru
          _
      $region76: #{tpu_custom_call.1} parent=5 // pred_fallthru
        _
    $region6: #{tpu_custom_call.1} parent=1 // loop_footer
      %s23 = sadd.s32 1, %s19
    $region7: #{tpu_custom_call.1} parent=1 // loop_footer_branch
      %18 = sbr.rel target = $region3
    $region8: #{tpu_custom_call.1} parent=1 // loop_exit
      _
    %2774 = vsyncpa [#allocation6], 1
    %s2775 = scalar_lea.sflag [#allocation6], 1
    %2776 = vsyncpa %s2775, 1
    %2777 = vsyncpa [#allocation9], 1
    %2778 = vsyncpa [#allocation12], 1
    %2779 = vsyncpa [#allocation7], 1
    %s2780 = scalar_lea.sflag [#allocation7], 1
    %2781 = vsyncpa %s2780, 1

</llo_original>
